<compile_context>
chip_gen: v5e
topology: v5e:2x2
jax: 0.10.0
libtpu: 0.0.40
codegen_flags: <defaults>
</compile_context>

<pallas_src>
import jax
import jax.numpy as jnp
from jax.experimental import pallas as pl
from jax.experimental.pallas import tpu as pltpu


# ----------------------------- Pallas kernel ------------------------------- #

def _fused_pair_kernel(p1_ref, w1_ref, b1_ref, w2_ref, b2_ref,
                       fw1_ref, fb1_ref, fw2_ref, fb2_ref,
                       ch_ref, p1s_ref, c2s_ref, p2s_ref):
    """Both digit branches for all samples in one invocation.

    p1_ref : [4, R, 16]  conv1 im2col per pooling corner (R = N*36 rows,
                         row = n*36 + y*6 + x, taps 0..8, cols 9..15 zero)
    w1/b1  : [16, 64] / [1, 64]    conv1 (rows 9..15 zero)
    w2/b2  : [576, 128] / [1, 128] conv2, row = (ti*3+tj)*64 + cin
    fw1/fb1: [512, 128] / [1, 128] full1, row = (ph*2+pw)*128 + c, lanes >=nh zero
    fw2/fb2: [128, 128] / [1, 128] full2, lanes >=10 zero
    ch_ref : [N, 128]              relu(full2(relu(full1(flat)))), lanes >=10 zero
    p1s/c2s/p2s : padded VMEM staging buffers for row-shifted reads
    """
    f32 = jnp.float32
    N = ch_ref.shape[0]            # samples (= 2 * pairs)
    R = N * 36                     # rows of the 6x6 pooled-conv1 grid
    PAD = p1s_ref.shape[0] - R     # tail rows (>= 15) so shifted reads stay in bounds

    # ---- conv1 (1 -> 64, 3x3): one MXU matmul per 2x2-pool corner; pool + relu fused.
    w1 = w1_ref[...]                                        # [16, 64]
    b1 = b1_ref[...]                                        # [1, 64]
    pooled1 = None
    for c in range(4):
        v = jnp.dot(p1_ref[c], w1, preferred_element_type=f32) + b1   # [R, 64]
        pooled1 = v if pooled1 is None else jnp.maximum(pooled1, v)
    pooled1 = jnp.maximum(pooled1, 0.0)                     # row = n*36 + y*6 + x

    # Stage once (aligned, dense) so conv2 taps become plain shifted row reads.
    p1s_ref[0:R, :] = pooled1
    p1s_ref[R:R + PAD, :] = jnp.zeros((PAD, 64), f32)

    # ---- conv2 (64 -> 128, 3x3): 9 tap-wise accumulated MXU matmuls (no scatter).
    acc = jnp.zeros((R, 128), f32)
    for ti in range(3):
        for tj in range(3):
            k = ti * 6 + tj                                 # row shift inside the 6x6 grid
            tap = ti * 3 + tj
            acc = acc + jnp.dot(p1s_ref[k:k + R, :],
                                w2_ref[tap * 64:(tap + 1) * 64, :],
                                preferred_element_type=f32)
    c2 = acc + b2_ref[...]          # [R, 128]; rows with y<4, x<4 form the 4x4 conv2 map

    c2s_ref[0:R, :] = c2
    c2s_ref[R:R + PAD, :] = jnp.zeros((PAD, 128), f32)

    # ---- 2x2 max-pool + relu via shifted dense reads (window row offsets 0,1,6,7).
    p2 = jnp.maximum(
        jnp.maximum(c2s_ref[0:R, :], c2s_ref[1:1 + R, :]),
        jnp.maximum(c2s_ref[6:6 + R, :], c2s_ref[7:7 + R, :]))
    p2 = jnp.maximum(p2, 0.0)       # pooled2 corner (ph,pw) of sample n at row n*36+12ph+2pw

    p2s_ref[0:R, :] = p2
    p2s_ref[R:R + PAD, :] = jnp.zeros((PAD, 128), f32)

    # ---- fc1 (512 -> nh padded to 128 lanes): 4 accumulated K=128 matmuls + relu.
    h = jnp.zeros((R, 128), f32)
    for ph in (0, 1):
        for pw in (0, 1):
            off = 12 * ph + 2 * pw
            cslot = ph * 2 + pw
            h = h + jnp.dot(p2s_ref[off:off + R, :],
                            fw1_ref[cslot * 128:(cslot + 1) * 128, :],
                            preferred_element_type=f32)
    h = jnp.maximum(h + fb1_ref[...], 0.0)                  # valid rows: 36*n

    # ---- fc2 (128 -> 10, lanes padded to 128) + relu; gather the N valid rows.
    ch = jnp.maximum(jnp.dot(h, fw2_ref[...], preferred_element_type=f32)
                     + fb2_ref[...], 0.0)                   # [R, 128]
    for n in range(N):
        ch_ref[n:n + 1, :] = ch[36 * n:36 * n + 1, :]


# ------------------------------ JAX-side glue ------------------------------ #

def conv1_pool_patches(img):
    """img: [N, 14, 14] -> [4, N*36, 16] conv1 im2col patches per 2x2-pool corner.

    Index (di*2+dj, n*36 + y*6 + x, ti*3+tj) = img[n, 2y+di+ti, 2x+dj+tj]; taps 9..15 zero.
    """
    N = img.shape[0]
    corners = []
    for di in (0, 1):
        for dj in (0, 1):
            taps = []
            for ti in range(3):
                for tj in range(3):
                    sl = img[:, di + ti:di + ti + 11:2, dj + tj:dj + tj + 11:2]  # [N,6,6]
                    taps.append(sl.reshape(N, 36))
            corners.append(jnp.stack(taps, axis=-1).reshape(N * 36, 9))
    p = jnp.stack(corners, axis=0)                                   # [4, N*36, 9]
    return jnp.pad(p, ((0, 0), (0, 0), (0, 7)))                      # [4, N*36, 16]


def init_params(key, nb_hidden=100):
    """Deterministic synthetic parameters (PyTorch-style U(-1/sqrt(fan_in), ...))."""
    def uni(k, shape, fan_in):
        bound = 1.0 / jnp.sqrt(jnp.float32(fan_in))
        return jax.random.uniform(k, shape, jnp.float32, -bound, bound)

    ks = jax.random.split(key, 10)
    return {
        "w1": uni(ks[0], (9, 64), 9),                   # cl1: Conv2d(1, 64, 3)
        "b1": uni(ks[1], (1, 64), 9),
        "w2": uni(ks[2], (576, 128), 576),              # cl2: Conv2d(64, 128, 3)
        "b2": uni(ks[3], (1, 128), 576),
        "fw1": uni(ks[4], (512, nb_hidden), 512),       # full1: Linear(512, nb_hidden)
        "fb1": uni(ks[5], (1, nb_hidden), 512),
        "fw2": uni(ks[6], (nb_hidden, 10), nb_hidden),  # full2: Linear(nb_hidden, 10)
        "fb2": uni(ks[7], (1, 10), nb_hidden),
        "fw3": uni(ks[8], (20, 2), 20),                 # full3: Linear(20, 2)
        "fb3": uni(ks[9], (1, 2), 20),
    }


@jax.jit
def forward(x, p):
    """x: [B, 2, 14, 14] (NCHW). Returns (output [B,2], channel1 [B,10], channel2 [B,10])."""
    B = x.shape[0]
    N = 2 * B
    R = N * 36
    # sample n = digit*B + pair
    img = jnp.transpose(x, (1, 0, 2, 3)).reshape(N, 14, 14).astype(jnp.float32)
    p1 = conv1_pool_patches(img)                                     # [4, R, 16]

    nh = p["fw1"].shape[1]
    w1p = jnp.zeros((16, 64), jnp.float32).at[:9, :].set(p["w1"])
    fw1p = jnp.zeros((512, 128), jnp.float32).at[:, :nh].set(p["fw1"])
    fb1p = jnp.zeros((1, 128), jnp.float32).at[:, :nh].set(p["fb1"])
    fw2p = jnp.zeros((128, 128), jnp.float32).at[:nh, :10].set(p["fw2"])
    fb2p = jnp.zeros((1, 128), jnp.float32).at[:, :10].set(p["fb2"])

    vmem = pl.BlockSpec(memory_space=pltpu.MemorySpace.VMEM)
    ch_pad = pl.pallas_call(
        _fused_pair_kernel,
        out_shape=jax.ShapeDtypeStruct((N, 128), jnp.float32),
        in_specs=[vmem] * 9,
        out_specs=vmem,
        scratch_shapes=[
            pltpu.VMEM((R + 16, 64), jnp.float32),    # pooled conv1 staging (+ shift pad)
            pltpu.VMEM((R + 16, 128), jnp.float32),   # conv2 output staging
            pltpu.VMEM((R + 16, 128), jnp.float32),   # pooled conv2 staging
        ],
    )(p1, w1p, p["b1"], p["w2"], p["b2"], fw1p, fb1p, fw2p, fb2p)

    ch1 = ch_pad[:B, :10]
    ch2 = ch_pad[B:, :10]
    out = jnp.dot(jnp.concatenate([ch1, ch2], axis=1), p["fw3"],
                  precision=jax.lax.Precision.HIGHEST) + p["fb3"]    # full3 (tiny, left to XLA)
    return out, ch1, ch2


# -------------------------- pure-JAX reference ----------------------------- #

def im2col(x, kh, kw):
    """x: [B,H,W,C] NHWC -> patches [B*OH*OW, kh*kw*C] (column order (kh,kw,cin))."""
    B, H, W, C = x.shape
    OH, OW = H - kh + 1, W - kw + 1
    cols = [x[:, i:i + OH, j:j + OW, :] for i in range(kh) for j in range(kw)]
    patches = jnp.stack(cols, axis=3)                  # [B, OH, OW, kh*kw, C]
    return patches.reshape(B * OH * OW, kh * kw * C), (B, OH, OW)


def pool_corners(x):
    """x: [B,H,W,C] -> four [B*(H/2)*(W/2), C] corner matrices of 2x2 windows."""
    B, H, W, C = x.shape
    OH, OW = H // 2, W // 2
    corners = [x[:, di::2, dj::2, :].reshape(B * OH * OW, C)
               for di in (0, 1) for dj in (0, 1)]
    return corners, (B, OH, OW)


def forward_ref(x, p):
    hi = jax.lax.Precision.HIGHEST

    def lin(a, w, b, relu=False):
        y = jnp.dot(a, w, precision=hi) + b
        return jnp.maximum(y, 0.0) if relu else y

    def pool(t):
        corners, (B, OH, OW) = pool_corners(t)
        m = jnp.maximum(jnp.maximum(corners[0], corners[1]),
                        jnp.maximum(corners[2], corners[3]))
        return jnp.maximum(m, 0.0).reshape(B, OH, OW, -1)

    def br(xc):
        B = xc.shape[0]
        p1, _ = im2col(xc, 3, 3)
        c1 = lin(p1, p["w1"], p["b1"]).reshape(B, 12, 12, 64)
        pl1 = pool(c1)
        p2, _ = im2col(pl1, 3, 3)
        c2 = lin(p2, p["w2"], p["b2"]).reshape(B, 4, 4, 128)
        pl2 = pool(c2)
        h = lin(pl2.reshape(B, 512), p["fw1"], p["fb1"], True)
        return lin(h, p["fw2"], p["fb2"], True)

    ch1 = br(x[:, 0, :, :][..., None])
    ch2 = br(x[:, 1, :, :][..., None])
    out = lin(jnp.concatenate([ch1, ch2], axis=1), p["fw3"], p["fb3"])
    return out, ch1, ch2


if __name__ == "__main__":
    key = jax.random.PRNGKey(0)
    kx, kp = jax.random.split(key)
    x = jax.random.normal(kx, (2, 2, 14, 14), dtype=jnp.float32)   # B=2 pairs of 14x14
    params = init_params(kp, nb_hidden=100)

    out, ch1, ch2 = forward(x, params)
    jax.block_until_ready((out, ch1, ch2))

    assert out.shape == (2, 2) and ch1.shape == (2, 10) and ch2.shape == (2, 10)
    assert bool(jnp.all(jnp.isfinite(out)))

    ro, r1, r2 = forward_ref(x, params)
    assert jnp.allclose(out, ro, rtol=1e-2, atol=1e-2)
    assert jnp.allclose(ch1, r1, rtol=1e-2, atol=1e-2)
    assert jnp.allclose(ch2, r2, rtol=1e-2, atol=1e-2)

    print("KERNEL_OK")
</pallas_src>

<mosaic_0001>
module attributes {stable_mosaic.version = 11 : i64} {
  func.func @_fused_pair_kernel(%arg0: memref<4x144x16xf32, #tpu.memory_space<vmem>>, %arg1: memref<16x64xf32, #tpu.memory_space<vmem>>, %arg2: memref<1x64xf32, #tpu.memory_space<vmem>>, %arg3: memref<576x128xf32, #tpu.memory_space<vmem>>, %arg4: memref<1x128xf32, #tpu.memory_space<vmem>>, %arg5: memref<512x128xf32, #tpu.memory_space<vmem>>, %arg6: memref<1x128xf32, #tpu.memory_space<vmem>>, %arg7: memref<128x128xf32, #tpu.memory_space<vmem>>, %arg8: memref<1x128xf32, #tpu.memory_space<vmem>>, %arg9: memref<4x128xf32, #tpu.memory_space<vmem>>, %arg10: memref<160x64xf32, #tpu.memory_space<vmem>>, %arg11: memref<160x128xf32, #tpu.memory_space<vmem>>, %arg12: memref<160x128xf32, #tpu.memory_space<vmem>>) attributes {dimension_semantics = [], scalar_prefetch = 0 : i64, scratch_operands = 3 : i64, tpu.core_type = #tpu.core_type<tc>} {
    %c0 = arith.constant 0 : index
    %c0_0 = arith.constant 0 : index
    %0 = vector.load %arg1[%c0, %c0_0] : memref<16x64xf32, #tpu.memory_space<vmem>>, vector<16x64xf32>
    %c0_1 = arith.constant 0 : index
    %c0_2 = arith.constant 0 : index
    %1 = vector.load %arg2[%c0_1, %c0_2] : memref<1x64xf32, #tpu.memory_space<vmem>>, vector<1x64xf32>
    %c0_3 = arith.constant 0 : index
    %c0_4 = arith.constant 0 : index
    %c0_5 = arith.constant 0 : index
    %2 = vector.load %arg0[%c0_3, %c0_4, %c0_5] : memref<4x144x16xf32, #tpu.memory_space<vmem>>, vector<1x144x16xf32>
    %3 = vector.shape_cast %2 : vector<1x144x16xf32> to vector<144x16xf32>
    %cst = arith.constant dense<0.000000e+00> : vector<144x64xf32>
    %4 = tpu.matmul %3, %0, %cst {dimension_numbers = #tpu.dot_dimension_numbers<[1], [0], [0], [1], [0, 0, 1, 1], [], []>} : vector<144x16xf32>, vector<16x64xf32>, vector<144x64xf32> -> vector<144x64xf32>
    %5 = vector.broadcast %1 : vector<1x64xf32> to vector<144x64xf32>
    %6 = arith.addf %4, %5 : vector<144x64xf32>
    %c1 = arith.constant 1 : index
    %c0_6 = arith.constant 0 : index
    %c0_7 = arith.constant 0 : index
    %7 = vector.load %arg0[%c1, %c0_6, %c0_7] : memref<4x144x16xf32, #tpu.memory_space<vmem>>, vector<1x144x16xf32>
    %8 = vector.shape_cast %7 : vector<1x144x16xf32> to vector<144x16xf32>
    %cst_8 = arith.constant dense<0.000000e+00> : vector<144x64xf32>
    %9 = tpu.matmul %8, %0, %cst_8 {dimension_numbers = #tpu.dot_dimension_numbers<[1], [0], [0], [1], [0, 0, 1, 1], [], []>} : vector<144x16xf32>, vector<16x64xf32>, vector<144x64xf32> -> vector<144x64xf32>
    %10 = vector.broadcast %1 : vector<1x64xf32> to vector<144x64xf32>
    %11 = arith.addf %9, %10 : vector<144x64xf32>
    %12 = arith.maximumf %6, %11 : vector<144x64xf32>
    %c2 = arith.constant 2 : index
    %c0_9 = arith.constant 0 : index
    %c0_10 = arith.constant 0 : index
    %13 = vector.load %arg0[%c2, %c0_9, %c0_10] : memref<4x144x16xf32, #tpu.memory_space<vmem>>, vector<1x144x16xf32>
    %14 = vector.shape_cast %13 : vector<1x144x16xf32> to vector<144x16xf32>
    %cst_11 = arith.constant dense<0.000000e+00> : vector<144x64xf32>
    %15 = tpu.matmul %14, %0, %cst_11 {dimension_numbers = #tpu.dot_dimension_numbers<[1], [0], [0], [1], [0, 0, 1, 1], [], []>} : vector<144x16xf32>, vector<16x64xf32>, vector<144x64xf32> -> vector<144x64xf32>
    %16 = vector.broadcast %1 : vector<1x64xf32> to vector<144x64xf32>
    %17 = arith.addf %15, %16 : vector<144x64xf32>
    %18 = arith.maximumf %12, %17 : vector<144x64xf32>
    %c3 = arith.constant 3 : index
    %c0_12 = arith.constant 0 : index
    %c0_13 = arith.constant 0 : index
    %19 = vector.load %arg0[%c3, %c0_12, %c0_13] : memref<4x144x16xf32, #tpu.memory_space<vmem>>, vector<1x144x16xf32>
    %20 = vector.shape_cast %19 : vector<1x144x16xf32> to vector<144x16xf32>
    %cst_14 = arith.constant dense<0.000000e+00> : vector<144x64xf32>
    %21 = tpu.matmul %20, %0, %cst_14 {dimension_numbers = #tpu.dot_dimension_numbers<[1], [0], [0], [1], [0, 0, 1, 1], [], []>} : vector<144x16xf32>, vector<16x64xf32>, vector<144x64xf32> -> vector<144x64xf32>
    %22 = vector.broadcast %1 : vector<1x64xf32> to vector<144x64xf32>
    %23 = arith.addf %21, %22 : vector<144x64xf32>
    %24 = arith.maximumf %18, %23 : vector<144x64xf32>
    %cst_15 = arith.constant 0.000000e+00 : f32
    %25 = vector.broadcast %cst_15 : f32 to vector<144x64xf32>
    %26 = arith.maximumf %24, %25 : vector<144x64xf32>
    %c0_16 = arith.constant 0 : index
    %c0_17 = arith.constant 0 : index
    %27 = vector.load %arg10[%c0_16, %c0_17] : memref<160x64xf32, #tpu.memory_space<vmem>>, vector<144x64xf32>
    tpu.vector_store %arg10[%c0_16, %c0_17], %26 {strides = array<i32>} : memref<160x64xf32, #tpu.memory_space<vmem>>, vector<144x64xf32>,
    %cst_18 = arith.constant 0.000000e+00 : f32
    %28 = vector.broadcast %cst_18 : f32 to vector<16x64xf32>
    %c144 = arith.constant 144 : index
    %c0_19 = arith.constant 0 : index
    %29 = vector.load %arg10[%c144, %c0_19] : memref<160x64xf32, #tpu.memory_space<vmem>>, vector<16x64xf32>
    tpu.vector_store %arg10[%c144, %c0_19], %28 {strides = array<i32>} : memref<160x64xf32, #tpu.memory_space<vmem>>, vector<16x64xf32>,
    %cst_20 = arith.constant 0.000000e+00 : f32
    %30 = vector.broadcast %cst_20 : f32 to vector<144x128xf32>
    %c0_21 = arith.constant 0 : index
    %c0_22 = arith.constant 0 : index
    %31 = vector.load %arg10[%c0_21, %c0_22] : memref<160x64xf32, #tpu.memory_space<vmem>>, vector<144x64xf32>
    %c0_23 = arith.constant 0 : index
    %c0_24 = arith.constant 0 : index
    %32 = vector.load %arg3[%c0_23, %c0_24] : memref<576x128xf32, #tpu.memory_space<vmem>>, vector<64x128xf32>
    %cst_25 = arith.constant dense<0.000000e+00> : vector<144x128xf32>
    %33 = tpu.matmul %31, %32, %cst_25 {dimension_numbers = #tpu.dot_dimension_numbers<[1], [0], [0], [1], [0, 0, 1, 1], [], []>} : vector<144x64xf32>, vector<64x128xf32>, vector<144x128xf32> -> vector<144x128xf32>
    %34 = arith.addf %30, %33 : vector<144x128xf32>
    %c1_26 = arith.constant 1 : index
    %c0_27 = arith.constant 0 : index
    %35 = vector.load %arg10[%c1_26, %c0_27] : memref<160x64xf32, #tpu.memory_space<vmem>>, vector<144x64xf32>
    %c64 = arith.constant 64 : index
    %c0_28 = arith.constant 0 : index
    %36 = vector.load %arg3[%c64, %c0_28] : memref<576x128xf32, #tpu.memory_space<vmem>>, vector<64x128xf32>
    %cst_29 = arith.constant dense<0.000000e+00> : vector<144x128xf32>
    %37 = tpu.matmul %35, %36, %cst_29 {dimension_numbers = #tpu.dot_dimension_numbers<[1], [0], [0], [1], [0, 0, 1, 1], [], []>} : vector<144x64xf32>, vector<64x128xf32>, vector<144x128xf32> -> vector<144x128xf32>
    %38 = arith.addf %34, %37 : vector<144x128xf32>
    %c2_30 = arith.constant 2 : index
    %c0_31 = arith.constant 0 : index
    %39 = vector.load %arg10[%c2_30, %c0_31] : memref<160x64xf32, #tpu.memory_space<vmem>>, vector<144x64xf32>
    %c128 = arith.constant 128 : index
    %c0_32 = arith.constant 0 : index
    %40 = vector.load %arg3[%c128, %c0_32] : memref<576x128xf32, #tpu.memory_space<vmem>>, vector<64x128xf32>
    %cst_33 = arith.constant dense<0.000000e+00> : vector<144x128xf32>
    %41 = tpu.matmul %39, %40, %cst_33 {dimension_numbers = #tpu.dot_dimension_numbers<[1], [0], [0], [1], [0, 0, 1, 1], [], []>} : vector<144x64xf32>, vector<64x128xf32>, vector<144x128xf32> -> vector<144x128xf32>
    %42 = arith.addf %38, %41 : vector<144x128xf32>
    %c6 = arith.constant 6 : index
    %c0_34 = arith.constant 0 : index
    %43 = vector.load %arg10[%c6, %c0_34] : memref<160x64xf32, #tpu.memory_space<vmem>>, vector<144x64xf32>
    %c192 = arith.constant 192 : index
    %c0_35 = arith.constant 0 : index
    %44 = vector.load %arg3[%c192, %c0_35] : memref<576x128xf32, #tpu.memory_space<vmem>>, vector<64x128xf32>
    %cst_36 = arith.constant dense<0.000000e+00> : vector<144x128xf32>
    %45 = tpu.matmul %43, %44, %cst_36 {dimension_numbers = #tpu.dot_dimension_numbers<[1], [0], [0], [1], [0, 0, 1, 1], [], []>} : vector<144x64xf32>, vector<64x128xf32>, vector<144x128xf32> -> vector<144x128xf32>
    %46 = arith.addf %42, %45 : vector<144x128xf32>
    %c7 = arith.constant 7 : index
    %c0_37 = arith.constant 0 : index
    %47 = vector.load %arg10[%c7, %c0_37] : memref<160x64xf32, #tpu.memory_space<vmem>>, vector<144x64xf32>
    %c256 = arith.constant 256 : index
    %c0_38 = arith.constant 0 : index
    %48 = vector.load %arg3[%c256, %c0_38] : memref<576x128xf32, #tpu.memory_space<vmem>>, vector<64x128xf32>
    %cst_39 = arith.constant dense<0.000000e+00> : vector<144x128xf32>
    %49 = tpu.matmul %47, %48, %cst_39 {dimension_numbers = #tpu.dot_dimension_numbers<[1], [0], [0], [1], [0, 0, 1, 1], [], []>} : vector<144x64xf32>, vector<64x128xf32>, vector<144x128xf32> -> vector<144x128xf32>
    %50 = arith.addf %46, %49 : vector<144x128xf32>
    %c8 = arith.constant 8 : index
    %c0_40 = arith.constant 0 : index
    %51 = vector.load %arg10[%c8, %c0_40] : memref<160x64xf32, #tpu.memory_space<vmem>>, vector<144x64xf32>
    %c320 = arith.constant 320 : index
    %c0_41 = arith.constant 0 : index
    %52 = vector.load %arg3[%c320, %c0_41] : memref<576x128xf32, #tpu.memory_space<vmem>>, vector<64x128xf32>
    %cst_42 = arith.constant dense<0.000000e+00> : vector<144x128xf32>
    %53 = tpu.matmul %51, %52, %cst_42 {dimension_numbers = #tpu.dot_dimension_numbers<[1], [0], [0], [1], [0, 0, 1, 1], [], []>} : vector<144x64xf32>, vector<64x128xf32>, vector<144x128xf32> -> vector<144x128xf32>
    %54 = arith.addf %50, %53 : vector<144x128xf32>
    %c12 = arith.constant 12 : index
    %c0_43 = arith.constant 0 : index
    %55 = vector.load %arg10[%c12, %c0_43] : memref<160x64xf32, #tpu.memory_space<vmem>>, vector<144x64xf32>
    %c384 = arith.constant 384 : index
    %c0_44 = arith.constant 0 : index
    %56 = vector.load %arg3[%c384, %c0_44] : memref<576x128xf32, #tpu.memory_space<vmem>>, vector<64x128xf32>
    %cst_45 = arith.constant dense<0.000000e+00> : vector<144x128xf32>
    %57 = tpu.matmul %55, %56, %cst_45 {dimension_numbers = #tpu.dot_dimension_numbers<[1], [0], [0], [1], [0, 0, 1, 1], [], []>} : vector<144x64xf32>, vector<64x128xf32>, vector<144x128xf32> -> vector<144x128xf32>
    %58 = arith.addf %54, %57 : vector<144x128xf32>
    %c13 = arith.constant 13 : index
    %c0_46 = arith.constant 0 : index
    %59 = vector.load %arg10[%c13, %c0_46] : memref<160x64xf32, #tpu.memory_space<vmem>>, vector<144x64xf32>
    %c448 = arith.constant 448 : index
    %c0_47 = arith.constant 0 : index
    %60 = vector.load %arg3[%c448, %c0_47] : memref<576x128xf32, #tpu.memory_space<vmem>>, vector<64x128xf32>
    %cst_48 = arith.constant dense<0.000000e+00> : vector<144x128xf32>
    %61 = tpu.matmul %59, %60, %cst_48 {dimension_numbers = #tpu.dot_dimension_numbers<[1], [0], [0], [1], [0, 0, 1, 1], [], []>} : vector<144x64xf32>, vector<64x128xf32>, vector<144x128xf32> -> vector<144x128xf32>
    %62 = arith.addf %58, %61 : vector<144x128xf32>
    %c14 = arith.constant 14 : index
    %c0_49 = arith.constant 0 : index
    %63 = vector.load %arg10[%c14, %c0_49] : memref<160x64xf32, #tpu.memory_space<vmem>>, vector<144x64xf32>
    %c512 = arith.constant 512 : index
    %c0_50 = arith.constant 0 : index
    %64 = vector.load %arg3[%c512, %c0_50] : memref<576x128xf32, #tpu.memory_space<vmem>>, vector<64x128xf32>
    %cst_51 = arith.constant dense<0.000000e+00> : vector<144x128xf32>
    %65 = tpu.matmul %63, %64, %cst_51 {dimension_numbers = #tpu.dot_dimension_numbers<[1], [0], [0], [1], [0, 0, 1, 1], [], []>} : vector<144x64xf32>, vector<64x128xf32>, vector<144x128xf32> -> vector<144x128xf32>
    %66 = arith.addf %62, %65 : vector<144x128xf32>
    %c0_52 = arith.constant 0 : index
    %c0_53 = arith.constant 0 : index
    %67 = vector.load %arg4[%c0_52, %c0_53] : memref<1x128xf32, #tpu.memory_space<vmem>>, vector<1x128xf32>
    %68 = vector.broadcast %67 : vector<1x128xf32> to vector<144x128xf32>
    %69 = arith.addf %66, %68 : vector<144x128xf32>
    %c0_54 = arith.constant 0 : index
    %c0_55 = arith.constant 0 : index
    %70 = vector.load %arg11[%c0_54, %c0_55] : memref<160x128xf32, #tpu.memory_space<vmem>>, vector<144x128xf32>
    tpu.vector_store %arg11[%c0_54, %c0_55], %69 {strides = array<i32>} : memref<160x128xf32, #tpu.memory_space<vmem>>, vector<144x128xf32>,
    %cst_56 = arith.constant 0.000000e+00 : f32
    %71 = vector.broadcast %cst_56 : f32 to vector<16x128xf32>
    %c144_57 = arith.constant 144 : index
    %c0_58 = arith.constant 0 : index
    %72 = vector.load %arg11[%c144_57, %c0_58] : memref<160x128xf32, #tpu.memory_space<vmem>>, vector<16x128xf32>
    tpu.vector_store %arg11[%c144_57, %c0_58], %71 {strides = array<i32>} : memref<160x128xf32, #tpu.memory_space<vmem>>, vector<16x128xf32>,
    %c0_59 = arith.constant 0 : index
    %c0_60 = arith.constant 0 : index
    %73 = vector.load %arg11[%c0_59, %c0_60] : memref<160x128xf32, #tpu.memory_space<vmem>>, vector<144x128xf32>
    %c1_61 = arith.constant 1 : index
    %c0_62 = arith.constant 0 : index
    %74 = vector.load %arg11[%c1_61, %c0_62] : memref<160x128xf32, #tpu.memory_space<vmem>>, vector<144x128xf32>
    %75 = arith.maximumf %73, %74 : vector<144x128xf32>
    %c6_63 = arith.constant 6 : index
    %c0_64 = arith.constant 0 : index
    %76 = vector.load %arg11[%c6_63, %c0_64] : memref<160x128xf32, #tpu.memory_space<vmem>>, vector<144x128xf32>
    %c7_65 = arith.constant 7 : index
    %c0_66 = arith.constant 0 : index
    %77 = vector.load %arg11[%c7_65, %c0_66] : memref<160x128xf32, #tpu.memory_space<vmem>>, vector<144x128xf32>
    %78 = arith.maximumf %76, %77 : vector<144x128xf32>
    %79 = arith.maximumf %75, %78 : vector<144x128xf32>
    %cst_67 = arith.constant 0.000000e+00 : f32
    %80 = vector.broadcast %cst_67 : f32 to vector<144x128xf32>
    %81 = arith.maximumf %79, %80 : vector<144x128xf32>
    %c0_68 = arith.constant 0 : index
    %c0_69 = arith.constant 0 : index
    %82 = vector.load %arg12[%c0_68, %c0_69] : memref<160x128xf32, #tpu.memory_space<vmem>>, vector<144x128xf32>
    tpu.vector_store %arg12[%c0_68, %c0_69], %81 {strides = array<i32>} : memref<160x128xf32, #tpu.memory_space<vmem>>, vector<144x128xf32>,
    %cst_70 = arith.constant 0.000000e+00 : f32
    %83 = vector.broadcast %cst_70 : f32 to vector<16x128xf32>
    %c144_71 = arith.constant 144 : index
    %c0_72 = arith.constant 0 : index
    %84 = vector.load %arg12[%c144_71, %c0_72] : memref<160x128xf32, #tpu.memory_space<vmem>>, vector<16x128xf32>
    tpu.vector_store %arg12[%c144_71, %c0_72], %83 {strides = array<i32>} : memref<160x128xf32, #tpu.memory_space<vmem>>, vector<16x128xf32>,
    %cst_73 = arith.constant 0.000000e+00 : f32
    %85 = vector.broadcast %cst_73 : f32 to vector<144x128xf32>
    %c0_74 = arith.constant 0 : index
    %c0_75 = arith.constant 0 : index
    %86 = vector.load %arg12[%c0_74, %c0_75] : memref<160x128xf32, #tpu.memory_space<vmem>>, vector<144x128xf32>
    %c0_76 = arith.constant 0 : index
    %c0_77 = arith.constant 0 : index
    %87 = vector.load %arg5[%c0_76, %c0_77] : memref<512x128xf32, #tpu.memory_space<vmem>>, vector<128x128xf32>
    %cst_78 = arith.constant dense<0.000000e+00> : vector<144x128xf32>
    %88 = tpu.matmul %86, %87, %cst_78 {dimension_numbers = #tpu.dot_dimension_numbers<[1], [0], [0], [1], [0, 0, 1, 1], [], []>} : vector<144x128xf32>, vector<128x128xf32>, vector<144x128xf32> -> vector<144x128xf32>
    %89 = arith.addf %85, %88 : vector<144x128xf32>
    %c2_79 = arith.constant 2 : index
    %c0_80 = arith.constant 0 : index
    %90 = vector.load %arg12[%c2_79, %c0_80] : memref<160x128xf32, #tpu.memory_space<vmem>>, vector<144x128xf32>
    %c128_81 = arith.constant 128 : index
    %c0_82 = arith.constant 0 : index
    %91 = vector.load %arg5[%c128_81, %c0_82] : memref<512x128xf32, #tpu.memory_space<vmem>>, vector<128x128xf32>
    %cst_83 = arith.constant dense<0.000000e+00> : vector<144x128xf32>
    %92 = tpu.matmul %90, %91, %cst_83 {dimension_numbers = #tpu.dot_dimension_numbers<[1], [0], [0], [1], [0, 0, 1, 1], [], []>} : vector<144x128xf32>, vector<128x128xf32>, vector<144x128xf32> -> vector<144x128xf32>
    %93 = arith.addf %89, %92 : vector<144x128xf32>
    %c12_84 = arith.constant 12 : index
    %c0_85 = arith.constant 0 : index
    %94 = vector.load %arg12[%c12_84, %c0_85] : memref<160x128xf32, #tpu.memory_space<vmem>>, vector<144x128xf32>
    %c256_86 = arith.constant 256 : index
    %c0_87 = arith.constant 0 : index
    %95 = vector.load %arg5[%c256_86, %c0_87] : memref<512x128xf32, #tpu.memory_space<vmem>>, vector<128x128xf32>
    %cst_88 = arith.constant dense<0.000000e+00> : vector<144x128xf32>
    %96 = tpu.matmul %94, %95, %cst_88 {dimension_numbers = #tpu.dot_dimension_numbers<[1], [0], [0], [1], [0, 0, 1, 1], [], []>} : vector<144x128xf32>, vector<128x128xf32>, vector<144x128xf32> -> vector<144x128xf32>
    %97 = arith.addf %93, %96 : vector<144x128xf32>
    %c14_89 = arith.constant 14 : index
    %c0_90 = arith.constant 0 : index
    %98 = vector.load %arg12[%c14_89, %c0_90] : memref<160x128xf32, #tpu.memory_space<vmem>>, vector<144x128xf32>
    %c384_91 = arith.constant 384 : index
    %c0_92 = arith.constant 0 : index
    %99 = vector.load %arg5[%c384_91, %c0_92] : memref<512x128xf32, #tpu.memory_space<vmem>>, vector<128x128xf32>
    %cst_93 = arith.constant dense<0.000000e+00> : vector<144x128xf32>
    %100 = tpu.matmul %98, %99, %cst_93 {dimension_numbers = #tpu.dot_dimension_numbers<[1], [0], [0], [1], [0, 0, 1, 1], [], []>} : vector<144x128xf32>, vector<128x128xf32>, vector<144x128xf32> -> vector<144x128xf32>
    %101 = arith.addf %97, %100 : vector<144x128xf32>
    %c0_94 = arith.constant 0 : index
    %c0_95 = arith.constant 0 : index
    %102 = vector.load %arg6[%c0_94, %c0_95] : memref<1x128xf32, #tpu.memory_space<vmem>>, vector<1x128xf32>
    %103 = vector.broadcast %102 : vector<1x128xf32> to vector<144x128xf32>
    %104 = arith.addf %101, %103 : vector<144x128xf32>
    %cst_96 = arith.constant 0.000000e+00 : f32
    %105 = vector.broadcast %cst_96 : f32 to vector<144x128xf32>
    %106 = arith.maximumf %104, %105 : vector<144x128xf32>
    %c0_97 = arith.constant 0 : index
    %c0_98 = arith.constant 0 : index
    %107 = vector.load %arg7[%c0_97, %c0_98] : memref<128x128xf32, #tpu.memory_space<vmem>>, vector<128x128xf32>
    %cst_99 = arith.constant dense<0.000000e+00> : vector<144x128xf32>
    %108 = tpu.matmul %106, %107, %cst_99 {dimension_numbers = #tpu.dot_dimension_numbers<[1], [0], [0], [1], [0, 0, 1, 1], [], []>} : vector<144x128xf32>, vector<128x128xf32>, vector<144x128xf32> -> vector<144x128xf32>
    %c0_100 = arith.constant 0 : index
    %c0_101 = arith.constant 0 : index
    %109 = vector.load %arg8[%c0_100, %c0_101] : memref<1x128xf32, #tpu.memory_space<vmem>>, vector<1x128xf32>
    %110 = vector.broadcast %109 : vector<1x128xf32> to vector<144x128xf32>
    %111 = arith.addf %108, %110 : vector<144x128xf32>
    %cst_102 = arith.constant 0.000000e+00 : f32
    %112 = vector.broadcast %cst_102 : f32 to vector<144x128xf32>
    %113 = arith.maximumf %111, %112 : vector<144x128xf32>
    %114 = vector.extract_strided_slice %113 {offsets = [0, 0], sizes = [1, 128], strides = [1, 1]} : vector<144x128xf32> to vector<1x128xf32>
    %c0_103 = arith.constant 0 : index
    %c0_104 = arith.constant 0 : index
    %115 = vector.load %arg9[%c0_103, %c0_104] : memref<4x128xf32, #tpu.memory_space<vmem>>, vector<1x128xf32>
    tpu.vector_store %arg9[%c0_103, %c0_104], %114 {strides = array<i32>} : memref<4x128xf32, #tpu.memory_space<vmem>>, vector<1x128xf32>,
    %116 = vector.extract_strided_slice %113 {offsets = [36, 0], sizes = [1, 128], strides = [1, 1]} : vector<144x128xf32> to vector<1x128xf32>
    %c1_105 = arith.constant 1 : index
    %c0_106 = arith.constant 0 : index
    %117 = vector.load %arg9[%c1_105, %c0_106] : memref<4x128xf32, #tpu.memory_space<vmem>>, vector<1x128xf32>
    tpu.vector_store %arg9[%c1_105, %c0_106], %116 {strides = array<i32>} : memref<4x128xf32, #tpu.memory_space<vmem>>, vector<1x128xf32>,
    %118 = vector.extract_strided_slice %113 {offsets = [72, 0], sizes = [1, 128], strides = [1, 1]} : vector<144x128xf32> to vector<1x128xf32>
    %c2_107 = arith.constant 2 : index
    %c0_108 = arith.constant 0 : index
    %119 = vector.load %arg9[%c2_107, %c0_108] : memref<4x128xf32, #tpu.memory_space<vmem>>, vector<1x128xf32>
    tpu.vector_store %arg9[%c2_107, %c0_108], %118 {strides = array<i32>} : memref<4x128xf32, #tpu.memory_space<vmem>>, vector<1x128xf32>,
    %120 = vector.extract_strided_slice %113 {offsets = [108, 0], sizes = [1, 128], strides = [1, 1]} : vector<144x128xf32> to vector<1x128xf32>
    %c3_109 = arith.constant 3 : index
    %c0_110 = arith.constant 0 : index
    %121 = vector.load %arg9[%c3_109, %c0_110] : memref<4x128xf32, #tpu.memory_space<vmem>>, vector<1x128xf32>
    tpu.vector_store %arg9[%c3_109, %c0_110], %120 {strides = array<i32>} : memref<4x128xf32, #tpu.memory_space<vmem>>, vector<1x128xf32>,
    return
  }
}

</mosaic_0001>

<llo_original>
// kernel: forward.1
$region0: #{forward.1}
  #allocation0 [shape = 'u32[]', space=smem, size = 0x4, offset = 0x4, fixed_abs, tag = 'smem constant byte address 0x4 - core index']
  #allocation1 [shape = 'u32[72,128]{1,0:T(1,128)}', space=vmem, size = 0x9000, scoped, tag = 'internal scratch']
  #allocation2 [shape = 'f32[160,64]{1,0:T(8,128)}', space=vmem, size = 0x14000, scoped, tag = 'scratch operand']
  #allocation3 [shape = 'f32[160,128]{1,0:T(8,128)}', space=vmem, size = 0x14000, scoped, tag = 'scratch operand']
  #allocation4 [shape = 'f32[160,128]{1,0:T(8,128)}', space=vmem, size = 0x14000, scoped, tag = 'scratch operand']
  %s0 = inlined_call_operand.vmem [shape: f32[4,144,16], index: 0, kind: input, shape index: {}]
  %s1 = inlined_call_operand.vmem [shape: f32[16,64], index: 1, kind: input, shape index: {}]
  %s2 = inlined_call_operand.vmem [shape: f32[1,64], index: 2, kind: input, shape index: {}]
  %s3 = inlined_call_operand.vmem [shape: f32[576,128], index: 3, kind: input, shape index: {}]
  %s4 = inlined_call_operand.vmem [shape: f32[1,128], index: 4, kind: input, shape index: {}]
  %s5 = inlined_call_operand.vmem [shape: f32[512,128], index: 5, kind: input, shape index: {}]
  %s6 = inlined_call_operand.vmem [shape: f32[1,128], index: 6, kind: input, shape index: {}]
  %s7 = inlined_call_operand.vmem [shape: f32[128,128], index: 7, kind: input, shape index: {}]
  %s8 = inlined_call_operand.vmem [shape: f32[1,128], index: 8, kind: input, shape index: {}]
  %s9 = inlined_call_operand.vmem [shape: f32[4,128], index: 9, kind: output, shape index: {}]
  %s10 = sld [smem:[#allocation0]]
  $region46: #{forward.1} parent=0
    _
  %s12 = ssub.s32 1, %s10
  %s13 = scalar_select 0, %s12, %s10
  // Predicated region
  $region2: #{forward.1} parent=0 // pred_check
    _
  $region3: #{forward.1} parent=0 // pred_check_branch
    %15 = sbr.rel (0) target = $region5
  $region4: #{forward.1} parent=0 // pred_region
    _
  $region5: #{forward.1} parent=0 // pred_fallthru
    _
  // Predicated region
  $region6: #{forward.1} parent=0 // pred_check
    _
  $region7: #{forward.1} parent=0 // pred_check_branch
    %17 = sbr.rel (0) target = $region9
  $region8: #{forward.1} parent=0 // pred_region
    _
  $region9: #{forward.1} parent=0 // pred_fallthru
    _
  // Predicated region
  $region10: #{forward.1} parent=0 // pred_check
    _
  $region11: #{forward.1} parent=0 // pred_check_branch
    %19 = sbr.rel (0) target = $region13
  $region12: #{forward.1} parent=0 // pred_region
    _
  $region13: #{forward.1} parent=0 // pred_fallthru
    _
  // Predicated region
  $region14: #{forward.1} parent=0 // pred_check
    _
  $region15: #{forward.1} parent=0 // pred_check_branch
    %21 = sbr.rel (0) target = $region17
  $region16: #{forward.1} parent=0 // pred_region
    _
  $region17: #{forward.1} parent=0 // pred_fallthru
    _
  // Predicated region
  $region18: #{forward.1} parent=0 // pred_check
    _
  $region19: #{forward.1} parent=0 // pred_check_branch
    %23 = sbr.rel (0) target = $region21
  $region20: #{forward.1} parent=0 // pred_region
    _
  $region21: #{forward.1} parent=0 // pred_fallthru
    _
  // Predicated region
  $region22: #{forward.1} parent=0 // pred_check
    _
  $region23: #{forward.1} parent=0 // pred_check_branch
    %25 = sbr.rel (0) target = $region25
  $region24: #{forward.1} parent=0 // pred_region
    _
  $region25: #{forward.1} parent=0 // pred_fallthru
    _
  // Predicated region
  $region26: #{forward.1} parent=0 // pred_check
    _
  $region27: #{forward.1} parent=0 // pred_check_branch
    %27 = sbr.rel (0) target = $region29
  $region28: #{forward.1} parent=0 // pred_region
    _
  $region29: #{forward.1} parent=0 // pred_fallthru
    _
  // Predicated region
  $region30: #{forward.1} parent=0 // pred_check
    _
  $region31: #{forward.1} parent=0 // pred_check_branch
    %29 = sbr.rel (0) target = $region33
  $region32: #{forward.1} parent=0 // pred_region
    _
  $region33: #{forward.1} parent=0 // pred_fallthru
    _
  // Predicated region
  $region34: #{forward.1} parent=0 // pred_check
    _
  $region35: #{forward.1} parent=0 // pred_check_branch
    %31 = sbr.rel (0) target = $region37
  $region36: #{forward.1} parent=0 // pred_region
    _
  $region37: #{forward.1} parent=0 // pred_fallthru
    _
  %v32 = vld [vmem:[%s1] sm:$0xff]
  %v33 = vld [vmem:[%s1 + $0x8] sm:$0xff]
  %v34 = vld [vmem:[%s2] sm:$0x1]
  %v35 = vld [vmem:[%s0] sm:$0xff]
  %v36 = vld [vmem:[%s0 + $0x8] sm:$0xff]
  %v37 = vld [vmem:[%s0 + $0x10] sm:$0xff]
  %v38 = vld [vmem:[%s0 + $0x18] sm:$0xff]
  %v39 = vld [vmem:[%s0 + $0x20] sm:$0xff]
  %v40 = vld [vmem:[%s0 + $0x28] sm:$0xff]
  %v41 = vld [vmem:[%s0 + $0x30] sm:$0xff]
  %v42 = vld [vmem:[%s0 + $0x38] sm:$0xff]
  %v43 = vld [vmem:[%s0 + $0x40] sm:$0xff]
  %v44 = vld [vmem:[%s0 + $0x48] sm:$0xff]
  %v45 = vld [vmem:[%s0 + $0x50] sm:$0xff]
  %v46 = vld [vmem:[%s0 + $0x58] sm:$0xff]
  %v47 = vld [vmem:[%s0 + $0x60] sm:$0xff]
  %v48 = vld [vmem:[%s0 + $0x68] sm:$0xff]
  %v49 = vld [vmem:[%s0 + $0x70] sm:$0xff]
  %v50 = vld [vmem:[%s0 + $0x78] sm:$0xff]
  %v51 = vld [vmem:[%s0 + $0x80] sm:$0xff]
  %v52 = vld [vmem:[%s0 + $0x88] sm:$0xff]
  %v54 = vperm.slane %v34, 0
  %vm56 = vcmask 130048
  %v58 = vsel %vm56, %v35, 0
  %v61 = vsel %vm56, %v36, 0
  %v64 = vsel %vm56, %v37, 0
  %v67 = vsel %vm56, %v38, 0
  %v70 = vsel %vm56, %v39, 0
  %v73 = vsel %vm56, %v40, 0
  %v76 = vsel %vm56, %v41, 0
  %v79 = vsel %vm56, %v42, 0
  %v82 = vsel %vm56, %v43, 0
  %v85 = vsel %vm56, %v44, 0
  %v88 = vsel %vm56, %v45, 0
  %v91 = vsel %vm56, %v46, 0
  %v94 = vsel %vm56, %v47, 0
  %v97 = vsel %vm56, %v48, 0
  %v100 = vsel %vm56, %v49, 0
  %v103 = vsel %vm56, %v50, 0
  %v106 = vsel %vm56, %v51, 0
  %v109 = vsel %vm56, %v52, 0
  %111 = vmatpush.msra.mxu0 0.0
  %112 = vmatpush.msra.mxu0 0.0
  %113 = vmatpush.msra.mxu0 0.0
  %114 = vmatpush.msra.mxu0 0.0
  %115 = vmatpush.msra.mxu0 0.0
  %116 = vmatpush.msra.mxu0 0.0
  %117 = vmatpush.msra.mxu0 0.0
  %118 = vmatpush.msra.mxu0 0.0
  %119 = vmatpush.msra.mxu0 0.0
  %120 = vmatpush.msra.mxu0 0.0
  %121 = vmatpush.msra.mxu0 0.0
  %122 = vmatpush.msra.mxu0 0.0
  %123 = vmatpush.msra.mxu0 0.0
  %124 = vmatpush.msra.mxu0 0.0
  %125 = vmatpush.msra.mxu0 %v33
  %126 = vmatpush.msra.mxu0 %v32
  %127 = vmatmul.f32.gmra.mxu0 %v58
  %v128 = vpop.f32.mrf.mxu0
  %v129 = vadd.f32 %v54, %v128
  %130 = vmatmul.f32.gmra.mxu0 %v61
  %v131 = vpop.f32.mrf.mxu0
  %v132 = vadd.f32 %v54, %v131
  %133 = vmatmul.f32.gmra.mxu0 %v64
  %v134 = vpop.f32.mrf.mxu0
  %v135 = vadd.f32 %v54, %v134
  %136 = vmatmul.f32.gmra.mxu0 %v67
  %v137 = vpop.f32.mrf.mxu0
  %v138 = vadd.f32 %v54, %v137
  %139 = vmatmul.f32.gmra.mxu0 %v70
  %v140 = vpop.f32.mrf.mxu0
  %v141 = vadd.f32 %v54, %v140
  %142 = vmatmul.f32.gmra.mxu0 %v73
  %v143 = vpop.f32.mrf.mxu0
  %v144 = vadd.f32 %v54, %v143
  %145 = vmatmul.f32.gmra.mxu0 %v76
  %v146 = vpop.f32.mrf.mxu0
  %v147 = vadd.f32 %v54, %v146
  %148 = vmatmul.f32.gmra.mxu0 %v79
  %v149 = vpop.f32.mrf.mxu0
  %v150 = vadd.f32 %v54, %v149
  %151 = vmatmul.f32.gmra.mxu0 %v82
  %v152 = vpop.f32.mrf.mxu0
  %v153 = vadd.f32 %v54, %v152
  %154 = vmatmul.f32.gmra.mxu0 %v85
  %v155 = vpop.f32.mrf.mxu0
  %v156 = vadd.f32 %v54, %v155
  %157 = vmatmul.f32.gmra.mxu0 %v88
  %v158 = vpop.f32.mrf.mxu0
  %v159 = vadd.f32 %v54, %v158
  %160 = vmatmul.f32.gmra.mxu0 %v91
  %v161 = vpop.f32.mrf.mxu0
  %v162 = vadd.f32 %v54, %v161
  %163 = vmatmul.f32.gmra.mxu0 %v94
  %v164 = vpop.f32.mrf.mxu0
  %v165 = vadd.f32 %v54, %v164
  %166 = vmatmul.f32.gmra.mxu0 %v97
  %v167 = vpop.f32.mrf.mxu0
  %v168 = vadd.f32 %v54, %v167
  %169 = vmatmul.f32.gmra.mxu0 %v100
  %v170 = vpop.f32.mrf.mxu0
  %v171 = vadd.f32 %v54, %v170
  %172 = vmatmul.f32.gmra.mxu0 %v103
  %v173 = vpop.f32.mrf.mxu0
  %v174 = vadd.f32 %v54, %v173
  %175 = vmatmul.f32.gmra.mxu0 %v106
  %v176 = vpop.f32.mrf.mxu0
  %v177 = vadd.f32 %v54, %v176
  %178 = vmatmul.f32.gmra.mxu0 %v109
  %v179 = vpop.f32.mrf.mxu0
  %v180 = vadd.f32 %v54, %v179
  %181 = vdwg.mxu0
  %s182 = scalar_lea.vmem %s0, 144
  %v183 = vld [vmem:[%s182] sm:$0xff]
  %v184 = vld [vmem:[%s182 + $0x8] sm:$0xff]
  %v185 = vld [vmem:[%s182 + $0x10] sm:$0xff]
  %v186 = vld [vmem:[%s182 + $0x18] sm:$0xff]
  %v187 = vld [vmem:[%s182 + $0x20] sm:$0xff]
  %v188 = vld [vmem:[%s182 + $0x28] sm:$0xff]
  %v189 = vld [vmem:[%s182 + $0x30] sm:$0xff]
  %v190 = vld [vmem:[%s182 + $0x38] sm:$0xff]
  %v191 = vld [vmem:[%s182 + $0x40] sm:$0xff]
  %v192 = vld [vmem:[%s182 + $0x48] sm:$0xff]
  %v193 = vld [vmem:[%s182 + $0x50] sm:$0xff]
  %v194 = vld [vmem:[%s182 + $0x58] sm:$0xff]
  %v195 = vld [vmem:[%s182 + $0x60] sm:$0xff]
  %v196 = vld [vmem:[%s182 + $0x68] sm:$0xff]
  %v197 = vld [vmem:[%s182 + $0x70] sm:$0xff]
  %v198 = vld [vmem:[%s182 + $0x78] sm:$0xff]
  %v199 = vld [vmem:[%s182 + $0x80] sm:$0xff]
  %v200 = vld [vmem:[%s182 + $0x88] sm:$0xff]
  %v202 = vsel %vm56, %v183, 0
  %v205 = vsel %vm56, %v184, 0
  %v208 = vsel %vm56, %v185, 0
  %v211 = vsel %vm56, %v186, 0
  %v214 = vsel %vm56, %v187, 0
  %v217 = vsel %vm56, %v188, 0
  %v220 = vsel %vm56, %v189, 0
  %v223 = vsel %vm56, %v190, 0
  %v226 = vsel %vm56, %v191, 0
  %v229 = vsel %vm56, %v192, 0
  %v232 = vsel %vm56, %v193, 0
  %v235 = vsel %vm56, %v194, 0
  %v238 = vsel %vm56, %v195, 0
  %v241 = vsel %vm56, %v196, 0
  %v244 = vsel %vm56, %v197, 0
  %v247 = vsel %vm56, %v198, 0
  %v250 = vsel %vm56, %v199, 0
  %v253 = vsel %vm56, %v200, 0
  %255 = vmatpush.msra.mxu0 0.0
  %256 = vmatpush.msra.mxu0 0.0
  %257 = vmatpush.msra.mxu0 0.0
  %258 = vmatpush.msra.mxu0 0.0
  %259 = vmatpush.msra.mxu0 0.0
  %260 = vmatpush.msra.mxu0 0.0
  %261 = vmatpush.msra.mxu0 0.0
  %262 = vmatpush.msra.mxu0 0.0
  %263 = vmatpush.msra.mxu0 0.0
  %264 = vmatpush.msra.mxu0 0.0
  %265 = vmatpush.msra.mxu0 0.0
  %266 = vmatpush.msra.mxu0 0.0
  %267 = vmatpush.msra.mxu0 0.0
  %268 = vmatpush.msra.mxu0 0.0
  %269 = vmatpush.msra.mxu0 %v33
  %270 = vmatpush.msra.mxu0 %v32
  %271 = vmatmul.f32.gmra.mxu0 %v202
  %v272 = vpop.f32.mrf.mxu0
  %v273 = vadd.f32 %v54, %v272
  %274 = vmatmul.f32.gmra.mxu0 %v205
  %v275 = vpop.f32.mrf.mxu0
  %v276 = vadd.f32 %v54, %v275
  %277 = vmatmul.f32.gmra.mxu0 %v208
  %v278 = vpop.f32.mrf.mxu0
  %v279 = vadd.f32 %v54, %v278
  %280 = vmatmul.f32.gmra.mxu0 %v211
  %v281 = vpop.f32.mrf.mxu0
  %v282 = vadd.f32 %v54, %v281
  %283 = vmatmul.f32.gmra.mxu0 %v214
  %v284 = vpop.f32.mrf.mxu0
  %v285 = vadd.f32 %v54, %v284
  %286 = vmatmul.f32.gmra.mxu0 %v217
  %v287 = vpop.f32.mrf.mxu0
  %v288 = vadd.f32 %v54, %v287
  %289 = vmatmul.f32.gmra.mxu0 %v220
  %v290 = vpop.f32.mrf.mxu0
  %v291 = vadd.f32 %v54, %v290
  %292 = vmatmul.f32.gmra.mxu0 %v223
  %v293 = vpop.f32.mrf.mxu0
  %v294 = vadd.f32 %v54, %v293
  %295 = vmatmul.f32.gmra.mxu0 %v226
  %v296 = vpop.f32.mrf.mxu0
  %v297 = vadd.f32 %v54, %v296
  %298 = vmatmul.f32.gmra.mxu0 %v229
  %v299 = vpop.f32.mrf.mxu0
  %v300 = vadd.f32 %v54, %v299
  %301 = vmatmul.f32.gmra.mxu0 %v232
  %v302 = vpop.f32.mrf.mxu0
  %v303 = vadd.f32 %v54, %v302
  %304 = vmatmul.f32.gmra.mxu0 %v235
  %v305 = vpop.f32.mrf.mxu0
  %v306 = vadd.f32 %v54, %v305
  %307 = vmatmul.f32.gmra.mxu0 %v238
  %v308 = vpop.f32.mrf.mxu0
  %v309 = vadd.f32 %v54, %v308
  %310 = vmatmul.f32.gmra.mxu0 %v241
  %v311 = vpop.f32.mrf.mxu0
  %v312 = vadd.f32 %v54, %v311
  %313 = vmatmul.f32.gmra.mxu0 %v244
  %v314 = vpop.f32.mrf.mxu0
  %v315 = vadd.f32 %v54, %v314
  %316 = vmatmul.f32.gmra.mxu0 %v247
  %v317 = vpop.f32.mrf.mxu0
  %v318 = vadd.f32 %v54, %v317
  %319 = vmatmul.f32.gmra.mxu0 %v250
  %v320 = vpop.f32.mrf.mxu0
  %v321 = vadd.f32 %v54, %v320
  %322 = vmatmul.f32.gmra.mxu0 %v253
  %v323 = vpop.f32.mrf.mxu0
  %v324 = vadd.f32 %v54, %v323
  %325 = vdwg.mxu0
  %v326 = vmax.f32 %v129, %v273
  %v327 = vmax.f32 %v132, %v276
  %v328 = vmax.f32 %v135, %v279
  %v329 = vmax.f32 %v138, %v282
  %v330 = vmax.f32 %v141, %v285
  %v331 = vmax.f32 %v144, %v288
  %v332 = vmax.f32 %v147, %v291
  %v333 = vmax.f32 %v150, %v294
  %v334 = vmax.f32 %v153, %v297
  %v335 = vmax.f32 %v156, %v300
  %v336 = vmax.f32 %v159, %v303
  %v337 = vmax.f32 %v162, %v306
  %v338 = vmax.f32 %v165, %v309
  %v339 = vmax.f32 %v168, %v312
  %v340 = vmax.f32 %v171, %v315
  %v341 = vmax.f32 %v174, %v318
  %v342 = vmax.f32 %v177, %v321
  %v343 = vmax.f32 %v180, %v324
  %s344 = scalar_lea.vmem %s0, 288
  %v345 = vld [vmem:[%s344] sm:$0xff]
  %v346 = vld [vmem:[%s344 + $0x8] sm:$0xff]
  %v347 = vld [vmem:[%s344 + $0x10] sm:$0xff]
  %v348 = vld [vmem:[%s344 + $0x18] sm:$0xff]
  %v349 = vld [vmem:[%s344 + $0x20] sm:$0xff]
  %v350 = vld [vmem:[%s344 + $0x28] sm:$0xff]
  %v351 = vld [vmem:[%s344 + $0x30] sm:$0xff]
  %v352 = vld [vmem:[%s344 + $0x38] sm:$0xff]
  %v353 = vld [vmem:[%s344 + $0x40] sm:$0xff]
  %v354 = vld [vmem:[%s344 + $0x48] sm:$0xff]
  %v355 = vld [vmem:[%s344 + $0x50] sm:$0xff]
  %v356 = vld [vmem:[%s344 + $0x58] sm:$0xff]
  %v357 = vld [vmem:[%s344 + $0x60] sm:$0xff]
  %v358 = vld [vmem:[%s344 + $0x68] sm:$0xff]
  %v359 = vld [vmem:[%s344 + $0x70] sm:$0xff]
  %v360 = vld [vmem:[%s344 + $0x78] sm:$0xff]
  %v361 = vld [vmem:[%s344 + $0x80] sm:$0xff]
  %v362 = vld [vmem:[%s344 + $0x88] sm:$0xff]
  %v364 = vsel %vm56, %v345, 0
  %v367 = vsel %vm56, %v346, 0
  %v370 = vsel %vm56, %v347, 0
  %v373 = vsel %vm56, %v348, 0
  %v376 = vsel %vm56, %v349, 0
  %v379 = vsel %vm56, %v350, 0
  %v382 = vsel %vm56, %v351, 0
  %v385 = vsel %vm56, %v352, 0
  %v388 = vsel %vm56, %v353, 0
  %v391 = vsel %vm56, %v354, 0
  %v394 = vsel %vm56, %v355, 0
  %v397 = vsel %vm56, %v356, 0
  %v400 = vsel %vm56, %v357, 0
  %v403 = vsel %vm56, %v358, 0
  %v406 = vsel %vm56, %v359, 0
  %v409 = vsel %vm56, %v360, 0
  %v412 = vsel %vm56, %v361, 0
  %v415 = vsel %vm56, %v362, 0
  %417 = vmatpush.msra.mxu0 0.0
  %418 = vmatpush.msra.mxu0 0.0
  %419 = vmatpush.msra.mxu0 0.0
  %420 = vmatpush.msra.mxu0 0.0
  %421 = vmatpush.msra.mxu0 0.0
  %422 = vmatpush.msra.mxu0 0.0
  %423 = vmatpush.msra.mxu0 0.0
  %424 = vmatpush.msra.mxu0 0.0
  %425 = vmatpush.msra.mxu0 0.0
  %426 = vmatpush.msra.mxu0 0.0
  %427 = vmatpush.msra.mxu0 0.0
  %428 = vmatpush.msra.mxu0 0.0
  %429 = vmatpush.msra.mxu0 0.0
  %430 = vmatpush.msra.mxu0 0.0
  %431 = vmatpush.msra.mxu0 %v33
  %432 = vmatpush.msra.mxu0 %v32
  %433 = vmatmul.f32.gmra.mxu0 %v364
  %v434 = vpop.f32.mrf.mxu0
  %v435 = vadd.f32 %v54, %v434
  %436 = vmatmul.f32.gmra.mxu0 %v367
  %v437 = vpop.f32.mrf.mxu0
  %v438 = vadd.f32 %v54, %v437
  %439 = vmatmul.f32.gmra.mxu0 %v370
  %v440 = vpop.f32.mrf.mxu0
  %v441 = vadd.f32 %v54, %v440
  %442 = vmatmul.f32.gmra.mxu0 %v373
  %v443 = vpop.f32.mrf.mxu0
  %v444 = vadd.f32 %v54, %v443
  %445 = vmatmul.f32.gmra.mxu0 %v376
  %v446 = vpop.f32.mrf.mxu0
  %v447 = vadd.f32 %v54, %v446
  %448 = vmatmul.f32.gmra.mxu0 %v379
  %v449 = vpop.f32.mrf.mxu0
  %v450 = vadd.f32 %v54, %v449
  %451 = vmatmul.f32.gmra.mxu0 %v382
  %v452 = vpop.f32.mrf.mxu0
  %v453 = vadd.f32 %v54, %v452
  %454 = vmatmul.f32.gmra.mxu0 %v385
  %v455 = vpop.f32.mrf.mxu0
  %v456 = vadd.f32 %v54, %v455
  %457 = vmatmul.f32.gmra.mxu0 %v388
  %v458 = vpop.f32.mrf.mxu0
  %v459 = vadd.f32 %v54, %v458
  %460 = vmatmul.f32.gmra.mxu0 %v391
  %v461 = vpop.f32.mrf.mxu0
  %v462 = vadd.f32 %v54, %v461
  %463 = vmatmul.f32.gmra.mxu0 %v394
  %v464 = vpop.f32.mrf.mxu0
  %v465 = vadd.f32 %v54, %v464
  %466 = vmatmul.f32.gmra.mxu0 %v397
  %v467 = vpop.f32.mrf.mxu0
  %v468 = vadd.f32 %v54, %v467
  %469 = vmatmul.f32.gmra.mxu0 %v400
  %v470 = vpop.f32.mrf.mxu0
  %v471 = vadd.f32 %v54, %v470
  %472 = vmatmul.f32.gmra.mxu0 %v403
  %v473 = vpop.f32.mrf.mxu0
  %v474 = vadd.f32 %v54, %v473
  %475 = vmatmul.f32.gmra.mxu0 %v406
  %v476 = vpop.f32.mrf.mxu0
  %v477 = vadd.f32 %v54, %v476
  %478 = vmatmul.f32.gmra.mxu0 %v409
  %v479 = vpop.f32.mrf.mxu0
  %v480 = vadd.f32 %v54, %v479
  %481 = vmatmul.f32.gmra.mxu0 %v412
  %v482 = vpop.f32.mrf.mxu0
  %v483 = vadd.f32 %v54, %v482
  %484 = vmatmul.f32.gmra.mxu0 %v415
  %v485 = vpop.f32.mrf.mxu0
  %v486 = vadd.f32 %v54, %v485
  %487 = vdwg.mxu0
  %v488 = vmax.f32 %v326, %v435
  %v489 = vmax.f32 %v327, %v438
  %v490 = vmax.f32 %v328, %v441
  %v491 = vmax.f32 %v329, %v444
  %v492 = vmax.f32 %v330, %v447
  %v493 = vmax.f32 %v331, %v450
  %v494 = vmax.f32 %v332, %v453
  %v495 = vmax.f32 %v333, %v456
  %v496 = vmax.f32 %v334, %v459
  %v497 = vmax.f32 %v335, %v462
  %v498 = vmax.f32 %v336, %v465
  %v499 = vmax.f32 %v337, %v468
  %v500 = vmax.f32 %v338, %v471
  %v501 = vmax.f32 %v339, %v474
  %v502 = vmax.f32 %v340, %v477
  %v503 = vmax.f32 %v341, %v480
  %v504 = vmax.f32 %v342, %v483
  %v505 = vmax.f32 %v343, %v486
  %s506 = scalar_lea.vmem %s0, 432
  %v507 = vld [vmem:[%s506] sm:$0xff]
  %v508 = vld [vmem:[%s506 + $0x8] sm:$0xff]
  %v509 = vld [vmem:[%s506 + $0x10] sm:$0xff]
  %v510 = vld [vmem:[%s506 + $0x18] sm:$0xff]
  %v511 = vld [vmem:[%s506 + $0x20] sm:$0xff]
  %v512 = vld [vmem:[%s506 + $0x28] sm:$0xff]
  %v513 = vld [vmem:[%s506 + $0x30] sm:$0xff]
  %v514 = vld [vmem:[%s506 + $0x38] sm:$0xff]
  %v515 = vld [vmem:[%s506 + $0x40] sm:$0xff]
  %v516 = vld [vmem:[%s506 + $0x48] sm:$0xff]
  %v517 = vld [vmem:[%s506 + $0x50] sm:$0xff]
  %v518 = vld [vmem:[%s506 + $0x58] sm:$0xff]
  %v519 = vld [vmem:[%s506 + $0x60] sm:$0xff]
  %v520 = vld [vmem:[%s506 + $0x68] sm:$0xff]
  %v521 = vld [vmem:[%s506 + $0x70] sm:$0xff]
  %v522 = vld [vmem:[%s506 + $0x78] sm:$0xff]
  %v523 = vld [vmem:[%s506 + $0x80] sm:$0xff]
  %v524 = vld [vmem:[%s506 + $0x88] sm:$0xff]
  %v526 = vsel %vm56, %v507, 0
  %v529 = vsel %vm56, %v508, 0
  %v532 = vsel %vm56, %v509, 0
  %v535 = vsel %vm56, %v510, 0
  %v538 = vsel %vm56, %v511, 0
  %v541 = vsel %vm56, %v512, 0
  %v544 = vsel %vm56, %v513, 0
  %v547 = vsel %vm56, %v514, 0
  %v550 = vsel %vm56, %v515, 0
  %v553 = vsel %vm56, %v516, 0
  %v556 = vsel %vm56, %v517, 0
  %v559 = vsel %vm56, %v518, 0
  %v562 = vsel %vm56, %v519, 0
  %v565 = vsel %vm56, %v520, 0
  %v568 = vsel %vm56, %v521, 0
  %v571 = vsel %vm56, %v522, 0
  %v574 = vsel %vm56, %v523, 0
  %v577 = vsel %vm56, %v524, 0
  %579 = vmatpush.msra.mxu0 0.0
  %580 = vmatpush.msra.mxu0 0.0
  %581 = vmatpush.msra.mxu0 0.0
  %582 = vmatpush.msra.mxu0 0.0
  %583 = vmatpush.msra.mxu0 0.0
  %584 = vmatpush.msra.mxu0 0.0
  %585 = vmatpush.msra.mxu0 0.0
  %586 = vmatpush.msra.mxu0 0.0
  %587 = vmatpush.msra.mxu0 0.0
  %588 = vmatpush.msra.mxu0 0.0
  %589 = vmatpush.msra.mxu0 0.0
  %590 = vmatpush.msra.mxu0 0.0
  %591 = vmatpush.msra.mxu0 0.0
  %592 = vmatpush.msra.mxu0 0.0
  %593 = vmatpush.msra.mxu0 %v33
  %594 = vmatpush.msra.mxu0 %v32
  %595 = vmatmul.f32.gmra.mxu0 %v526
  %v596 = vpop.f32.mrf.mxu0
  %v597 = vadd.f32 %v54, %v596
  %598 = vmatmul.f32.gmra.mxu0 %v529
  %v599 = vpop.f32.mrf.mxu0
  %v600 = vadd.f32 %v54, %v599
  %601 = vmatmul.f32.gmra.mxu0 %v532
  %v602 = vpop.f32.mrf.mxu0
  %v603 = vadd.f32 %v54, %v602
  %604 = vmatmul.f32.gmra.mxu0 %v535
  %v605 = vpop.f32.mrf.mxu0
  %v606 = vadd.f32 %v54, %v605
  %607 = vmatmul.f32.gmra.mxu0 %v538
  %v608 = vpop.f32.mrf.mxu0
  %v609 = vadd.f32 %v54, %v608
  %610 = vmatmul.f32.gmra.mxu0 %v541
  %v611 = vpop.f32.mrf.mxu0
  %v612 = vadd.f32 %v54, %v611
  %613 = vmatmul.f32.gmra.mxu0 %v544
  %v614 = vpop.f32.mrf.mxu0
  %v615 = vadd.f32 %v54, %v614
  %616 = vmatmul.f32.gmra.mxu0 %v547
  %v617 = vpop.f32.mrf.mxu0
  %v618 = vadd.f32 %v54, %v617
  %619 = vmatmul.f32.gmra.mxu0 %v550
  %v620 = vpop.f32.mrf.mxu0
  %v621 = vadd.f32 %v54, %v620
  %622 = vmatmul.f32.gmra.mxu0 %v553
  %v623 = vpop.f32.mrf.mxu0
  %v624 = vadd.f32 %v54, %v623
  %625 = vmatmul.f32.gmra.mxu0 %v556
  %v626 = vpop.f32.mrf.mxu0
  %v627 = vadd.f32 %v54, %v626
  %628 = vmatmul.f32.gmra.mxu0 %v559
  %v629 = vpop.f32.mrf.mxu0
  %v630 = vadd.f32 %v54, %v629
  %631 = vmatmul.f32.gmra.mxu0 %v562
  %v632 = vpop.f32.mrf.mxu0
  %v633 = vadd.f32 %v54, %v632
  %634 = vmatmul.f32.gmra.mxu0 %v565
  %v635 = vpop.f32.mrf.mxu0
  %v636 = vadd.f32 %v54, %v635
  %637 = vmatmul.f32.gmra.mxu0 %v568
  %v638 = vpop.f32.mrf.mxu0
  %v639 = vadd.f32 %v54, %v638
  %640 = vmatmul.f32.gmra.mxu0 %v571
  %v641 = vpop.f32.mrf.mxu0
  %v642 = vadd.f32 %v54, %v641
  %643 = vmatmul.f32.gmra.mxu0 %v574
  %v644 = vpop.f32.mrf.mxu0
  %v645 = vadd.f32 %v54, %v644
  %646 = vmatmul.f32.gmra.mxu0 %v577
  %v647 = vpop.f32.mrf.mxu0
  %v648 = vadd.f32 %v54, %v647
  %649 = vdwg.mxu0
  %v650 = vmax.f32 %v488, %v597
  %v651 = vmax.f32 %v489, %v600
  %v652 = vmax.f32 %v490, %v603
  %v653 = vmax.f32 %v491, %v606
  %v654 = vmax.f32 %v492, %v609
  %v655 = vmax.f32 %v493, %v612
  %v656 = vmax.f32 %v494, %v615
  %v657 = vmax.f32 %v495, %v618
  %v658 = vmax.f32 %v496, %v621
  %v659 = vmax.f32 %v497, %v624
  %v660 = vmax.f32 %v498, %v627
  %v661 = vmax.f32 %v499, %v630
  %v662 = vmax.f32 %v500, %v633
  %v663 = vmax.f32 %v501, %v636
  %v664 = vmax.f32 %v502, %v639
  %v665 = vmax.f32 %v503, %v642
  %v666 = vmax.f32 %v504, %v645
  %v667 = vmax.f32 %v505, %v648
  %v668 = vmax.f32 %v650, 0.0
  %v669 = vmax.f32 %v651, 0.0
  %v670 = vmax.f32 %v652, 0.0
  %v671 = vmax.f32 %v653, 0.0
  %v672 = vmax.f32 %v654, 0.0
  %v673 = vmax.f32 %v655, 0.0
  %v674 = vmax.f32 %v656, 0.0
  %v675 = vmax.f32 %v657, 0.0
  %v676 = vmax.f32 %v658, 0.0
  %v677 = vmax.f32 %v659, 0.0
  %v678 = vmax.f32 %v660, 0.0
  %v679 = vmax.f32 %v661, 0.0
  %v680 = vmax.f32 %v662, 0.0
  %v681 = vmax.f32 %v663, 0.0
  %v682 = vmax.f32 %v664, 0.0
  %v683 = vmax.f32 %v665, 0.0
  %v684 = vmax.f32 %v666, 0.0
  %v685 = vmax.f32 %v667, 0.0
  %vm686 = vcmask 523264
  %687 = vst.msk [vmem:[#allocation2] sm:$0xff] %vm686, %v668
  %688 = vst.msk [vmem:[#allocation2 + $0x8] sm:$0xff] %vm686, %v669
  %689 = vst.msk [vmem:[#allocation2 + $0x10] sm:$0xff] %vm686, %v670
  %690 = vst.msk [vmem:[#allocation2 + $0x18] sm:$0xff] %vm686, %v671
  %691 = vst.msk [vmem:[#allocation2 + $0x20] sm:$0xff] %vm686, %v672
  %692 = vst.msk [vmem:[#allocation2 + $0x28] sm:$0xff] %vm686, %v673
  %693 = vst.msk [vmem:[#allocation2 + $0x30] sm:$0xff] %vm686, %v674
  %694 = vst.msk [vmem:[#allocation2 + $0x38] sm:$0xff] %vm686, %v675
  %695 = vst.msk [vmem:[#allocation2 + $0x40] sm:$0xff] %vm686, %v676
  %696 = vst.msk [vmem:[#allocation2 + $0x48] sm:$0xff] %vm686, %v677
  %697 = vst.msk [vmem:[#allocation2 + $0x50] sm:$0xff] %vm686, %v678
  %698 = vst.msk [vmem:[#allocation2 + $0x58] sm:$0xff] %vm686, %v679
  %699 = vst.msk [vmem:[#allocation2 + $0x60] sm:$0xff] %vm686, %v680
  %700 = vst.msk [vmem:[#allocation2 + $0x68] sm:$0xff] %vm686, %v681
  %701 = vst.msk [vmem:[#allocation2 + $0x70] sm:$0xff] %vm686, %v682
  %702 = vst.msk [vmem:[#allocation2 + $0x78] sm:$0xff] %vm686, %v683
  %703 = vst.msk [vmem:[#allocation2 + $0x80] sm:$0xff] %vm686, %v684
  %704 = vst.msk [vmem:[#allocation2 + $0x88] sm:$0xff] %vm686, %v685
  %705 = vst.msk [vmem:[#allocation2 + $0x90] sm:$0xff] %vm686, 0.0
  %706 = vst.msk [vmem:[#allocation2 + $0x98] sm:$0xff] %vm686, 0.0
  %v707 = vld [vmem:[#allocation2] sm:$0xff]
  %v708 = vld [vmem:[#allocation2 + $0x8] sm:$0xff]
  %v709 = vld [vmem:[#allocation2 + $0x10] sm:$0xff]
  %v710 = vld [vmem:[#allocation2 + $0x18] sm:$0xff]
  %v711 = vld [vmem:[#allocation2 + $0x20] sm:$0xff]
  %v712 = vld [vmem:[#allocation2 + $0x28] sm:$0xff]
  %v713 = vld [vmem:[#allocation2 + $0x30] sm:$0xff]
  %v714 = vld [vmem:[#allocation2 + $0x38] sm:$0xff]
  %v715 = vld [vmem:[#allocation2 + $0x40] sm:$0xff]
  %v716 = vld [vmem:[#allocation2 + $0x48] sm:$0xff]
  %v717 = vld [vmem:[#allocation2 + $0x50] sm:$0xff]
  %v718 = vld [vmem:[#allocation2 + $0x58] sm:$0xff]
  %v719 = vld [vmem:[#allocation2 + $0x60] sm:$0xff]
  %v720 = vld [vmem:[#allocation2 + $0x68] sm:$0xff]
  %v721 = vld [vmem:[#allocation2 + $0x70] sm:$0xff]
  %v722 = vld [vmem:[#allocation2 + $0x78] sm:$0xff]
  %v723 = vld [vmem:[#allocation2 + $0x80] sm:$0xff]
  %v724 = vld [vmem:[#allocation2 + $0x88] sm:$0xff]
  %v725 = vld [vmem:[%s3] sm:$0xff]
  %v726 = vld [vmem:[%s3 + $0x8] sm:$0xff]
  %v727 = vld [vmem:[%s3 + $0x10] sm:$0xff]
  %v728 = vld [vmem:[%s3 + $0x18] sm:$0xff]
  %v729 = vld [vmem:[%s3 + $0x20] sm:$0xff]
  %v730 = vld [vmem:[%s3 + $0x28] sm:$0xff]
  %v731 = vld [vmem:[%s3 + $0x30] sm:$0xff]
  %v732 = vld [vmem:[%s3 + $0x38] sm:$0xff]
  %v733 = vld [vmem:[#allocation2 + $0x1] sm:$0xff]
  %v734 = vld [vmem:[#allocation2 + $0x9] sm:$0xff]
  %v735 = vld [vmem:[#allocation2 + $0x11] sm:$0xff]
  %v736 = vld [vmem:[#allocation2 + $0x19] sm:$0xff]
  %v737 = vld [vmem:[#allocation2 + $0x21] sm:$0xff]
  %v738 = vld [vmem:[#allocation2 + $0x29] sm:$0xff]
  %v739 = vld [vmem:[#allocation2 + $0x31] sm:$0xff]
  %v740 = vld [vmem:[#allocation2 + $0x39] sm:$0xff]
  %v741 = vld [vmem:[#allocation2 + $0x41] sm:$0xff]
  %v742 = vld [vmem:[#allocation2 + $0x49] sm:$0xff]
  %v743 = vld [vmem:[#allocation2 + $0x51] sm:$0xff]
  %v744 = vld [vmem:[#allocation2 + $0x59] sm:$0xff]
  %v745 = vld [vmem:[#allocation2 + $0x61] sm:$0xff]
  %v746 = vld [vmem:[#allocation2 + $0x69] sm:$0xff]
  %v747 = vld [vmem:[#allocation2 + $0x71] sm:$0xff]
  %v748 = vld [vmem:[#allocation2 + $0x79] sm:$0xff]
  %v749 = vld [vmem:[#allocation2 + $0x81] sm:$0xff]
  %v750 = vld [vmem:[#allocation2 + $0x89] sm:$0xff]
  %v751 = vld [vmem:[%s3 + $0x40] sm:$0xff]
  %v752 = vld [vmem:[%s3 + $0x48] sm:$0xff]
  %v753 = vld [vmem:[%s3 + $0x50] sm:$0xff]
  %v754 = vld [vmem:[%s3 + $0x58] sm:$0xff]
  %v755 = vld [vmem:[%s3 + $0x60] sm:$0xff]
  %v756 = vld [vmem:[%s3 + $0x68] sm:$0xff]
  %v757 = vld [vmem:[%s3 + $0x70] sm:$0xff]
  %v758 = vld [vmem:[%s3 + $0x78] sm:$0xff]
  %v760 = vsel %vm686, %v733, 0
  %v763 = vsel %vm686, %v734, 0
  %v766 = vsel %vm686, %v735, 0
  %v769 = vsel %vm686, %v736, 0
  %v772 = vsel %vm686, %v737, 0
  %v775 = vsel %vm686, %v738, 0
  %v778 = vsel %vm686, %v739, 0
  %v781 = vsel %vm686, %v740, 0
  %v784 = vsel %vm686, %v741, 0
  %v787 = vsel %vm686, %v742, 0
  %v790 = vsel %vm686, %v743, 0
  %v793 = vsel %vm686, %v744, 0
  %v796 = vsel %vm686, %v745, 0
  %v799 = vsel %vm686, %v746, 0
  %v802 = vsel %vm686, %v747, 0
  %v805 = vsel %vm686, %v748, 0
  %v808 = vsel %vm686, %v749, 0
  %v811 = vsel %vm686, %v750, 0
  %813 = vmatpush.msra.mxu0 0.0
  %814 = vmatpush.msra.mxu0 0.0
  %815 = vmatpush.msra.mxu0 0.0
  %816 = vmatpush.msra.mxu0 0.0
  %817 = vmatpush.msra.mxu0 0.0
  %818 = vmatpush.msra.mxu0 0.0
  %819 = vmatpush.msra.mxu0 0.0
  %820 = vmatpush.msra.mxu0 0.0
  %821 = vmatpush.msra.mxu0 %v758
  %822 = vmatpush.msra.mxu0 %v757
  %823 = vmatpush.msra.mxu0 %v756
  %824 = vmatpush.msra.mxu0 %v755
  %825 = vmatpush.msra.mxu0 %v754
  %826 = vmatpush.msra.mxu0 %v753
  %827 = vmatpush.msra.mxu0 %v752
  %828 = vmatpush.msra.mxu0 %v751
  %829 = vmatmul.f32.gmra.mxu0 %v760
  %v830 = vpop.f32.mrf.mxu0
  %v831 = vadd.f32 0.0, %v830
  %832 = vmatmul.f32.gmra.mxu0 %v763
  %v833 = vpop.f32.mrf.mxu0
  %v834 = vadd.f32 0.0, %v833
  %835 = vmatmul.f32.gmra.mxu0 %v766
  %v836 = vpop.f32.mrf.mxu0
  %v837 = vadd.f32 0.0, %v836
  %838 = vmatmul.f32.gmra.mxu0 %v769
  %v839 = vpop.f32.mrf.mxu0
  %v840 = vadd.f32 0.0, %v839
  %841 = vmatmul.f32.gmra.mxu0 %v772
  %v842 = vpop.f32.mrf.mxu0
  %v843 = vadd.f32 0.0, %v842
  %844 = vmatmul.f32.gmra.mxu0 %v775
  %v845 = vpop.f32.mrf.mxu0
  %v846 = vadd.f32 0.0, %v845
  %847 = vmatmul.f32.gmra.mxu0 %v778
  %v848 = vpop.f32.mrf.mxu0
  %v849 = vadd.f32 0.0, %v848
  %850 = vmatmul.f32.gmra.mxu0 %v781
  %v851 = vpop.f32.mrf.mxu0
  %v852 = vadd.f32 0.0, %v851
  %853 = vmatmul.f32.gmra.mxu0 %v784
  %v854 = vpop.f32.mrf.mxu0
  %v855 = vadd.f32 0.0, %v854
  %856 = vmatmul.f32.gmra.mxu0 %v787
  %v857 = vpop.f32.mrf.mxu0
  %v858 = vadd.f32 0.0, %v857
  %859 = vmatmul.f32.gmra.mxu0 %v790
  %v860 = vpop.f32.mrf.mxu0
  %v861 = vadd.f32 0.0, %v860
  %862 = vmatmul.f32.gmra.mxu0 %v793
  %v863 = vpop.f32.mrf.mxu0
  %v864 = vadd.f32 0.0, %v863
  %865 = vmatmul.f32.gmra.mxu0 %v796
  %v866 = vpop.f32.mrf.mxu0
  %v867 = vadd.f32 0.0, %v866
  %868 = vmatmul.f32.gmra.mxu0 %v799
  %v869 = vpop.f32.mrf.mxu0
  %v870 = vadd.f32 0.0, %v869
  %871 = vmatmul.f32.gmra.mxu0 %v802
  %v872 = vpop.f32.mrf.mxu0
  %v873 = vadd.f32 0.0, %v872
  %874 = vmatmul.f32.gmra.mxu0 %v805
  %v875 = vpop.f32.mrf.mxu0
  %v876 = vadd.f32 0.0, %v875
  %877 = vmatmul.f32.gmra.mxu0 %v808
  %v878 = vpop.f32.mrf.mxu0
  %v879 = vadd.f32 0.0, %v878
  %880 = vmatmul.f32.gmra.mxu0 %v811
  %v881 = vpop.f32.mrf.mxu0
  %v882 = vadd.f32 0.0, %v881
  %883 = vdwg.mxu0
  %v885 = vsel %vm686, %v707, 0
  %v888 = vsel %vm686, %v708, 0
  %v891 = vsel %vm686, %v709, 0
  %v894 = vsel %vm686, %v710, 0
  %v897 = vsel %vm686, %v711, 0
  %v900 = vsel %vm686, %v712, 0
  %v903 = vsel %vm686, %v713, 0
  %v906 = vsel %vm686, %v714, 0
  %v909 = vsel %vm686, %v715, 0
  %v912 = vsel %vm686, %v716, 0
  %v915 = vsel %vm686, %v717, 0
  %v918 = vsel %vm686, %v718, 0
  %v921 = vsel %vm686, %v719, 0
  %v924 = vsel %vm686, %v720, 0
  %v927 = vsel %vm686, %v721, 0
  %v930 = vsel %vm686, %v722, 0
  %v933 = vsel %vm686, %v723, 0
  %v936 = vsel %vm686, %v724, 0
  %938 = vmatpush.msra.mxu0 0.0
  %939 = vmatpush.msra.mxu0 0.0
  %940 = vmatpush.msra.mxu0 0.0
  %941 = vmatpush.msra.mxu0 0.0
  %942 = vmatpush.msra.mxu0 0.0
  %943 = vmatpush.msra.mxu0 0.0
  %944 = vmatpush.msra.mxu0 0.0
  %945 = vmatpush.msra.mxu0 0.0
  %946 = vmatpush.msra.mxu0 %v732
  %947 = vmatpush.msra.mxu0 %v731
  %948 = vmatpush.msra.mxu0 %v730
  %949 = vmatpush.msra.mxu0 %v729
  %950 = vmatpush.msra.mxu0 %v728
  %951 = vmatpush.msra.mxu0 %v727
  %952 = vmatpush.msra.mxu0 %v726
  %953 = vmatpush.msra.mxu0 %v725
  %954 = vmatmul.f32.gmra.mxu0 %v885
  %v955 = vpop.f32.mrf.mxu0
  %v956 = vadd.f32 %v831, %v955
  %957 = vmatmul.f32.gmra.mxu0 %v888
  %v958 = vpop.f32.mrf.mxu0
  %v959 = vadd.f32 %v834, %v958
  %960 = vmatmul.f32.gmra.mxu0 %v891
  %v961 = vpop.f32.mrf.mxu0
  %v962 = vadd.f32 %v837, %v961
  %963 = vmatmul.f32.gmra.mxu0 %v894
  %v964 = vpop.f32.mrf.mxu0
  %v965 = vadd.f32 %v840, %v964
  %966 = vmatmul.f32.gmra.mxu0 %v897
  %v967 = vpop.f32.mrf.mxu0
  %v968 = vadd.f32 %v843, %v967
  %969 = vmatmul.f32.gmra.mxu0 %v900
  %v970 = vpop.f32.mrf.mxu0
  %v971 = vadd.f32 %v846, %v970
  %972 = vmatmul.f32.gmra.mxu0 %v903
  %v973 = vpop.f32.mrf.mxu0
  %v974 = vadd.f32 %v849, %v973
  %975 = vmatmul.f32.gmra.mxu0 %v906
  %v976 = vpop.f32.mrf.mxu0
  %v977 = vadd.f32 %v852, %v976
  %978 = vmatmul.f32.gmra.mxu0 %v909
  %v979 = vpop.f32.mrf.mxu0
  %v980 = vadd.f32 %v855, %v979
  %981 = vmatmul.f32.gmra.mxu0 %v912
  %v982 = vpop.f32.mrf.mxu0
  %v983 = vadd.f32 %v858, %v982
  %984 = vmatmul.f32.gmra.mxu0 %v915
  %v985 = vpop.f32.mrf.mxu0
  %v986 = vadd.f32 %v861, %v985
  %987 = vmatmul.f32.gmra.mxu0 %v918
  %v988 = vpop.f32.mrf.mxu0
  %v989 = vadd.f32 %v864, %v988
  %990 = vmatmul.f32.gmra.mxu0 %v921
  %v991 = vpop.f32.mrf.mxu0
  %v992 = vadd.f32 %v867, %v991
  %993 = vmatmul.f32.gmra.mxu0 %v924
  %v994 = vpop.f32.mrf.mxu0
  %v995 = vadd.f32 %v870, %v994
  %996 = vmatmul.f32.gmra.mxu0 %v927
  %v997 = vpop.f32.mrf.mxu0
  %v998 = vadd.f32 %v873, %v997
  %999 = vmatmul.f32.gmra.mxu0 %v930
  %v1000 = vpop.f32.mrf.mxu0
  %v1001 = vadd.f32 %v876, %v1000
  %1002 = vmatmul.f32.gmra.mxu0 %v933
  %v1003 = vpop.f32.mrf.mxu0
  %v1004 = vadd.f32 %v879, %v1003
  %1005 = vmatmul.f32.gmra.mxu0 %v936
  %v1006 = vpop.f32.mrf.mxu0
  %v1007 = vadd.f32 %v882, %v1006
  %1008 = vdwg.mxu0
  %v1009 = vld [vmem:[#allocation2 + $0x2] sm:$0xff]
  %v1010 = vld [vmem:[#allocation2 + $0xa] sm:$0xff]
  %v1011 = vld [vmem:[#allocation2 + $0x12] sm:$0xff]
  %v1012 = vld [vmem:[#allocation2 + $0x1a] sm:$0xff]
  %v1013 = vld [vmem:[#allocation2 + $0x22] sm:$0xff]
  %v1014 = vld [vmem:[#allocation2 + $0x2a] sm:$0xff]
  %v1015 = vld [vmem:[#allocation2 + $0x32] sm:$0xff]
  %v1016 = vld [vmem:[#allocation2 + $0x3a] sm:$0xff]
  %v1017 = vld [vmem:[#allocation2 + $0x42] sm:$0xff]
  %v1018 = vld [vmem:[#allocation2 + $0x4a] sm:$0xff]
  %v1019 = vld [vmem:[#allocation2 + $0x52] sm:$0xff]
  %v1020 = vld [vmem:[#allocation2 + $0x5a] sm:$0xff]
  %v1021 = vld [vmem:[#allocation2 + $0x62] sm:$0xff]
  %v1022 = vld [vmem:[#allocation2 + $0x6a] sm:$0xff]
  %v1023 = vld [vmem:[#allocation2 + $0x72] sm:$0xff]
  %v1024 = vld [vmem:[#allocation2 + $0x7a] sm:$0xff]
  %v1025 = vld [vmem:[#allocation2 + $0x82] sm:$0xff]
  %v1026 = vld [vmem:[#allocation2 + $0x8a] sm:$0xff]
  %v1027 = vld [vmem:[%s3 + $0x80] sm:$0xff]
  %v1028 = vld [vmem:[%s3 + $0x88] sm:$0xff]
  %v1029 = vld [vmem:[%s3 + $0x90] sm:$0xff]
  %v1030 = vld [vmem:[%s3 + $0x98] sm:$0xff]
  %v1031 = vld [vmem:[%s3 + $0xa0] sm:$0xff]
  %v1032 = vld [vmem:[%s3 + $0xa8] sm:$0xff]
  %v1033 = vld [vmem:[%s3 + $0xb0] sm:$0xff]
  %v1034 = vld [vmem:[%s3 + $0xb8] sm:$0xff]
  %v1036 = vsel %vm686, %v1009, 0
  %v1039 = vsel %vm686, %v1010, 0
  %v1042 = vsel %vm686, %v1011, 0
  %v1045 = vsel %vm686, %v1012, 0
  %v1048 = vsel %vm686, %v1013, 0
  %v1051 = vsel %vm686, %v1014, 0
  %v1054 = vsel %vm686, %v1015, 0
  %v1057 = vsel %vm686, %v1016, 0
  %v1060 = vsel %vm686, %v1017, 0
  %v1063 = vsel %vm686, %v1018, 0
  %v1066 = vsel %vm686, %v1019, 0
  %v1069 = vsel %vm686, %v1020, 0
  %v1072 = vsel %vm686, %v1021, 0
  %v1075 = vsel %vm686, %v1022, 0
  %v1078 = vsel %vm686, %v1023, 0
  %v1081 = vsel %vm686, %v1024, 0
  %v1084 = vsel %vm686, %v1025, 0
  %v1087 = vsel %vm686, %v1026, 0
  %1089 = vmatpush.msra.mxu0 0.0
  %1090 = vmatpush.msra.mxu0 0.0
  %1091 = vmatpush.msra.mxu0 0.0
  %1092 = vmatpush.msra.mxu0 0.0
  %1093 = vmatpush.msra.mxu0 0.0
  %1094 = vmatpush.msra.mxu0 0.0
  %1095 = vmatpush.msra.mxu0 0.0
  %1096 = vmatpush.msra.mxu0 0.0
  %1097 = vmatpush.msra.mxu0 %v1034
  %1098 = vmatpush.msra.mxu0 %v1033
  %1099 = vmatpush.msra.mxu0 %v1032
  %1100 = vmatpush.msra.mxu0 %v1031
  %1101 = vmatpush.msra.mxu0 %v1030
  %1102 = vmatpush.msra.mxu0 %v1029
  %1103 = vmatpush.msra.mxu0 %v1028
  %1104 = vmatpush.msra.mxu0 %v1027
  %1105 = vmatmul.f32.gmra.mxu0 %v1036
  %v1106 = vpop.f32.mrf.mxu0
  %v1107 = vadd.f32 0.0, %v1106
  %1108 = vmatmul.f32.gmra.mxu0 %v1039
  %v1109 = vpop.f32.mrf.mxu0
  %v1110 = vadd.f32 0.0, %v1109
  %1111 = vmatmul.f32.gmra.mxu0 %v1042
  %v1112 = vpop.f32.mrf.mxu0
  %v1113 = vadd.f32 0.0, %v1112
  %1114 = vmatmul.f32.gmra.mxu0 %v1045
  %v1115 = vpop.f32.mrf.mxu0
  %v1116 = vadd.f32 0.0, %v1115
  %1117 = vmatmul.f32.gmra.mxu0 %v1048
  %v1118 = vpop.f32.mrf.mxu0
  %v1119 = vadd.f32 0.0, %v1118
  %1120 = vmatmul.f32.gmra.mxu0 %v1051
  %v1121 = vpop.f32.mrf.mxu0
  %v1122 = vadd.f32 0.0, %v1121
  %1123 = vmatmul.f32.gmra.mxu0 %v1054
  %v1124 = vpop.f32.mrf.mxu0
  %v1125 = vadd.f32 0.0, %v1124
  %1126 = vmatmul.f32.gmra.mxu0 %v1057
  %v1127 = vpop.f32.mrf.mxu0
  %v1128 = vadd.f32 0.0, %v1127
  %1129 = vmatmul.f32.gmra.mxu0 %v1060
  %v1130 = vpop.f32.mrf.mxu0
  %v1131 = vadd.f32 0.0, %v1130
  %1132 = vmatmul.f32.gmra.mxu0 %v1063
  %v1133 = vpop.f32.mrf.mxu0
  %v1134 = vadd.f32 0.0, %v1133
  %1135 = vmatmul.f32.gmra.mxu0 %v1066
  %v1136 = vpop.f32.mrf.mxu0
  %v1137 = vadd.f32 0.0, %v1136
  %1138 = vmatmul.f32.gmra.mxu0 %v1069
  %v1139 = vpop.f32.mrf.mxu0
  %v1140 = vadd.f32 0.0, %v1139
  %1141 = vmatmul.f32.gmra.mxu0 %v1072
  %v1142 = vpop.f32.mrf.mxu0
  %v1143 = vadd.f32 0.0, %v1142
  %1144 = vmatmul.f32.gmra.mxu0 %v1075
  %v1145 = vpop.f32.mrf.mxu0
  %v1146 = vadd.f32 0.0, %v1145
  %1147 = vmatmul.f32.gmra.mxu0 %v1078
  %v1148 = vpop.f32.mrf.mxu0
  %v1149 = vadd.f32 0.0, %v1148
  %1150 = vmatmul.f32.gmra.mxu0 %v1081
  %v1151 = vpop.f32.mrf.mxu0
  %v1152 = vadd.f32 0.0, %v1151
  %1153 = vmatmul.f32.gmra.mxu0 %v1084
  %v1154 = vpop.f32.mrf.mxu0
  %v1155 = vadd.f32 0.0, %v1154
  %1156 = vmatmul.f32.gmra.mxu0 %v1087
  %v1157 = vpop.f32.mrf.mxu0
  %v1158 = vadd.f32 0.0, %v1157
  %1159 = vdwg.mxu0
  %v1160 = vadd.f32 %v956, %v1107
  %v1161 = vadd.f32 %v959, %v1110
  %v1162 = vadd.f32 %v962, %v1113
  %v1163 = vadd.f32 %v965, %v1116
  %v1164 = vadd.f32 %v968, %v1119
  %v1165 = vadd.f32 %v971, %v1122
  %v1166 = vadd.f32 %v974, %v1125
  %v1167 = vadd.f32 %v977, %v1128
  %v1168 = vadd.f32 %v980, %v1131
  %v1169 = vadd.f32 %v983, %v1134
  %v1170 = vadd.f32 %v986, %v1137
  %v1171 = vadd.f32 %v989, %v1140
  %v1172 = vadd.f32 %v992, %v1143
  %v1173 = vadd.f32 %v995, %v1146
  %v1174 = vadd.f32 %v998, %v1149
  %v1175 = vadd.f32 %v1001, %v1152
  %v1176 = vadd.f32 %v1004, %v1155
  %v1177 = vadd.f32 %v1007, %v1158
  %v1178 = vld [vmem:[#allocation2 + $0x6] sm:$0xff]
  %v1179 = vld [vmem:[#allocation2 + $0xe] sm:$0xff]
  %v1180 = vld [vmem:[#allocation2 + $0x16] sm:$0xff]
  %v1181 = vld [vmem:[#allocation2 + $0x1e] sm:$0xff]
  %v1182 = vld [vmem:[#allocation2 + $0x26] sm:$0xff]
  %v1183 = vld [vmem:[#allocation2 + $0x2e] sm:$0xff]
  %v1184 = vld [vmem:[#allocation2 + $0x36] sm:$0xff]
  %v1185 = vld [vmem:[#allocation2 + $0x3e] sm:$0xff]
  %v1186 = vld [vmem:[#allocation2 + $0x46] sm:$0xff]
  %v1187 = vld [vmem:[#allocation2 + $0x4e] sm:$0xff]
  %v1188 = vld [vmem:[#allocation2 + $0x56] sm:$0xff]
  %v1189 = vld [vmem:[#allocation2 + $0x5e] sm:$0xff]
  %v1190 = vld [vmem:[#allocation2 + $0x66] sm:$0xff]
  %v1191 = vld [vmem:[#allocation2 + $0x6e] sm:$0xff]
  %v1192 = vld [vmem:[#allocation2 + $0x76] sm:$0xff]
  %v1193 = vld [vmem:[#allocation2 + $0x7e] sm:$0xff]
  %v1194 = vld [vmem:[#allocation2 + $0x86] sm:$0xff]
  %v1195 = vld [vmem:[#allocation2 + $0x8e] sm:$0xff]
  %v1196 = vld [vmem:[%s3 + $0xc0] sm:$0xff]
  %v1197 = vld [vmem:[%s3 + $0xc8] sm:$0xff]
  %v1198 = vld [vmem:[%s3 + $0xd0] sm:$0xff]
  %v1199 = vld [vmem:[%s3 + $0xd8] sm:$0xff]
  %v1200 = vld [vmem:[%s3 + $0xe0] sm:$0xff]
  %v1201 = vld [vmem:[%s3 + $0xe8] sm:$0xff]
  %v1202 = vld [vmem:[%s3 + $0xf0] sm:$0xff]
  %v1203 = vld [vmem:[%s3 + $0xf8] sm:$0xff]
  %v1205 = vsel %vm686, %v1178, 0
  %v1208 = vsel %vm686, %v1179, 0
  %v1211 = vsel %vm686, %v1180, 0
  %v1214 = vsel %vm686, %v1181, 0
  %v1217 = vsel %vm686, %v1182, 0
  %v1220 = vsel %vm686, %v1183, 0
  %v1223 = vsel %vm686, %v1184, 0
  %v1226 = vsel %vm686, %v1185, 0
  %v1229 = vsel %vm686, %v1186, 0
  %v1232 = vsel %vm686, %v1187, 0
  %v1235 = vsel %vm686, %v1188, 0
  %v1238 = vsel %vm686, %v1189, 0
  %v1241 = vsel %vm686, %v1190, 0
  %v1244 = vsel %vm686, %v1191, 0
  %v1247 = vsel %vm686, %v1192, 0
  %v1250 = vsel %vm686, %v1193, 0
  %v1253 = vsel %vm686, %v1194, 0
  %v1256 = vsel %vm686, %v1195, 0
  %1258 = vmatpush.msra.mxu0 0.0
  %1259 = vmatpush.msra.mxu0 0.0
  %1260 = vmatpush.msra.mxu0 0.0
  %1261 = vmatpush.msra.mxu0 0.0
  %1262 = vmatpush.msra.mxu0 0.0
  %1263 = vmatpush.msra.mxu0 0.0
  %1264 = vmatpush.msra.mxu0 0.0
  %1265 = vmatpush.msra.mxu0 0.0
  %1266 = vmatpush.msra.mxu0 %v1203
  %1267 = vmatpush.msra.mxu0 %v1202
  %1268 = vmatpush.msra.mxu0 %v1201
  %1269 = vmatpush.msra.mxu0 %v1200
  %1270 = vmatpush.msra.mxu0 %v1199
  %1271 = vmatpush.msra.mxu0 %v1198
  %1272 = vmatpush.msra.mxu0 %v1197
  %1273 = vmatpush.msra.mxu0 %v1196
  %1274 = vmatmul.f32.gmra.mxu0 %v1205
  %v1275 = vpop.f32.mrf.mxu0
  %v1276 = vadd.f32 0.0, %v1275
  %1277 = vmatmul.f32.gmra.mxu0 %v1208
  %v1278 = vpop.f32.mrf.mxu0
  %v1279 = vadd.f32 0.0, %v1278
  %1280 = vmatmul.f32.gmra.mxu0 %v1211
  %v1281 = vpop.f32.mrf.mxu0
  %v1282 = vadd.f32 0.0, %v1281
  %1283 = vmatmul.f32.gmra.mxu0 %v1214
  %v1284 = vpop.f32.mrf.mxu0
  %v1285 = vadd.f32 0.0, %v1284
  %1286 = vmatmul.f32.gmra.mxu0 %v1217
  %v1287 = vpop.f32.mrf.mxu0
  %v1288 = vadd.f32 0.0, %v1287
  %1289 = vmatmul.f32.gmra.mxu0 %v1220
  %v1290 = vpop.f32.mrf.mxu0
  %v1291 = vadd.f32 0.0, %v1290
  %1292 = vmatmul.f32.gmra.mxu0 %v1223
  %v1293 = vpop.f32.mrf.mxu0
  %v1294 = vadd.f32 0.0, %v1293
  %1295 = vmatmul.f32.gmra.mxu0 %v1226
  %v1296 = vpop.f32.mrf.mxu0
  %v1297 = vadd.f32 0.0, %v1296
  %1298 = vmatmul.f32.gmra.mxu0 %v1229
  %v1299 = vpop.f32.mrf.mxu0
  %v1300 = vadd.f32 0.0, %v1299
  %1301 = vmatmul.f32.gmra.mxu0 %v1232
  %v1302 = vpop.f32.mrf.mxu0
  %v1303 = vadd.f32 0.0, %v1302
  %1304 = vmatmul.f32.gmra.mxu0 %v1235
  %v1305 = vpop.f32.mrf.mxu0
  %v1306 = vadd.f32 0.0, %v1305
  %1307 = vmatmul.f32.gmra.mxu0 %v1238
  %v1308 = vpop.f32.mrf.mxu0
  %v1309 = vadd.f32 0.0, %v1308
  %1310 = vmatmul.f32.gmra.mxu0 %v1241
  %v1311 = vpop.f32.mrf.mxu0
  %v1312 = vadd.f32 0.0, %v1311
  %1313 = vmatmul.f32.gmra.mxu0 %v1244
  %v1314 = vpop.f32.mrf.mxu0
  %v1315 = vadd.f32 0.0, %v1314
  %1316 = vmatmul.f32.gmra.mxu0 %v1247
  %v1317 = vpop.f32.mrf.mxu0
  %v1318 = vadd.f32 0.0, %v1317
  %1319 = vmatmul.f32.gmra.mxu0 %v1250
  %v1320 = vpop.f32.mrf.mxu0
  %v1321 = vadd.f32 0.0, %v1320
  %1322 = vmatmul.f32.gmra.mxu0 %v1253
  %v1323 = vpop.f32.mrf.mxu0
  %v1324 = vadd.f32 0.0, %v1323
  %1325 = vmatmul.f32.gmra.mxu0 %v1256
  %v1326 = vpop.f32.mrf.mxu0
  %v1327 = vadd.f32 0.0, %v1326
  %1328 = vdwg.mxu0
  %v1329 = vadd.f32 %v1160, %v1276
  %v1330 = vadd.f32 %v1161, %v1279
  %v1331 = vadd.f32 %v1162, %v1282
  %v1332 = vadd.f32 %v1163, %v1285
  %v1333 = vadd.f32 %v1164, %v1288
  %v1334 = vadd.f32 %v1165, %v1291
  %v1335 = vadd.f32 %v1166, %v1294
  %v1336 = vadd.f32 %v1167, %v1297
  %v1337 = vadd.f32 %v1168, %v1300
  %v1338 = vadd.f32 %v1169, %v1303
  %v1339 = vadd.f32 %v1170, %v1306
  %v1340 = vadd.f32 %v1171, %v1309
  %v1341 = vadd.f32 %v1172, %v1312
  %v1342 = vadd.f32 %v1173, %v1315
  %v1343 = vadd.f32 %v1174, %v1318
  %v1344 = vadd.f32 %v1175, %v1321
  %v1345 = vadd.f32 %v1176, %v1324
  %v1346 = vadd.f32 %v1177, %v1327
  %v1347 = vld [vmem:[#allocation2 + $0x7] sm:$0xff]
  %v1348 = vld [vmem:[#allocation2 + $0xf] sm:$0xff]
  %v1349 = vld [vmem:[#allocation2 + $0x17] sm:$0xff]
  %v1350 = vld [vmem:[#allocation2 + $0x1f] sm:$0xff]
  %v1351 = vld [vmem:[#allocation2 + $0x27] sm:$0xff]
  %v1352 = vld [vmem:[#allocation2 + $0x2f] sm:$0xff]
  %v1353 = vld [vmem:[#allocation2 + $0x37] sm:$0xff]
  %v1354 = vld [vmem:[#allocation2 + $0x3f] sm:$0xff]
  %v1355 = vld [vmem:[#allocation2 + $0x47] sm:$0xff]
  %v1356 = vld [vmem:[#allocation2 + $0x4f] sm:$0xff]
  %v1357 = vld [vmem:[#allocation2 + $0x57] sm:$0xff]
  %v1358 = vld [vmem:[#allocation2 + $0x5f] sm:$0xff]
  %v1359 = vld [vmem:[#allocation2 + $0x67] sm:$0xff]
  %v1360 = vld [vmem:[#allocation2 + $0x6f] sm:$0xff]
  %v1361 = vld [vmem:[#allocation2 + $0x77] sm:$0xff]
  %v1362 = vld [vmem:[#allocation2 + $0x7f] sm:$0xff]
  %v1363 = vld [vmem:[#allocation2 + $0x87] sm:$0xff]
  %v1364 = vld [vmem:[#allocation2 + $0x8f] sm:$0xff]
  %v1365 = vld [vmem:[%s3 + $0x100] sm:$0xff]
  %v1366 = vld [vmem:[%s3 + $0x108] sm:$0xff]
  %v1367 = vld [vmem:[%s3 + $0x110] sm:$0xff]
  %v1368 = vld [vmem:[%s3 + $0x118] sm:$0xff]
  %v1369 = vld [vmem:[%s3 + $0x120] sm:$0xff]
  %v1370 = vld [vmem:[%s3 + $0x128] sm:$0xff]
  %v1371 = vld [vmem:[%s3 + $0x130] sm:$0xff]
  %v1372 = vld [vmem:[%s3 + $0x138] sm:$0xff]
  %v1374 = vsel %vm686, %v1347, 0
  %v1377 = vsel %vm686, %v1348, 0
  %v1380 = vsel %vm686, %v1349, 0
  %v1383 = vsel %vm686, %v1350, 0
  %v1386 = vsel %vm686, %v1351, 0
  %v1389 = vsel %vm686, %v1352, 0
  %v1392 = vsel %vm686, %v1353, 0
  %v1395 = vsel %vm686, %v1354, 0
  %v1398 = vsel %vm686, %v1355, 0
  %v1401 = vsel %vm686, %v1356, 0
  %v1404 = vsel %vm686, %v1357, 0
  %v1407 = vsel %vm686, %v1358, 0
  %v1410 = vsel %vm686, %v1359, 0
  %v1413 = vsel %vm686, %v1360, 0
  %v1416 = vsel %vm686, %v1361, 0
  %v1419 = vsel %vm686, %v1362, 0
  %v1422 = vsel %vm686, %v1363, 0
  %v1425 = vsel %vm686, %v1364, 0
  %1427 = vmatpush.msra.mxu0 0.0
  %1428 = vmatpush.msra.mxu0 0.0
  %1429 = vmatpush.msra.mxu0 0.0
  %1430 = vmatpush.msra.mxu0 0.0
  %1431 = vmatpush.msra.mxu0 0.0
  %1432 = vmatpush.msra.mxu0 0.0
  %1433 = vmatpush.msra.mxu0 0.0
  %1434 = vmatpush.msra.mxu0 0.0
  %1435 = vmatpush.msra.mxu0 %v1372
  %1436 = vmatpush.msra.mxu0 %v1371
  %1437 = vmatpush.msra.mxu0 %v1370
  %1438 = vmatpush.msra.mxu0 %v1369
  %1439 = vmatpush.msra.mxu0 %v1368
  %1440 = vmatpush.msra.mxu0 %v1367
  %1441 = vmatpush.msra.mxu0 %v1366
  %1442 = vmatpush.msra.mxu0 %v1365
  %1443 = vmatmul.f32.gmra.mxu0 %v1374
  %v1444 = vpop.f32.mrf.mxu0
  %v1445 = vadd.f32 0.0, %v1444
  %1446 = vmatmul.f32.gmra.mxu0 %v1377
  %v1447 = vpop.f32.mrf.mxu0
  %v1448 = vadd.f32 0.0, %v1447
  %1449 = vmatmul.f32.gmra.mxu0 %v1380
  %v1450 = vpop.f32.mrf.mxu0
  %v1451 = vadd.f32 0.0, %v1450
  %1452 = vmatmul.f32.gmra.mxu0 %v1383
  %v1453 = vpop.f32.mrf.mxu0
  %v1454 = vadd.f32 0.0, %v1453
  %1455 = vmatmul.f32.gmra.mxu0 %v1386
  %v1456 = vpop.f32.mrf.mxu0
  %v1457 = vadd.f32 0.0, %v1456
  %1458 = vmatmul.f32.gmra.mxu0 %v1389
  %v1459 = vpop.f32.mrf.mxu0
  %v1460 = vadd.f32 0.0, %v1459
  %1461 = vmatmul.f32.gmra.mxu0 %v1392
  %v1462 = vpop.f32.mrf.mxu0
  %v1463 = vadd.f32 0.0, %v1462
  %1464 = vmatmul.f32.gmra.mxu0 %v1395
  %v1465 = vpop.f32.mrf.mxu0
  %v1466 = vadd.f32 0.0, %v1465
  %1467 = vmatmul.f32.gmra.mxu0 %v1398
  %v1468 = vpop.f32.mrf.mxu0
  %v1469 = vadd.f32 0.0, %v1468
  %1470 = vmatmul.f32.gmra.mxu0 %v1401
  %v1471 = vpop.f32.mrf.mxu0
  %v1472 = vadd.f32 0.0, %v1471
  %1473 = vmatmul.f32.gmra.mxu0 %v1404
  %v1474 = vpop.f32.mrf.mxu0
  %v1475 = vadd.f32 0.0, %v1474
  %1476 = vmatmul.f32.gmra.mxu0 %v1407
  %v1477 = vpop.f32.mrf.mxu0
  %v1478 = vadd.f32 0.0, %v1477
  %1479 = vmatmul.f32.gmra.mxu0 %v1410
  %v1480 = vpop.f32.mrf.mxu0
  %v1481 = vadd.f32 0.0, %v1480
  %1482 = vmatmul.f32.gmra.mxu0 %v1413
  %v1483 = vpop.f32.mrf.mxu0
  %v1484 = vadd.f32 0.0, %v1483
  %1485 = vmatmul.f32.gmra.mxu0 %v1416
  %v1486 = vpop.f32.mrf.mxu0
  %v1487 = vadd.f32 0.0, %v1486
  %1488 = vmatmul.f32.gmra.mxu0 %v1419
  %v1489 = vpop.f32.mrf.mxu0
  %v1490 = vadd.f32 0.0, %v1489
  %1491 = vmatmul.f32.gmra.mxu0 %v1422
  %v1492 = vpop.f32.mrf.mxu0
  %v1493 = vadd.f32 0.0, %v1492
  %1494 = vmatmul.f32.gmra.mxu0 %v1425
  %v1495 = vpop.f32.mrf.mxu0
  %v1496 = vadd.f32 0.0, %v1495
  %1497 = vdwg.mxu0
  %v1498 = vadd.f32 %v1329, %v1445
  %v1499 = vadd.f32 %v1330, %v1448
  %v1500 = vadd.f32 %v1331, %v1451
  %v1501 = vadd.f32 %v1332, %v1454
  %v1502 = vadd.f32 %v1333, %v1457
  %v1503 = vadd.f32 %v1334, %v1460
  %v1504 = vadd.f32 %v1335, %v1463
  %v1505 = vadd.f32 %v1336, %v1466
  %v1506 = vadd.f32 %v1337, %v1469
  %v1507 = vadd.f32 %v1338, %v1472
  %v1508 = vadd.f32 %v1339, %v1475
  %v1509 = vadd.f32 %v1340, %v1478
  %v1510 = vadd.f32 %v1341, %v1481
  %v1511 = vadd.f32 %v1342, %v1484
  %v1512 = vadd.f32 %v1343, %v1487
  %v1513 = vadd.f32 %v1344, %v1490
  %v1514 = vadd.f32 %v1345, %v1493
  %v1515 = vadd.f32 %v1346, %v1496
  %v1516 = vld [vmem:[#allocation2 + $0x8] sm:$0xff]
  %v1517 = vld [vmem:[#allocation2 + $0x10] sm:$0xff]
  %v1518 = vld [vmem:[#allocation2 + $0x18] sm:$0xff]
  %v1519 = vld [vmem:[#allocation2 + $0x20] sm:$0xff]
  %v1520 = vld [vmem:[#allocation2 + $0x28] sm:$0xff]
  %v1521 = vld [vmem:[#allocation2 + $0x30] sm:$0xff]
  %v1522 = vld [vmem:[#allocation2 + $0x38] sm:$0xff]
  %v1523 = vld [vmem:[#allocation2 + $0x40] sm:$0xff]
  %v1524 = vld [vmem:[#allocation2 + $0x48] sm:$0xff]
  %v1525 = vld [vmem:[#allocation2 + $0x50] sm:$0xff]
  %v1526 = vld [vmem:[#allocation2 + $0x58] sm:$0xff]
  %v1527 = vld [vmem:[#allocation2 + $0x60] sm:$0xff]
  %v1528 = vld [vmem:[#allocation2 + $0x68] sm:$0xff]
  %v1529 = vld [vmem:[#allocation2 + $0x70] sm:$0xff]
  %v1530 = vld [vmem:[#allocation2 + $0x78] sm:$0xff]
  %v1531 = vld [vmem:[#allocation2 + $0x80] sm:$0xff]
  %v1532 = vld [vmem:[#allocation2 + $0x88] sm:$0xff]
  %v1533 = vld [vmem:[#allocation2 + $0x90] sm:$0xff]
  %v1534 = vld [vmem:[%s3 + $0x140] sm:$0xff]
  %v1535 = vld [vmem:[%s3 + $0x148] sm:$0xff]
  %v1536 = vld [vmem:[%s3 + $0x150] sm:$0xff]
  %v1537 = vld [vmem:[%s3 + $0x158] sm:$0xff]
  %v1538 = vld [vmem:[%s3 + $0x160] sm:$0xff]
  %v1539 = vld [vmem:[%s3 + $0x168] sm:$0xff]
  %v1540 = vld [vmem:[%s3 + $0x170] sm:$0xff]
  %v1541 = vld [vmem:[%s3 + $0x178] sm:$0xff]
  %v1543 = vsel %vm686, %v1516, 0
  %v1546 = vsel %vm686, %v1517, 0
  %v1549 = vsel %vm686, %v1518, 0
  %v1552 = vsel %vm686, %v1519, 0
  %v1555 = vsel %vm686, %v1520, 0
  %v1558 = vsel %vm686, %v1521, 0
  %v1561 = vsel %vm686, %v1522, 0
  %v1564 = vsel %vm686, %v1523, 0
  %v1567 = vsel %vm686, %v1524, 0
  %v1570 = vsel %vm686, %v1525, 0
  %v1573 = vsel %vm686, %v1526, 0
  %v1576 = vsel %vm686, %v1527, 0
  %v1579 = vsel %vm686, %v1528, 0
  %v1582 = vsel %vm686, %v1529, 0
  %v1585 = vsel %vm686, %v1530, 0
  %v1588 = vsel %vm686, %v1531, 0
  %v1591 = vsel %vm686, %v1532, 0
  %v1594 = vsel %vm686, %v1533, 0
  %1596 = vmatpush.msra.mxu0 0.0
  %1597 = vmatpush.msra.mxu0 0.0
  %1598 = vmatpush.msra.mxu0 0.0
  %1599 = vmatpush.msra.mxu0 0.0
  %1600 = vmatpush.msra.mxu0 0.0
  %1601 = vmatpush.msra.mxu0 0.0
  %1602 = vmatpush.msra.mxu0 0.0
  %1603 = vmatpush.msra.mxu0 0.0
  %1604 = vmatpush.msra.mxu0 %v1541
  %1605 = vmatpush.msra.mxu0 %v1540
  %1606 = vmatpush.msra.mxu0 %v1539
  %1607 = vmatpush.msra.mxu0 %v1538
  %1608 = vmatpush.msra.mxu0 %v1537
  %1609 = vmatpush.msra.mxu0 %v1536
  %1610 = vmatpush.msra.mxu0 %v1535
  %1611 = vmatpush.msra.mxu0 %v1534
  %1612 = vmatmul.f32.gmra.mxu0 %v1543
  %v1613 = vpop.f32.mrf.mxu0
  %v1614 = vadd.f32 0.0, %v1613
  %1615 = vmatmul.f32.gmra.mxu0 %v1546
  %v1616 = vpop.f32.mrf.mxu0
  %v1617 = vadd.f32 0.0, %v1616
  %1618 = vmatmul.f32.gmra.mxu0 %v1549
  %v1619 = vpop.f32.mrf.mxu0
  %v1620 = vadd.f32 0.0, %v1619
  %1621 = vmatmul.f32.gmra.mxu0 %v1552
  %v1622 = vpop.f32.mrf.mxu0
  %v1623 = vadd.f32 0.0, %v1622
  %1624 = vmatmul.f32.gmra.mxu0 %v1555
  %v1625 = vpop.f32.mrf.mxu0
  %v1626 = vadd.f32 0.0, %v1625
  %1627 = vmatmul.f32.gmra.mxu0 %v1558
  %v1628 = vpop.f32.mrf.mxu0
  %v1629 = vadd.f32 0.0, %v1628
  %1630 = vmatmul.f32.gmra.mxu0 %v1561
  %v1631 = vpop.f32.mrf.mxu0
  %v1632 = vadd.f32 0.0, %v1631
  %1633 = vmatmul.f32.gmra.mxu0 %v1564
  %v1634 = vpop.f32.mrf.mxu0
  %v1635 = vadd.f32 0.0, %v1634
  %1636 = vmatmul.f32.gmra.mxu0 %v1567
  %v1637 = vpop.f32.mrf.mxu0
  %v1638 = vadd.f32 0.0, %v1637
  %1639 = vmatmul.f32.gmra.mxu0 %v1570
  %v1640 = vpop.f32.mrf.mxu0
  %v1641 = vadd.f32 0.0, %v1640
  %1642 = vmatmul.f32.gmra.mxu0 %v1573
  %v1643 = vpop.f32.mrf.mxu0
  %v1644 = vadd.f32 0.0, %v1643
  %1645 = vmatmul.f32.gmra.mxu0 %v1576
  %v1646 = vpop.f32.mrf.mxu0
  %v1647 = vadd.f32 0.0, %v1646
  %1648 = vmatmul.f32.gmra.mxu0 %v1579
  %v1649 = vpop.f32.mrf.mxu0
  %v1650 = vadd.f32 0.0, %v1649
  %1651 = vmatmul.f32.gmra.mxu0 %v1582
  %v1652 = vpop.f32.mrf.mxu0
  %v1653 = vadd.f32 0.0, %v1652
  %1654 = vmatmul.f32.gmra.mxu0 %v1585
  %v1655 = vpop.f32.mrf.mxu0
  %v1656 = vadd.f32 0.0, %v1655
  %1657 = vmatmul.f32.gmra.mxu0 %v1588
  %v1658 = vpop.f32.mrf.mxu0
  %v1659 = vadd.f32 0.0, %v1658
  %1660 = vmatmul.f32.gmra.mxu0 %v1591
  %v1661 = vpop.f32.mrf.mxu0
  %v1662 = vadd.f32 0.0, %v1661
  %1663 = vmatmul.f32.gmra.mxu0 %v1594
  %v1664 = vpop.f32.mrf.mxu0
  %v1665 = vadd.f32 0.0, %v1664
  %1666 = vdwg.mxu0
  %v1667 = vadd.f32 %v1498, %v1614
  %v1668 = vadd.f32 %v1499, %v1617
  %v1669 = vadd.f32 %v1500, %v1620
  %v1670 = vadd.f32 %v1501, %v1623
  %v1671 = vadd.f32 %v1502, %v1626
  %v1672 = vadd.f32 %v1503, %v1629
  %v1673 = vadd.f32 %v1504, %v1632
  %v1674 = vadd.f32 %v1505, %v1635
  %v1675 = vadd.f32 %v1506, %v1638
  %v1676 = vadd.f32 %v1507, %v1641
  %v1677 = vadd.f32 %v1508, %v1644
  %v1678 = vadd.f32 %v1509, %v1647
  %v1679 = vadd.f32 %v1510, %v1650
  %v1680 = vadd.f32 %v1511, %v1653
  %v1681 = vadd.f32 %v1512, %v1656
  %v1682 = vadd.f32 %v1513, %v1659
  %v1683 = vadd.f32 %v1514, %v1662
  %v1684 = vadd.f32 %v1515, %v1665
  %v1685 = vld [vmem:[#allocation2 + $0xc] sm:$0xff]
  %v1686 = vld [vmem:[#allocation2 + $0x14] sm:$0xff]
  %v1687 = vld [vmem:[#allocation2 + $0x1c] sm:$0xff]
  %v1688 = vld [vmem:[#allocation2 + $0x24] sm:$0xff]
  %v1689 = vld [vmem:[#allocation2 + $0x2c] sm:$0xff]
  %v1690 = vld [vmem:[#allocation2 + $0x34] sm:$0xff]
  %v1691 = vld [vmem:[#allocation2 + $0x3c] sm:$0xff]
  %v1692 = vld [vmem:[#allocation2 + $0x44] sm:$0xff]
  %v1693 = vld [vmem:[#allocation2 + $0x4c] sm:$0xff]
  %v1694 = vld [vmem:[#allocation2 + $0x54] sm:$0xff]
  %v1695 = vld [vmem:[#allocation2 + $0x5c] sm:$0xff]
  %v1696 = vld [vmem:[#allocation2 + $0x64] sm:$0xff]
  %v1697 = vld [vmem:[#allocation2 + $0x6c] sm:$0xff]
  %v1698 = vld [vmem:[#allocation2 + $0x74] sm:$0xff]
  %v1699 = vld [vmem:[#allocation2 + $0x7c] sm:$0xff]
  %v1700 = vld [vmem:[#allocation2 + $0x84] sm:$0xff]
  %v1701 = vld [vmem:[#allocation2 + $0x8c] sm:$0xff]
  %v1702 = vld [vmem:[#allocation2 + $0x94] sm:$0xff]
  %v1703 = vld [vmem:[%s3 + $0x180] sm:$0xff]
  %v1704 = vld [vmem:[%s3 + $0x188] sm:$0xff]
  %v1705 = vld [vmem:[%s3 + $0x190] sm:$0xff]
  %v1706 = vld [vmem:[%s3 + $0x198] sm:$0xff]
  %v1707 = vld [vmem:[%s3 + $0x1a0] sm:$0xff]
  %v1708 = vld [vmem:[%s3 + $0x1a8] sm:$0xff]
  %v1709 = vld [vmem:[%s3 + $0x1b0] sm:$0xff]
  %v1710 = vld [vmem:[%s3 + $0x1b8] sm:$0xff]
  %v1712 = vsel %vm686, %v1685, 0
  %v1715 = vsel %vm686, %v1686, 0
  %v1718 = vsel %vm686, %v1687, 0
  %v1721 = vsel %vm686, %v1688, 0
  %v1724 = vsel %vm686, %v1689, 0
  %v1727 = vsel %vm686, %v1690, 0
  %v1730 = vsel %vm686, %v1691, 0
  %v1733 = vsel %vm686, %v1692, 0
  %v1736 = vsel %vm686, %v1693, 0
  %v1739 = vsel %vm686, %v1694, 0
  %v1742 = vsel %vm686, %v1695, 0
  %v1745 = vsel %vm686, %v1696, 0
  %v1748 = vsel %vm686, %v1697, 0
  %v1751 = vsel %vm686, %v1698, 0
  %v1754 = vsel %vm686, %v1699, 0
  %v1757 = vsel %vm686, %v1700, 0
  %v1760 = vsel %vm686, %v1701, 0
  %v1763 = vsel %vm686, %v1702, 0
  %1765 = vmatpush.msra.mxu0 0.0
  %1766 = vmatpush.msra.mxu0 0.0
  %1767 = vmatpush.msra.mxu0 0.0
  %1768 = vmatpush.msra.mxu0 0.0
  %1769 = vmatpush.msra.mxu0 0.0
  %1770 = vmatpush.msra.mxu0 0.0
  %1771 = vmatpush.msra.mxu0 0.0
  %1772 = vmatpush.msra.mxu0 0.0
  %1773 = vmatpush.msra.mxu0 %v1710
  %1774 = vmatpush.msra.mxu0 %v1709
  %1775 = vmatpush.msra.mxu0 %v1708
  %1776 = vmatpush.msra.mxu0 %v1707
  %1777 = vmatpush.msra.mxu0 %v1706
  %1778 = vmatpush.msra.mxu0 %v1705
  %1779 = vmatpush.msra.mxu0 %v1704
  %1780 = vmatpush.msra.mxu0 %v1703
  %1781 = vmatmul.f32.gmra.mxu0 %v1712
  %v1782 = vpop.f32.mrf.mxu0
  %v1783 = vadd.f32 0.0, %v1782
  %1784 = vmatmul.f32.gmra.mxu0 %v1715
  %v1785 = vpop.f32.mrf.mxu0
  %v1786 = vadd.f32 0.0, %v1785
  %1787 = vmatmul.f32.gmra.mxu0 %v1718
  %v1788 = vpop.f32.mrf.mxu0
  %v1789 = vadd.f32 0.0, %v1788
  %1790 = vmatmul.f32.gmra.mxu0 %v1721
  %v1791 = vpop.f32.mrf.mxu0
  %v1792 = vadd.f32 0.0, %v1791
  %1793 = vmatmul.f32.gmra.mxu0 %v1724
  %v1794 = vpop.f32.mrf.mxu0
  %v1795 = vadd.f32 0.0, %v1794
  %1796 = vmatmul.f32.gmra.mxu0 %v1727
  %v1797 = vpop.f32.mrf.mxu0
  %v1798 = vadd.f32 0.0, %v1797
  %1799 = vmatmul.f32.gmra.mxu0 %v1730
  %v1800 = vpop.f32.mrf.mxu0
  %v1801 = vadd.f32 0.0, %v1800
  %1802 = vmatmul.f32.gmra.mxu0 %v1733
  %v1803 = vpop.f32.mrf.mxu0
  %v1804 = vadd.f32 0.0, %v1803
  %1805 = vmatmul.f32.gmra.mxu0 %v1736
  %v1806 = vpop.f32.mrf.mxu0
  %v1807 = vadd.f32 0.0, %v1806
  %1808 = vmatmul.f32.gmra.mxu0 %v1739
  %v1809 = vpop.f32.mrf.mxu0
  %v1810 = vadd.f32 0.0, %v1809
  %1811 = vmatmul.f32.gmra.mxu0 %v1742
  %v1812 = vpop.f32.mrf.mxu0
  %v1813 = vadd.f32 0.0, %v1812
  %1814 = vmatmul.f32.gmra.mxu0 %v1745
  %v1815 = vpop.f32.mrf.mxu0
  %v1816 = vadd.f32 0.0, %v1815
  %1817 = vmatmul.f32.gmra.mxu0 %v1748
  %v1818 = vpop.f32.mrf.mxu0
  %v1819 = vadd.f32 0.0, %v1818
  %1820 = vmatmul.f32.gmra.mxu0 %v1751
  %v1821 = vpop.f32.mrf.mxu0
  %v1822 = vadd.f32 0.0, %v1821
  %1823 = vmatmul.f32.gmra.mxu0 %v1754
  %v1824 = vpop.f32.mrf.mxu0
  %v1825 = vadd.f32 0.0, %v1824
  %1826 = vmatmul.f32.gmra.mxu0 %v1757
  %v1827 = vpop.f32.mrf.mxu0
  %v1828 = vadd.f32 0.0, %v1827
  %1829 = vmatmul.f32.gmra.mxu0 %v1760
  %v1830 = vpop.f32.mrf.mxu0
  %v1831 = vadd.f32 0.0, %v1830
  %1832 = vmatmul.f32.gmra.mxu0 %v1763
  %v1833 = vpop.f32.mrf.mxu0
  %v1834 = vadd.f32 0.0, %v1833
  %1835 = vdwg.mxu0
  %v1836 = vadd.f32 %v1667, %v1783
  %v1837 = vadd.f32 %v1668, %v1786
  %v1838 = vadd.f32 %v1669, %v1789
  %v1839 = vadd.f32 %v1670, %v1792
  %v1840 = vadd.f32 %v1671, %v1795
  %v1841 = vadd.f32 %v1672, %v1798
  %v1842 = vadd.f32 %v1673, %v1801
  %v1843 = vadd.f32 %v1674, %v1804
  %v1844 = vadd.f32 %v1675, %v1807
  %v1845 = vadd.f32 %v1676, %v1810
  %v1846 = vadd.f32 %v1677, %v1813
  %v1847 = vadd.f32 %v1678, %v1816
  %v1848 = vadd.f32 %v1679, %v1819
  %v1849 = vadd.f32 %v1680, %v1822
  %v1850 = vadd.f32 %v1681, %v1825
  %v1851 = vadd.f32 %v1682, %v1828
  %v1852 = vadd.f32 %v1683, %v1831
  %v1853 = vadd.f32 %v1684, %v1834
  %v1854 = vld [vmem:[#allocation2 + $0xd] sm:$0xff]
  %v1855 = vld [vmem:[#allocation2 + $0x15] sm:$0xff]
  %v1856 = vld [vmem:[#allocation2 + $0x1d] sm:$0xff]
  %v1857 = vld [vmem:[#allocation2 + $0x25] sm:$0xff]
  %v1858 = vld [vmem:[#allocation2 + $0x2d] sm:$0xff]
  %v1859 = vld [vmem:[#allocation2 + $0x35] sm:$0xff]
  %v1860 = vld [vmem:[#allocation2 + $0x3d] sm:$0xff]
  %v1861 = vld [vmem:[#allocation2 + $0x45] sm:$0xff]
  %v1862 = vld [vmem:[#allocation2 + $0x4d] sm:$0xff]
  %v1863 = vld [vmem:[#allocation2 + $0x55] sm:$0xff]
  %v1864 = vld [vmem:[#allocation2 + $0x5d] sm:$0xff]
  %v1865 = vld [vmem:[#allocation2 + $0x65] sm:$0xff]
  %v1866 = vld [vmem:[#allocation2 + $0x6d] sm:$0xff]
  %v1867 = vld [vmem:[#allocation2 + $0x75] sm:$0xff]
  %v1868 = vld [vmem:[#allocation2 + $0x7d] sm:$0xff]
  %v1869 = vld [vmem:[#allocation2 + $0x85] sm:$0xff]
  %v1870 = vld [vmem:[#allocation2 + $0x8d] sm:$0xff]
  %v1871 = vld [vmem:[#allocation2 + $0x95] sm:$0xff]
  %v1872 = vld [vmem:[%s3 + $0x1c0] sm:$0xff]
  %v1873 = vld [vmem:[%s3 + $0x1c8] sm:$0xff]
  %v1874 = vld [vmem:[%s3 + $0x1d0] sm:$0xff]
  %v1875 = vld [vmem:[%s3 + $0x1d8] sm:$0xff]
  %v1876 = vld [vmem:[%s3 + $0x1e0] sm:$0xff]
  %v1877 = vld [vmem:[%s3 + $0x1e8] sm:$0xff]
  %v1878 = vld [vmem:[%s3 + $0x1f0] sm:$0xff]
  %v1879 = vld [vmem:[%s3 + $0x1f8] sm:$0xff]
  %v1881 = vsel %vm686, %v1854, 0
  %v1884 = vsel %vm686, %v1855, 0
  %v1887 = vsel %vm686, %v1856, 0
  %v1890 = vsel %vm686, %v1857, 0
  %v1893 = vsel %vm686, %v1858, 0
  %v1896 = vsel %vm686, %v1859, 0
  %v1899 = vsel %vm686, %v1860, 0
  %v1902 = vsel %vm686, %v1861, 0
  %v1905 = vsel %vm686, %v1862, 0
  %v1908 = vsel %vm686, %v1863, 0
  %v1911 = vsel %vm686, %v1864, 0
  %v1914 = vsel %vm686, %v1865, 0
  %v1917 = vsel %vm686, %v1866, 0
  %v1920 = vsel %vm686, %v1867, 0
  %v1923 = vsel %vm686, %v1868, 0
  %v1926 = vsel %vm686, %v1869, 0
  %v1929 = vsel %vm686, %v1870, 0
  %v1932 = vsel %vm686, %v1871, 0
  %1934 = vmatpush.msra.mxu0 0.0
  %1935 = vmatpush.msra.mxu0 0.0
  %1936 = vmatpush.msra.mxu0 0.0
  %1937 = vmatpush.msra.mxu0 0.0
  %1938 = vmatpush.msra.mxu0 0.0
  %1939 = vmatpush.msra.mxu0 0.0
  %1940 = vmatpush.msra.mxu0 0.0
  %1941 = vmatpush.msra.mxu0 0.0
  %1942 = vmatpush.msra.mxu0 %v1879
  %1943 = vmatpush.msra.mxu0 %v1878
  %1944 = vmatpush.msra.mxu0 %v1877
  %1945 = vmatpush.msra.mxu0 %v1876
  %1946 = vmatpush.msra.mxu0 %v1875
  %1947 = vmatpush.msra.mxu0 %v1874
  %1948 = vmatpush.msra.mxu0 %v1873
  %1949 = vmatpush.msra.mxu0 %v1872
  %1950 = vmatmul.f32.gmra.mxu0 %v1881
  %v1951 = vpop.f32.mrf.mxu0
  %v1952 = vadd.f32 0.0, %v1951
  %1953 = vmatmul.f32.gmra.mxu0 %v1884
  %v1954 = vpop.f32.mrf.mxu0
  %v1955 = vadd.f32 0.0, %v1954
  %1956 = vmatmul.f32.gmra.mxu0 %v1887
  %v1957 = vpop.f32.mrf.mxu0
  %v1958 = vadd.f32 0.0, %v1957
  %1959 = vmatmul.f32.gmra.mxu0 %v1890
  %v1960 = vpop.f32.mrf.mxu0
  %v1961 = vadd.f32 0.0, %v1960
  %1962 = vmatmul.f32.gmra.mxu0 %v1893
  %v1963 = vpop.f32.mrf.mxu0
  %v1964 = vadd.f32 0.0, %v1963
  %1965 = vmatmul.f32.gmra.mxu0 %v1896
  %v1966 = vpop.f32.mrf.mxu0
  %v1967 = vadd.f32 0.0, %v1966
  %1968 = vmatmul.f32.gmra.mxu0 %v1899
  %v1969 = vpop.f32.mrf.mxu0
  %v1970 = vadd.f32 0.0, %v1969
  %1971 = vmatmul.f32.gmra.mxu0 %v1902
  %v1972 = vpop.f32.mrf.mxu0
  %v1973 = vadd.f32 0.0, %v1972
  %1974 = vmatmul.f32.gmra.mxu0 %v1905
  %v1975 = vpop.f32.mrf.mxu0
  %v1976 = vadd.f32 0.0, %v1975
  %1977 = vmatmul.f32.gmra.mxu0 %v1908
  %v1978 = vpop.f32.mrf.mxu0
  %v1979 = vadd.f32 0.0, %v1978
  %1980 = vmatmul.f32.gmra.mxu0 %v1911
  %v1981 = vpop.f32.mrf.mxu0
  %v1982 = vadd.f32 0.0, %v1981
  %1983 = vmatmul.f32.gmra.mxu0 %v1914
  %v1984 = vpop.f32.mrf.mxu0
  %v1985 = vadd.f32 0.0, %v1984
  %1986 = vmatmul.f32.gmra.mxu0 %v1917
  %v1987 = vpop.f32.mrf.mxu0
  %v1988 = vadd.f32 0.0, %v1987
  %1989 = vmatmul.f32.gmra.mxu0 %v1920
  %v1990 = vpop.f32.mrf.mxu0
  %v1991 = vadd.f32 0.0, %v1990
  %1992 = vmatmul.f32.gmra.mxu0 %v1923
  %v1993 = vpop.f32.mrf.mxu0
  %v1994 = vadd.f32 0.0, %v1993
  %1995 = vmatmul.f32.gmra.mxu0 %v1926
  %v1996 = vpop.f32.mrf.mxu0
  %v1997 = vadd.f32 0.0, %v1996
  %1998 = vmatmul.f32.gmra.mxu0 %v1929
  %v1999 = vpop.f32.mrf.mxu0
  %v2000 = vadd.f32 0.0, %v1999
  %2001 = vmatmul.f32.gmra.mxu0 %v1932
  %v2002 = vpop.f32.mrf.mxu0
  %v2003 = vadd.f32 0.0, %v2002
  %2004 = vdwg.mxu0
  %v2005 = vadd.f32 %v1836, %v1952
  %v2006 = vadd.f32 %v1837, %v1955
  %v2007 = vadd.f32 %v1838, %v1958
  %v2008 = vadd.f32 %v1839, %v1961
  %v2009 = vadd.f32 %v1840, %v1964
  %v2010 = vadd.f32 %v1841, %v1967
  %v2011 = vadd.f32 %v1842, %v1970
  %v2012 = vadd.f32 %v1843, %v1973
  %v2013 = vadd.f32 %v1844, %v1976
  %v2014 = vadd.f32 %v1845, %v1979
  %v2015 = vadd.f32 %v1846, %v1982
  %v2016 = vadd.f32 %v1847, %v1985
  %v2017 = vadd.f32 %v1848, %v1988
  %v2018 = vadd.f32 %v1849, %v1991
  %v2019 = vadd.f32 %v1850, %v1994
  %v2020 = vadd.f32 %v1851, %v1997
  %v2021 = vadd.f32 %v1852, %v2000
  %v2022 = vadd.f32 %v1853, %v2003
  %v2023 = vld [vmem:[#allocation2 + $0xe] sm:$0xff]
  %v2024 = vld [vmem:[#allocation2 + $0x16] sm:$0xff]
  %v2025 = vld [vmem:[#allocation2 + $0x1e] sm:$0xff]
  %v2026 = vld [vmem:[#allocation2 + $0x26] sm:$0xff]
  %v2027 = vld [vmem:[#allocation2 + $0x2e] sm:$0xff]
  %v2028 = vld [vmem:[#allocation2 + $0x36] sm:$0xff]
  %v2029 = vld [vmem:[#allocation2 + $0x3e] sm:$0xff]
  %v2030 = vld [vmem:[#allocation2 + $0x46] sm:$0xff]
  %v2031 = vld [vmem:[#allocation2 + $0x4e] sm:$0xff]
  %v2032 = vld [vmem:[#allocation2 + $0x56] sm:$0xff]
  %v2033 = vld [vmem:[#allocation2 + $0x5e] sm:$0xff]
  %v2034 = vld [vmem:[#allocation2 + $0x66] sm:$0xff]
  %v2035 = vld [vmem:[#allocation2 + $0x6e] sm:$0xff]
  %v2036 = vld [vmem:[#allocation2 + $0x76] sm:$0xff]
  %v2037 = vld [vmem:[#allocation2 + $0x7e] sm:$0xff]
  %v2038 = vld [vmem:[#allocation2 + $0x86] sm:$0xff]
  %v2039 = vld [vmem:[#allocation2 + $0x8e] sm:$0xff]
  %v2040 = vld [vmem:[#allocation2 + $0x96] sm:$0xff]
  %v2041 = vld [vmem:[%s3 + $0x200] sm:$0xff]
  %v2042 = vld [vmem:[%s3 + $0x208] sm:$0xff]
  %v2043 = vld [vmem:[%s3 + $0x210] sm:$0xff]
  %v2044 = vld [vmem:[%s3 + $0x218] sm:$0xff]
  %v2045 = vld [vmem:[%s3 + $0x220] sm:$0xff]
  %v2046 = vld [vmem:[%s3 + $0x228] sm:$0xff]
  %v2047 = vld [vmem:[%s3 + $0x230] sm:$0xff]
  %v2048 = vld [vmem:[%s3 + $0x238] sm:$0xff]
  %v2050 = vsel %vm686, %v2023, 0
  %v2053 = vsel %vm686, %v2024, 0
  %v2056 = vsel %vm686, %v2025, 0
  %v2059 = vsel %vm686, %v2026, 0
  %v2062 = vsel %vm686, %v2027, 0
  %v2065 = vsel %vm686, %v2028, 0
  %v2068 = vsel %vm686, %v2029, 0
  %v2071 = vsel %vm686, %v2030, 0
  %v2074 = vsel %vm686, %v2031, 0
  %v2077 = vsel %vm686, %v2032, 0
  %v2080 = vsel %vm686, %v2033, 0
  %v2083 = vsel %vm686, %v2034, 0
  %v2086 = vsel %vm686, %v2035, 0
  %v2089 = vsel %vm686, %v2036, 0
  %v2092 = vsel %vm686, %v2037, 0
  %v2095 = vsel %vm686, %v2038, 0
  %v2098 = vsel %vm686, %v2039, 0
  %v2101 = vsel %vm686, %v2040, 0
  %2103 = vmatpush.msra.mxu0 0.0
  %2104 = vmatpush.msra.mxu0 0.0
  %2105 = vmatpush.msra.mxu0 0.0
  %2106 = vmatpush.msra.mxu0 0.0
  %2107 = vmatpush.msra.mxu0 0.0
  %2108 = vmatpush.msra.mxu0 0.0
  %2109 = vmatpush.msra.mxu0 0.0
  %2110 = vmatpush.msra.mxu0 0.0
  %2111 = vmatpush.msra.mxu0 %v2048
  %2112 = vmatpush.msra.mxu0 %v2047
  %2113 = vmatpush.msra.mxu0 %v2046
  %2114 = vmatpush.msra.mxu0 %v2045
  %2115 = vmatpush.msra.mxu0 %v2044
  %2116 = vmatpush.msra.mxu0 %v2043
  %2117 = vmatpush.msra.mxu0 %v2042
  %2118 = vmatpush.msra.mxu0 %v2041
  %2119 = vmatmul.f32.gmra.mxu0 %v2050
  %v2120 = vpop.f32.mrf.mxu0
  %v2121 = vadd.f32 0.0, %v2120
  %2122 = vmatmul.f32.gmra.mxu0 %v2053
  %v2123 = vpop.f32.mrf.mxu0
  %v2124 = vadd.f32 0.0, %v2123
  %2125 = vmatmul.f32.gmra.mxu0 %v2056
  %v2126 = vpop.f32.mrf.mxu0
  %v2127 = vadd.f32 0.0, %v2126
  %2128 = vmatmul.f32.gmra.mxu0 %v2059
  %v2129 = vpop.f32.mrf.mxu0
  %v2130 = vadd.f32 0.0, %v2129
  %2131 = vmatmul.f32.gmra.mxu0 %v2062
  %v2132 = vpop.f32.mrf.mxu0
  %v2133 = vadd.f32 0.0, %v2132
  %2134 = vmatmul.f32.gmra.mxu0 %v2065
  %v2135 = vpop.f32.mrf.mxu0
  %v2136 = vadd.f32 0.0, %v2135
  %2137 = vmatmul.f32.gmra.mxu0 %v2068
  %v2138 = vpop.f32.mrf.mxu0
  %v2139 = vadd.f32 0.0, %v2138
  %2140 = vmatmul.f32.gmra.mxu0 %v2071
  %v2141 = vpop.f32.mrf.mxu0
  %v2142 = vadd.f32 0.0, %v2141
  %2143 = vmatmul.f32.gmra.mxu0 %v2074
  %v2144 = vpop.f32.mrf.mxu0
  %v2145 = vadd.f32 0.0, %v2144
  %2146 = vmatmul.f32.gmra.mxu0 %v2077
  %v2147 = vpop.f32.mrf.mxu0
  %v2148 = vadd.f32 0.0, %v2147
  %2149 = vmatmul.f32.gmra.mxu0 %v2080
  %v2150 = vpop.f32.mrf.mxu0
  %v2151 = vadd.f32 0.0, %v2150
  %2152 = vmatmul.f32.gmra.mxu0 %v2083
  %v2153 = vpop.f32.mrf.mxu0
  %v2154 = vadd.f32 0.0, %v2153
  %2155 = vmatmul.f32.gmra.mxu0 %v2086
  %v2156 = vpop.f32.mrf.mxu0
  %v2157 = vadd.f32 0.0, %v2156
  %2158 = vmatmul.f32.gmra.mxu0 %v2089
  %v2159 = vpop.f32.mrf.mxu0
  %v2160 = vadd.f32 0.0, %v2159
  %2161 = vmatmul.f32.gmra.mxu0 %v2092
  %v2162 = vpop.f32.mrf.mxu0
  %v2163 = vadd.f32 0.0, %v2162
  %2164 = vmatmul.f32.gmra.mxu0 %v2095
  %v2165 = vpop.f32.mrf.mxu0
  %v2166 = vadd.f32 0.0, %v2165
  %2167 = vmatmul.f32.gmra.mxu0 %v2098
  %v2168 = vpop.f32.mrf.mxu0
  %v2169 = vadd.f32 0.0, %v2168
  %2170 = vmatmul.f32.gmra.mxu0 %v2101
  %v2171 = vpop.f32.mrf.mxu0
  %v2172 = vadd.f32 0.0, %v2171
  %2173 = vdwg.mxu0
  %v2174 = vadd.f32 %v2005, %v2121
  %v2175 = vadd.f32 %v2006, %v2124
  %v2176 = vadd.f32 %v2007, %v2127
  %v2177 = vadd.f32 %v2008, %v2130
  %v2178 = vadd.f32 %v2009, %v2133
  %v2179 = vadd.f32 %v2010, %v2136
  %v2180 = vadd.f32 %v2011, %v2139
  %v2181 = vadd.f32 %v2012, %v2142
  %v2182 = vadd.f32 %v2013, %v2145
  %v2183 = vadd.f32 %v2014, %v2148
  %v2184 = vadd.f32 %v2015, %v2151
  %v2185 = vadd.f32 %v2016, %v2154
  %v2186 = vadd.f32 %v2017, %v2157
  %v2187 = vadd.f32 %v2018, %v2160
  %v2188 = vadd.f32 %v2019, %v2163
  %v2189 = vadd.f32 %v2020, %v2166
  %v2190 = vadd.f32 %v2021, %v2169
  %v2191 = vadd.f32 %v2022, %v2172
  %v2192 = vld [vmem:[%s4] sm:$0x1]
  %v2194 = vperm.slane %v2192, 0
  %v2196 = vadd.f32 %v2174, %v2194
  %v2197 = vadd.f32 %v2175, %v2194
  %v2198 = vadd.f32 %v2176, %v2194
  %v2199 = vadd.f32 %v2177, %v2194
  %v2200 = vadd.f32 %v2178, %v2194
  %v2201 = vadd.f32 %v2179, %v2194
  %v2202 = vadd.f32 %v2180, %v2194
  %v2203 = vadd.f32 %v2181, %v2194
  %v2204 = vadd.f32 %v2182, %v2194
  %v2205 = vadd.f32 %v2183, %v2194
  %v2206 = vadd.f32 %v2184, %v2194
  %v2207 = vadd.f32 %v2185, %v2194
  %v2208 = vadd.f32 %v2186, %v2194
  %v2209 = vadd.f32 %v2187, %v2194
  %v2210 = vadd.f32 %v2188, %v2194
  %v2211 = vadd.f32 %v2189, %v2194
  %v2212 = vadd.f32 %v2190, %v2194
  %v2213 = vadd.f32 %v2191, %v2194
  %2214 = vst [vmem:[#allocation3] sm:$0xff] %v2196
  %2215 = vst [vmem:[#allocation3 + $0x8] sm:$0xff] %v2197
  %2216 = vst [vmem:[#allocation3 + $0x10] sm:$0xff] %v2198
  %2217 = vst [vmem:[#allocation3 + $0x18] sm:$0xff] %v2199
  %2218 = vst [vmem:[#allocation3 + $0x20] sm:$0xff] %v2200
  %2219 = vst [vmem:[#allocation3 + $0x28] sm:$0xff] %v2201
  %2220 = vst [vmem:[#allocation3 + $0x30] sm:$0xff] %v2202
  %2221 = vst [vmem:[#allocation3 + $0x38] sm:$0xff] %v2203
  %2222 = vst [vmem:[#allocation3 + $0x40] sm:$0xff] %v2204
  %2223 = vst [vmem:[#allocation3 + $0x48] sm:$0xff] %v2205
  %2224 = vst [vmem:[#allocation3 + $0x50] sm:$0xff] %v2206
  %2225 = vst [vmem:[#allocation3 + $0x58] sm:$0xff] %v2207
  %2226 = vst [vmem:[#allocation3 + $0x60] sm:$0xff] %v2208
  %2227 = vst [vmem:[#allocation3 + $0x68] sm:$0xff] %v2209
  %2228 = vst [vmem:[#allocation3 + $0x70] sm:$0xff] %v2210
  %2229 = vst [vmem:[#allocation3 + $0x78] sm:$0xff] %v2211
  %2230 = vst [vmem:[#allocation3 + $0x80] sm:$0xff] %v2212
  %2231 = vst [vmem:[#allocation3 + $0x88] sm:$0xff] %v2213
  %2232 = vst [vmem:[#allocation3 + $0x90] sm:$0xff] 0.0
  %2233 = vst [vmem:[#allocation3 + $0x98] sm:$0xff] 0.0
  %v2234 = vld [vmem:[#allocation3] sm:$0xff]
  %v2235 = vld [vmem:[#allocation3 + $0x8] sm:$0xff]
  %v2236 = vld [vmem:[#allocation3 + $0x10] sm:$0xff]
  %v2237 = vld [vmem:[#allocation3 + $0x18] sm:$0xff]
  %v2238 = vld [vmem:[#allocation3 + $0x20] sm:$0xff]
  %v2239 = vld [vmem:[#allocation3 + $0x28] sm:$0xff]
  %v2240 = vld [vmem:[#allocation3 + $0x30] sm:$0xff]
  %v2241 = vld [vmem:[#allocation3 + $0x38] sm:$0xff]
  %v2242 = vld [vmem:[#allocation3 + $0x40] sm:$0xff]
  %v2243 = vld [vmem:[#allocation3 + $0x48] sm:$0xff]
  %v2244 = vld [vmem:[#allocation3 + $0x50] sm:$0xff]
  %v2245 = vld [vmem:[#allocation3 + $0x58] sm:$0xff]
  %v2246 = vld [vmem:[#allocation3 + $0x60] sm:$0xff]
  %v2247 = vld [vmem:[#allocation3 + $0x68] sm:$0xff]
  %v2248 = vld [vmem:[#allocation3 + $0x70] sm:$0xff]
  %v2249 = vld [vmem:[#allocation3 + $0x78] sm:$0xff]
  %v2250 = vld [vmem:[#allocation3 + $0x80] sm:$0xff]
  %v2251 = vld [vmem:[#allocation3 + $0x88] sm:$0xff]
  %v2252 = vld [vmem:[#allocation3 + $0x1] sm:$0xff]
  %v2253 = vld [vmem:[#allocation3 + $0x9] sm:$0xff]
  %v2254 = vld [vmem:[#allocation3 + $0x11] sm:$0xff]
  %v2255 = vld [vmem:[#allocation3 + $0x19] sm:$0xff]
  %v2256 = vld [vmem:[#allocation3 + $0x21] sm:$0xff]
  %v2257 = vld [vmem:[#allocation3 + $0x29] sm:$0xff]
  %v2258 = vld [vmem:[#allocation3 + $0x31] sm:$0xff]
  %v2259 = vld [vmem:[#allocation3 + $0x39] sm:$0xff]
  %v2260 = vld [vmem:[#allocation3 + $0x41] sm:$0xff]
  %v2261 = vld [vmem:[#allocation3 + $0x49] sm:$0xff]
  %v2262 = vld [vmem:[#allocation3 + $0x51] sm:$0xff]
  %v2263 = vld [vmem:[#allocation3 + $0x59] sm:$0xff]
  %v2264 = vld [vmem:[#allocation3 + $0x61] sm:$0xff]
  %v2265 = vld [vmem:[#allocation3 + $0x69] sm:$0xff]
  %v2266 = vld [vmem:[#allocation3 + $0x71] sm:$0xff]
  %v2267 = vld [vmem:[#allocation3 + $0x79] sm:$0xff]
  %v2268 = vld [vmem:[#allocation3 + $0x81] sm:$0xff]
  %v2269 = vld [vmem:[#allocation3 + $0x89] sm:$0xff]
  %v2270 = vmax.f32 %v2234, %v2252
  %v2271 = vmax.f32 %v2235, %v2253
  %v2272 = vmax.f32 %v2236, %v2254
  %v2273 = vmax.f32 %v2237, %v2255
  %v2274 = vmax.f32 %v2238, %v2256
  %v2275 = vmax.f32 %v2239, %v2257
  %v2276 = vmax.f32 %v2240, %v2258
  %v2277 = vmax.f32 %v2241, %v2259
  %v2278 = vmax.f32 %v2242, %v2260
  %v2279 = vmax.f32 %v2243, %v2261
  %v2280 = vmax.f32 %v2244, %v2262
  %v2281 = vmax.f32 %v2245, %v2263
  %v2282 = vmax.f32 %v2246, %v2264
  %v2283 = vmax.f32 %v2247, %v2265
  %v2284 = vmax.f32 %v2248, %v2266
  %v2285 = vmax.f32 %v2249, %v2267
  %v2286 = vmax.f32 %v2250, %v2268
  %v2287 = vmax.f32 %v2251, %v2269
  %v2288 = vld [vmem:[#allocation3 + $0x6] sm:$0xff]
  %v2289 = vld [vmem:[#allocation3 + $0xe] sm:$0xff]
  %v2290 = vld [vmem:[#allocation3 + $0x16] sm:$0xff]
  %v2291 = vld [vmem:[#allocation3 + $0x1e] sm:$0xff]
  %v2292 = vld [vmem:[#allocation3 + $0x26] sm:$0xff]
  %v2293 = vld [vmem:[#allocation3 + $0x2e] sm:$0xff]
  %v2294 = vld [vmem:[#allocation3 + $0x36] sm:$0xff]
  %v2295 = vld [vmem:[#allocation3 + $0x3e] sm:$0xff]
  %v2296 = vld [vmem:[#allocation3 + $0x46] sm:$0xff]
  %v2297 = vld [vmem:[#allocation3 + $0x4e] sm:$0xff]
  %v2298 = vld [vmem:[#allocation3 + $0x56] sm:$0xff]
  %v2299 = vld [vmem:[#allocation3 + $0x5e] sm:$0xff]
  %v2300 = vld [vmem:[#allocation3 + $0x66] sm:$0xff]
  %v2301 = vld [vmem:[#allocation3 + $0x6e] sm:$0xff]
  %v2302 = vld [vmem:[#allocation3 + $0x76] sm:$0xff]
  %v2303 = vld [vmem:[#allocation3 + $0x7e] sm:$0xff]
  %v2304 = vld [vmem:[#allocation3 + $0x86] sm:$0xff]
  %v2305 = vld [vmem:[#allocation3 + $0x8e] sm:$0xff]
  %v2306 = vld [vmem:[#allocation3 + $0x7] sm:$0xff]
  %v2307 = vld [vmem:[#allocation3 + $0xf] sm:$0xff]
  %v2308 = vld [vmem:[#allocation3 + $0x17] sm:$0xff]
  %v2309 = vld [vmem:[#allocation3 + $0x1f] sm:$0xff]
  %v2310 = vld [vmem:[#allocation3 + $0x27] sm:$0xff]
  %v2311 = vld [vmem:[#allocation3 + $0x2f] sm:$0xff]
  %v2312 = vld [vmem:[#allocation3 + $0x37] sm:$0xff]
  %v2313 = vld [vmem:[#allocation3 + $0x3f] sm:$0xff]
  %v2314 = vld [vmem:[#allocation3 + $0x47] sm:$0xff]
  %v2315 = vld [vmem:[#allocation3 + $0x4f] sm:$0xff]
  %v2316 = vld [vmem:[#allocation3 + $0x57] sm:$0xff]
  %v2317 = vld [vmem:[#allocation3 + $0x5f] sm:$0xff]
  %v2318 = vld [vmem:[#allocation3 + $0x67] sm:$0xff]
  %v2319 = vld [vmem:[#allocation3 + $0x6f] sm:$0xff]
  %v2320 = vld [vmem:[#allocation3 + $0x77] sm:$0xff]
  %v2321 = vld [vmem:[#allocation3 + $0x7f] sm:$0xff]
  %v2322 = vld [vmem:[#allocation3 + $0x87] sm:$0xff]
  %v2323 = vld [vmem:[#allocation3 + $0x8f] sm:$0xff]
  %v2324 = vmax.f32 %v2288, %v2306
  %v2325 = vmax.f32 %v2289, %v2307
  %v2326 = vmax.f32 %v2290, %v2308
  %v2327 = vmax.f32 %v2291, %v2309
  %v2328 = vmax.f32 %v2292, %v2310
  %v2329 = vmax.f32 %v2293, %v2311
  %v2330 = vmax.f32 %v2294, %v2312
  %v2331 = vmax.f32 %v2295, %v2313
  %v2332 = vmax.f32 %v2296, %v2314
  %v2333 = vmax.f32 %v2297, %v2315
  %v2334 = vmax.f32 %v2298, %v2316
  %v2335 = vmax.f32 %v2299, %v2317
  %v2336 = vmax.f32 %v2300, %v2318
  %v2337 = vmax.f32 %v2301, %v2319
  %v2338 = vmax.f32 %v2302, %v2320
  %v2339 = vmax.f32 %v2303, %v2321
  %v2340 = vmax.f32 %v2304, %v2322
  %v2341 = vmax.f32 %v2305, %v2323
  %v2342 = vmax.f32 %v2270, %v2324
  %v2343 = vmax.f32 %v2271, %v2325
  %v2344 = vmax.f32 %v2272, %v2326
  %v2345 = vmax.f32 %v2273, %v2327
  %v2346 = vmax.f32 %v2274, %v2328
  %v2347 = vmax.f32 %v2275, %v2329
  %v2348 = vmax.f32 %v2276, %v2330
  %v2349 = vmax.f32 %v2277, %v2331
  %v2350 = vmax.f32 %v2278, %v2332
  %v2351 = vmax.f32 %v2279, %v2333
  %v2352 = vmax.f32 %v2280, %v2334
  %v2353 = vmax.f32 %v2281, %v2335
  %v2354 = vmax.f32 %v2282, %v2336
  %v2355 = vmax.f32 %v2283, %v2337
  %v2356 = vmax.f32 %v2284, %v2338
  %v2357 = vmax.f32 %v2285, %v2339
  %v2358 = vmax.f32 %v2286, %v2340
  %v2359 = vmax.f32 %v2287, %v2341
  %v2360 = vmax.f32 %v2342, 0.0
  %v2361 = vmax.f32 %v2343, 0.0
  %v2362 = vmax.f32 %v2344, 0.0
  %v2363 = vmax.f32 %v2345, 0.0
  %v2364 = vmax.f32 %v2346, 0.0
  %v2365 = vmax.f32 %v2347, 0.0
  %v2366 = vmax.f32 %v2348, 0.0
  %v2367 = vmax.f32 %v2349, 0.0
  %v2368 = vmax.f32 %v2350, 0.0
  %v2369 = vmax.f32 %v2351, 0.0
  %v2370 = vmax.f32 %v2352, 0.0
  %v2371 = vmax.f32 %v2353, 0.0
  %v2372 = vmax.f32 %v2354, 0.0
  %v2373 = vmax.f32 %v2355, 0.0
  %v2374 = vmax.f32 %v2356, 0.0
  %v2375 = vmax.f32 %v2357, 0.0
  %v2376 = vmax.f32 %v2358, 0.0
  %v2377 = vmax.f32 %v2359, 0.0
  %2378 = vst [vmem:[#allocation4] sm:$0xff] %v2360
  %2379 = vst [vmem:[#allocation4 + $0x8] sm:$0xff] %v2361
  %2380 = vst [vmem:[#allocation4 + $0x10] sm:$0xff] %v2362
  %2381 = vst [vmem:[#allocation4 + $0x18] sm:$0xff] %v2363
  %2382 = vst [vmem:[#allocation4 + $0x20] sm:$0xff] %v2364
  %2383 = vst [vmem:[#allocation4 + $0x28] sm:$0xff] %v2365
  %2384 = vst [vmem:[#allocation4 + $0x30] sm:$0xff] %v2366
  %2385 = vst [vmem:[#allocation4 + $0x38] sm:$0xff] %v2367
  %2386 = vst [vmem:[#allocation4 + $0x40] sm:$0xff] %v2368
  %2387 = vst [vmem:[#allocation4 + $0x48] sm:$0xff] %v2369
  %2388 = vst [vmem:[#allocation4 + $0x50] sm:$0xff] %v2370
  %2389 = vst [vmem:[#allocation4 + $0x58] sm:$0xff] %v2371
  %2390 = vst [vmem:[#allocation4 + $0x60] sm:$0xff] %v2372
  %2391 = vst [vmem:[#allocation4 + $0x68] sm:$0xff] %v2373
  %2392 = vst [vmem:[#allocation4 + $0x70] sm:$0xff] %v2374
  %2393 = vst [vmem:[#allocation4 + $0x78] sm:$0xff] %v2375
  %2394 = vst [vmem:[#allocation4 + $0x80] sm:$0xff] %v2376
  %2395 = vst [vmem:[#allocation4 + $0x88] sm:$0xff] %v2377
  %2396 = vst [vmem:[#allocation4 + $0x90] sm:$0xff] 0.0
  %2397 = vst [vmem:[#allocation4 + $0x98] sm:$0xff] 0.0
  %v2398 = vld [vmem:[#allocation4] sm:$0xff]
  %v2399 = vld [vmem:[#allocation4 + $0x8] sm:$0xff]
  %v2400 = vld [vmem:[#allocation4 + $0x10] sm:$0xff]
  %v2401 = vld [vmem:[#allocation4 + $0x18] sm:$0xff]
  %v2402 = vld [vmem:[#allocation4 + $0x20] sm:$0xff]
  %v2403 = vld [vmem:[#allocation4 + $0x28] sm:$0xff]
  %v2404 = vld [vmem:[#allocation4 + $0x30] sm:$0xff]
  %v2405 = vld [vmem:[#allocation4 + $0x38] sm:$0xff]
  %v2406 = vld [vmem:[#allocation4 + $0x40] sm:$0xff]
  %v2407 = vld [vmem:[#allocation4 + $0x48] sm:$0xff]
  %v2408 = vld [vmem:[#allocation4 + $0x50] sm:$0xff]
  %v2409 = vld [vmem:[#allocation4 + $0x58] sm:$0xff]
  %v2410 = vld [vmem:[#allocation4 + $0x60] sm:$0xff]
  %v2411 = vld [vmem:[#allocation4 + $0x68] sm:$0xff]
  %v2412 = vld [vmem:[#allocation4 + $0x70] sm:$0xff]
  %v2413 = vld [vmem:[#allocation4 + $0x78] sm:$0xff]
  %v2414 = vld [vmem:[#allocation4 + $0x80] sm:$0xff]
  %v2415 = vld [vmem:[#allocation4 + $0x88] sm:$0xff]
  %v2416 = vld [vmem:[%s5] sm:$0xff]
  %v2417 = vld [vmem:[%s5 + $0x8] sm:$0xff]
  %v2418 = vld [vmem:[%s5 + $0x10] sm:$0xff]
  %v2419 = vld [vmem:[%s5 + $0x18] sm:$0xff]
  %v2420 = vld [vmem:[%s5 + $0x20] sm:$0xff]
  %v2421 = vld [vmem:[%s5 + $0x28] sm:$0xff]
  %v2422 = vld [vmem:[%s5 + $0x30] sm:$0xff]
  %v2423 = vld [vmem:[%s5 + $0x38] sm:$0xff]
  %v2424 = vld [vmem:[%s5 + $0x40] sm:$0xff]
  %v2425 = vld [vmem:[%s5 + $0x48] sm:$0xff]
  %v2426 = vld [vmem:[%s5 + $0x50] sm:$0xff]
  %v2427 = vld [vmem:[%s5 + $0x58] sm:$0xff]
  %v2428 = vld [vmem:[%s5 + $0x60] sm:$0xff]
  %v2429 = vld [vmem:[%s5 + $0x68] sm:$0xff]
  %v2430 = vld [vmem:[%s5 + $0x70] sm:$0xff]
  %v2431 = vld [vmem:[%s5 + $0x78] sm:$0xff]
  %v2432 = vld [vmem:[#allocation4 + $0x2] sm:$0xff]
  %v2433 = vld [vmem:[#allocation4 + $0xa] sm:$0xff]
  %v2434 = vld [vmem:[#allocation4 + $0x12] sm:$0xff]
  %v2435 = vld [vmem:[#allocation4 + $0x1a] sm:$0xff]
  %v2436 = vld [vmem:[#allocation4 + $0x22] sm:$0xff]
  %v2437 = vld [vmem:[#allocation4 + $0x2a] sm:$0xff]
  %v2438 = vld [vmem:[#allocation4 + $0x32] sm:$0xff]
  %v2439 = vld [vmem:[#allocation4 + $0x3a] sm:$0xff]
  %v2440 = vld [vmem:[#allocation4 + $0x42] sm:$0xff]
  %v2441 = vld [vmem:[#allocation4 + $0x4a] sm:$0xff]
  %v2442 = vld [vmem:[#allocation4 + $0x52] sm:$0xff]
  %v2443 = vld [vmem:[#allocation4 + $0x5a] sm:$0xff]
  %v2444 = vld [vmem:[#allocation4 + $0x62] sm:$0xff]
  %v2445 = vld [vmem:[#allocation4 + $0x6a] sm:$0xff]
  %v2446 = vld [vmem:[#allocation4 + $0x72] sm:$0xff]
  %v2447 = vld [vmem:[#allocation4 + $0x7a] sm:$0xff]
  %v2448 = vld [vmem:[#allocation4 + $0x82] sm:$0xff]
  %v2449 = vld [vmem:[#allocation4 + $0x8a] sm:$0xff]
  %v2450 = vld [vmem:[%s5 + $0x80] sm:$0xff]
  %v2451 = vld [vmem:[%s5 + $0x88] sm:$0xff]
  %v2452 = vld [vmem:[%s5 + $0x90] sm:$0xff]
  %v2453 = vld [vmem:[%s5 + $0x98] sm:$0xff]
  %v2454 = vld [vmem:[%s5 + $0xa0] sm:$0xff]
  %v2455 = vld [vmem:[%s5 + $0xa8] sm:$0xff]
  %v2456 = vld [vmem:[%s5 + $0xb0] sm:$0xff]
  %v2457 = vld [vmem:[%s5 + $0xb8] sm:$0xff]
  %v2458 = vld [vmem:[%s5 + $0xc0] sm:$0xff]
  %v2459 = vld [vmem:[%s5 + $0xc8] sm:$0xff]
  %v2460 = vld [vmem:[%s5 + $0xd0] sm:$0xff]
  %v2461 = vld [vmem:[%s5 + $0xd8] sm:$0xff]
  %v2462 = vld [vmem:[%s5 + $0xe0] sm:$0xff]
  %v2463 = vld [vmem:[%s5 + $0xe8] sm:$0xff]
  %v2464 = vld [vmem:[%s5 + $0xf0] sm:$0xff]
  %v2465 = vld [vmem:[%s5 + $0xf8] sm:$0xff]
  %2466 = vmatpush.msra.mxu0 %v2465
  %2467 = vmatpush.msra.mxu0 %v2464
  %2468 = vmatpush.msra.mxu0 %v2463
  %2469 = vmatpush.msra.mxu0 %v2462
  %2470 = vmatpush.msra.mxu0 %v2461
  %2471 = vmatpush.msra.mxu0 %v2460
  %2472 = vmatpush.msra.mxu0 %v2459
  %2473 = vmatpush.msra.mxu0 %v2458
  %2474 = vmatpush.msra.mxu0 %v2457
  %2475 = vmatpush.msra.mxu0 %v2456
  %2476 = vmatpush.msra.mxu0 %v2455
  %2477 = vmatpush.msra.mxu0 %v2454
  %2478 = vmatpush.msra.mxu0 %v2453
  %2479 = vmatpush.msra.mxu0 %v2452
  %2480 = vmatpush.msra.mxu0 %v2451
  %2481 = vmatpush.msra.mxu0 %v2450
  %2482 = vmatmul.f32.gmra.mxu0 %v2432
  %v2483 = vpop.f32.mrf.mxu0
  %v2484 = vadd.f32 0.0, %v2483
  %2485 = vmatmul.f32.gmra.mxu0 %v2433
  %v2486 = vpop.f32.mrf.mxu0
  %v2487 = vadd.f32 0.0, %v2486
  %2488 = vmatmul.f32.gmra.mxu0 %v2434
  %v2489 = vpop.f32.mrf.mxu0
  %v2490 = vadd.f32 0.0, %v2489
  %2491 = vmatmul.f32.gmra.mxu0 %v2435
  %v2492 = vpop.f32.mrf.mxu0
  %v2493 = vadd.f32 0.0, %v2492
  %2494 = vmatmul.f32.gmra.mxu0 %v2436
  %v2495 = vpop.f32.mrf.mxu0
  %v2496 = vadd.f32 0.0, %v2495
  %2497 = vmatmul.f32.gmra.mxu0 %v2437
  %v2498 = vpop.f32.mrf.mxu0
  %v2499 = vadd.f32 0.0, %v2498
  %2500 = vmatmul.f32.gmra.mxu0 %v2438
  %v2501 = vpop.f32.mrf.mxu0
  %v2502 = vadd.f32 0.0, %v2501
  %2503 = vmatmul.f32.gmra.mxu0 %v2439
  %v2504 = vpop.f32.mrf.mxu0
  %v2505 = vadd.f32 0.0, %v2504
  %2506 = vmatmul.f32.gmra.mxu0 %v2440
  %v2507 = vpop.f32.mrf.mxu0
  %v2508 = vadd.f32 0.0, %v2507
  %2509 = vmatmul.f32.gmra.mxu0 %v2441
  %v2510 = vpop.f32.mrf.mxu0
  %v2511 = vadd.f32 0.0, %v2510
  %2512 = vmatmul.f32.gmra.mxu0 %v2442
  %v2513 = vpop.f32.mrf.mxu0
  %v2514 = vadd.f32 0.0, %v2513
  %2515 = vmatmul.f32.gmra.mxu0 %v2443
  %v2516 = vpop.f32.mrf.mxu0
  %v2517 = vadd.f32 0.0, %v2516
  %2518 = vmatmul.f32.gmra.mxu0 %v2444
  %v2519 = vpop.f32.mrf.mxu0
  %v2520 = vadd.f32 0.0, %v2519
  %2521 = vmatmul.f32.gmra.mxu0 %v2445
  %v2522 = vpop.f32.mrf.mxu0
  %v2523 = vadd.f32 0.0, %v2522
  %2524 = vmatmul.f32.gmra.mxu0 %v2446
  %v2525 = vpop.f32.mrf.mxu0
  %v2526 = vadd.f32 0.0, %v2525
  %2527 = vmatmul.f32.gmra.mxu0 %v2447
  %v2528 = vpop.f32.mrf.mxu0
  %v2529 = vadd.f32 0.0, %v2528
  %2530 = vmatmul.f32.gmra.mxu0 %v2448
  %v2531 = vpop.f32.mrf.mxu0
  %v2532 = vadd.f32 0.0, %v2531
  %2533 = vmatmul.f32.gmra.mxu0 %v2449
  %v2534 = vpop.f32.mrf.mxu0
  %v2535 = vadd.f32 0.0, %v2534
  %2536 = vdwg.mxu0
  %2537 = vmatpush.msra.mxu0 %v2431
  %2538 = vmatpush.msra.mxu0 %v2430
  %2539 = vmatpush.msra.mxu0 %v2429
  %2540 = vmatpush.msra.mxu0 %v2428
  %2541 = vmatpush.msra.mxu0 %v2427
  %2542 = vmatpush.msra.mxu0 %v2426
  %2543 = vmatpush.msra.mxu0 %v2425
  %2544 = vmatpush.msra.mxu0 %v2424
  %2545 = vmatpush.msra.mxu0 %v2423
  %2546 = vmatpush.msra.mxu0 %v2422
  %2547 = vmatpush.msra.mxu0 %v2421
  %2548 = vmatpush.msra.mxu0 %v2420
  %2549 = vmatpush.msra.mxu0 %v2419
  %2550 = vmatpush.msra.mxu0 %v2418
  %2551 = vmatpush.msra.mxu0 %v2417
  %2552 = vmatpush.msra.mxu0 %v2416
  %2553 = vmatmul.f32.gmra.mxu0 %v2398
  %v2554 = vpop.f32.mrf.mxu0
  %v2555 = vadd.f32 %v2484, %v2554
  %2556 = vmatmul.f32.gmra.mxu0 %v2399
  %v2557 = vpop.f32.mrf.mxu0
  %v2558 = vadd.f32 %v2487, %v2557
  %2559 = vmatmul.f32.gmra.mxu0 %v2400
  %v2560 = vpop.f32.mrf.mxu0
  %v2561 = vadd.f32 %v2490, %v2560
  %2562 = vmatmul.f32.gmra.mxu0 %v2401
  %v2563 = vpop.f32.mrf.mxu0
  %v2564 = vadd.f32 %v2493, %v2563
  %2565 = vmatmul.f32.gmra.mxu0 %v2402
  %v2566 = vpop.f32.mrf.mxu0
  %v2567 = vadd.f32 %v2496, %v2566
  %2568 = vmatmul.f32.gmra.mxu0 %v2403
  %v2569 = vpop.f32.mrf.mxu0
  %v2570 = vadd.f32 %v2499, %v2569
  %2571 = vmatmul.f32.gmra.mxu0 %v2404
  %v2572 = vpop.f32.mrf.mxu0
  %v2573 = vadd.f32 %v2502, %v2572
  %2574 = vmatmul.f32.gmra.mxu0 %v2405
  %v2575 = vpop.f32.mrf.mxu0
  %v2576 = vadd.f32 %v2505, %v2575
  %2577 = vmatmul.f32.gmra.mxu0 %v2406
  %v2578 = vpop.f32.mrf.mxu0
  %v2579 = vadd.f32 %v2508, %v2578
  %2580 = vmatmul.f32.gmra.mxu0 %v2407
  %v2581 = vpop.f32.mrf.mxu0
  %v2582 = vadd.f32 %v2511, %v2581
  %2583 = vmatmul.f32.gmra.mxu0 %v2408
  %v2584 = vpop.f32.mrf.mxu0
  %v2585 = vadd.f32 %v2514, %v2584
  %2586 = vmatmul.f32.gmra.mxu0 %v2409
  %v2587 = vpop.f32.mrf.mxu0
  %v2588 = vadd.f32 %v2517, %v2587
  %2589 = vmatmul.f32.gmra.mxu0 %v2410
  %v2590 = vpop.f32.mrf.mxu0
  %v2591 = vadd.f32 %v2520, %v2590
  %2592 = vmatmul.f32.gmra.mxu0 %v2411
  %v2593 = vpop.f32.mrf.mxu0
  %v2594 = vadd.f32 %v2523, %v2593
  %2595 = vmatmul.f32.gmra.mxu0 %v2412
  %v2596 = vpop.f32.mrf.mxu0
  %v2597 = vadd.f32 %v2526, %v2596
  %2598 = vmatmul.f32.gmra.mxu0 %v2413
  %v2599 = vpop.f32.mrf.mxu0
  %v2600 = vadd.f32 %v2529, %v2599
  %2601 = vmatmul.f32.gmra.mxu0 %v2414
  %v2602 = vpop.f32.mrf.mxu0
  %v2603 = vadd.f32 %v2532, %v2602
  %2604 = vmatmul.f32.gmra.mxu0 %v2415
  %v2605 = vpop.f32.mrf.mxu0
  %v2606 = vadd.f32 %v2535, %v2605
  %2607 = vdwg.mxu0
  %v2608 = vld [vmem:[#allocation4 + $0xc] sm:$0xff]
  %v2609 = vld [vmem:[#allocation4 + $0x14] sm:$0xff]
  %v2610 = vld [vmem:[#allocation4 + $0x1c] sm:$0xff]
  %v2611 = vld [vmem:[#allocation4 + $0x24] sm:$0xff]
  %v2612 = vld [vmem:[#allocation4 + $0x2c] sm:$0xff]
  %v2613 = vld [vmem:[#allocation4 + $0x34] sm:$0xff]
  %v2614 = vld [vmem:[#allocation4 + $0x3c] sm:$0xff]
  %v2615 = vld [vmem:[#allocation4 + $0x44] sm:$0xff]
  %v2616 = vld [vmem:[#allocation4 + $0x4c] sm:$0xff]
  %v2617 = vld [vmem:[#allocation4 + $0x54] sm:$0xff]
  %v2618 = vld [vmem:[#allocation4 + $0x5c] sm:$0xff]
  %v2619 = vld [vmem:[#allocation4 + $0x64] sm:$0xff]
  %v2620 = vld [vmem:[#allocation4 + $0x6c] sm:$0xff]
  %v2621 = vld [vmem:[#allocation4 + $0x74] sm:$0xff]
  %v2622 = vld [vmem:[#allocation4 + $0x7c] sm:$0xff]
  %v2623 = vld [vmem:[#allocation4 + $0x84] sm:$0xff]
  %v2624 = vld [vmem:[#allocation4 + $0x8c] sm:$0xff]
  %v2625 = vld [vmem:[#allocation4 + $0x94] sm:$0xff]
  %v2626 = vld [vmem:[%s5 + $0x100] sm:$0xff]
  %v2627 = vld [vmem:[%s5 + $0x108] sm:$0xff]
  %v2628 = vld [vmem:[%s5 + $0x110] sm:$0xff]
  %v2629 = vld [vmem:[%s5 + $0x118] sm:$0xff]
  %v2630 = vld [vmem:[%s5 + $0x120] sm:$0xff]
  %v2631 = vld [vmem:[%s5 + $0x128] sm:$0xff]
  %v2632 = vld [vmem:[%s5 + $0x130] sm:$0xff]
  %v2633 = vld [vmem:[%s5 + $0x138] sm:$0xff]
  %v2634 = vld [vmem:[%s5 + $0x140] sm:$0xff]
  %v2635 = vld [vmem:[%s5 + $0x148] sm:$0xff]
  %v2636 = vld [vmem:[%s5 + $0x150] sm:$0xff]
  %v2637 = vld [vmem:[%s5 + $0x158] sm:$0xff]
  %v2638 = vld [vmem:[%s5 + $0x160] sm:$0xff]
  %v2639 = vld [vmem:[%s5 + $0x168] sm:$0xff]
  %v2640 = vld [vmem:[%s5 + $0x170] sm:$0xff]
  %v2641 = vld [vmem:[%s5 + $0x178] sm:$0xff]
  %2642 = vmatpush.msra.mxu0 %v2641
  %2643 = vmatpush.msra.mxu0 %v2640
  %2644 = vmatpush.msra.mxu0 %v2639
  %2645 = vmatpush.msra.mxu0 %v2638
  %2646 = vmatpush.msra.mxu0 %v2637
  %2647 = vmatpush.msra.mxu0 %v2636
  %2648 = vmatpush.msra.mxu0 %v2635
  %2649 = vmatpush.msra.mxu0 %v2634
  %2650 = vmatpush.msra.mxu0 %v2633
  %2651 = vmatpush.msra.mxu0 %v2632
  %2652 = vmatpush.msra.mxu0 %v2631
  %2653 = vmatpush.msra.mxu0 %v2630
  %2654 = vmatpush.msra.mxu0 %v2629
  %2655 = vmatpush.msra.mxu0 %v2628
  %2656 = vmatpush.msra.mxu0 %v2627
  %2657 = vmatpush.msra.mxu0 %v2626
  %2658 = vmatmul.f32.gmra.mxu0 %v2608
  %v2659 = vpop.f32.mrf.mxu0
  %v2660 = vadd.f32 0.0, %v2659
  %2661 = vmatmul.f32.gmra.mxu0 %v2609
  %v2662 = vpop.f32.mrf.mxu0
  %v2663 = vadd.f32 0.0, %v2662
  %2664 = vmatmul.f32.gmra.mxu0 %v2610
  %v2665 = vpop.f32.mrf.mxu0
  %v2666 = vadd.f32 0.0, %v2665
  %2667 = vmatmul.f32.gmra.mxu0 %v2611
  %v2668 = vpop.f32.mrf.mxu0
  %v2669 = vadd.f32 0.0, %v2668
  %2670 = vmatmul.f32.gmra.mxu0 %v2612
  %v2671 = vpop.f32.mrf.mxu0
  %v2672 = vadd.f32 0.0, %v2671
  %2673 = vmatmul.f32.gmra.mxu0 %v2613
  %v2674 = vpop.f32.mrf.mxu0
  %v2675 = vadd.f32 0.0, %v2674
  %2676 = vmatmul.f32.gmra.mxu0 %v2614
  %v2677 = vpop.f32.mrf.mxu0
  %v2678 = vadd.f32 0.0, %v2677
  %2679 = vmatmul.f32.gmra.mxu0 %v2615
  %v2680 = vpop.f32.mrf.mxu0
  %v2681 = vadd.f32 0.0, %v2680
  %2682 = vmatmul.f32.gmra.mxu0 %v2616
  %v2683 = vpop.f32.mrf.mxu0
  %v2684 = vadd.f32 0.0, %v2683
  %2685 = vmatmul.f32.gmra.mxu0 %v2617
  %v2686 = vpop.f32.mrf.mxu0
  %v2687 = vadd.f32 0.0, %v2686
  %2688 = vmatmul.f32.gmra.mxu0 %v2618
  %v2689 = vpop.f32.mrf.mxu0
  %v2690 = vadd.f32 0.0, %v2689
  %2691 = vmatmul.f32.gmra.mxu0 %v2619
  %v2692 = vpop.f32.mrf.mxu0
  %v2693 = vadd.f32 0.0, %v2692
  %2694 = vmatmul.f32.gmra.mxu0 %v2620
  %v2695 = vpop.f32.mrf.mxu0
  %v2696 = vadd.f32 0.0, %v2695
  %2697 = vmatmul.f32.gmra.mxu0 %v2621
  %v2698 = vpop.f32.mrf.mxu0
  %v2699 = vadd.f32 0.0, %v2698
  %2700 = vmatmul.f32.gmra.mxu0 %v2622
  %v2701 = vpop.f32.mrf.mxu0
  %v2702 = vadd.f32 0.0, %v2701
  %2703 = vmatmul.f32.gmra.mxu0 %v2623
  %v2704 = vpop.f32.mrf.mxu0
  %v2705 = vadd.f32 0.0, %v2704
  %2706 = vmatmul.f32.gmra.mxu0 %v2624
  %v2707 = vpop.f32.mrf.mxu0
  %v2708 = vadd.f32 0.0, %v2707
  %2709 = vmatmul.f32.gmra.mxu0 %v2625
  %v2710 = vpop.f32.mrf.mxu0
  %v2711 = vadd.f32 0.0, %v2710
  %2712 = vdwg.mxu0
  %v2713 = vadd.f32 %v2555, %v2660
  %v2714 = vadd.f32 %v2558, %v2663
  %v2715 = vadd.f32 %v2561, %v2666
  %v2716 = vadd.f32 %v2564, %v2669
  %v2717 = vadd.f32 %v2567, %v2672
  %v2718 = vadd.f32 %v2570, %v2675
  %v2719 = vadd.f32 %v2573, %v2678
  %v2720 = vadd.f32 %v2576, %v2681
  %v2721 = vadd.f32 %v2579, %v2684
  %v2722 = vadd.f32 %v2582, %v2687
  %v2723 = vadd.f32 %v2585, %v2690
  %v2724 = vadd.f32 %v2588, %v2693
  %v2725 = vadd.f32 %v2591, %v2696
  %v2726 = vadd.f32 %v2594, %v2699
  %v2727 = vadd.f32 %v2597, %v2702
  %v2728 = vadd.f32 %v2600, %v2705
  %v2729 = vadd.f32 %v2603, %v2708
  %v2730 = vadd.f32 %v2606, %v2711
  %v2731 = vld [vmem:[#allocation4 + $0xe] sm:$0xff]
  %v2732 = vld [vmem:[#allocation4 + $0x16] sm:$0xff]
  %v2733 = vld [vmem:[#allocation4 + $0x1e] sm:$0xff]
  %v2734 = vld [vmem:[#allocation4 + $0x26] sm:$0xff]
  %v2735 = vld [vmem:[#allocation4 + $0x2e] sm:$0xff]
  %v2736 = vld [vmem:[#allocation4 + $0x36] sm:$0xff]
  %v2737 = vld [vmem:[#allocation4 + $0x3e] sm:$0xff]
  %v2738 = vld [vmem:[#allocation4 + $0x46] sm:$0xff]
  %v2739 = vld [vmem:[#allocation4 + $0x4e] sm:$0xff]
  %v2740 = vld [vmem:[#allocation4 + $0x56] sm:$0xff]
  %v2741 = vld [vmem:[#allocation4 + $0x5e] sm:$0xff]
  %v2742 = vld [vmem:[#allocation4 + $0x66] sm:$0xff]
  %v2743 = vld [vmem:[#allocation4 + $0x6e] sm:$0xff]
  %v2744 = vld [vmem:[#allocation4 + $0x76] sm:$0xff]
  %v2745 = vld [vmem:[#allocation4 + $0x7e] sm:$0xff]
  %v2746 = vld [vmem:[#allocation4 + $0x86] sm:$0xff]
  %v2747 = vld [vmem:[#allocation4 + $0x8e] sm:$0xff]
  %v2748 = vld [vmem:[#allocation4 + $0x96] sm:$0xff]
  %v2749 = vld [vmem:[%s5 + $0x180] sm:$0xff]
  %v2750 = vld [vmem:[%s5 + $0x188] sm:$0xff]
  %v2751 = vld [vmem:[%s5 + $0x190] sm:$0xff]
  %v2752 = vld [vmem:[%s5 + $0x198] sm:$0xff]
  %v2753 = vld [vmem:[%s5 + $0x1a0] sm:$0xff]
  %v2754 = vld [vmem:[%s5 + $0x1a8] sm:$0xff]
  %v2755 = vld [vmem:[%s5 + $0x1b0] sm:$0xff]
  %v2756 = vld [vmem:[%s5 + $0x1b8] sm:$0xff]
  %v2757 = vld [vmem:[%s5 + $0x1c0] sm:$0xff]
  %v2758 = vld [vmem:[%s5 + $0x1c8] sm:$0xff]
  %v2759 = vld [vmem:[%s5 + $0x1d0] sm:$0xff]
  %v2760 = vld [vmem:[%s5 + $0x1d8] sm:$0xff]
  %v2761 = vld [vmem:[%s5 + $0x1e0] sm:$0xff]
  %v2762 = vld [vmem:[%s5 + $0x1e8] sm:$0xff]
  %v2763 = vld [vmem:[%s5 + $0x1f0] sm:$0xff]
  %v2764 = vld [vmem:[%s5 + $0x1f8] sm:$0xff]
  %2765 = vmatpush.msra.mxu0 %v2764
  %2766 = vmatpush.msra.mxu0 %v2763
  %2767 = vmatpush.msra.mxu0 %v2762
  %2768 = vmatpush.msra.mxu0 %v2761
  %2769 = vmatpush.msra.mxu0 %v2760
  %2770 = vmatpush.msra.mxu0 %v2759
  %2771 = vmatpush.msra.mxu0 %v2758
  %2772 = vmatpush.msra.mxu0 %v2757
  %2773 = vmatpush.msra.mxu0 %v2756
  %2774 = vmatpush.msra.mxu0 %v2755
  %2775 = vmatpush.msra.mxu0 %v2754
  %2776 = vmatpush.msra.mxu0 %v2753
  %2777 = vmatpush.msra.mxu0 %v2752
  %2778 = vmatpush.msra.mxu0 %v2751
  %2779 = vmatpush.msra.mxu0 %v2750
  %2780 = vmatpush.msra.mxu0 %v2749
  %2781 = vmatmul.f32.gmra.mxu0 %v2731
  %v2782 = vpop.f32.mrf.mxu0
  %v2783 = vadd.f32 0.0, %v2782
  %2784 = vmatmul.f32.gmra.mxu0 %v2732
  %v2785 = vpop.f32.mrf.mxu0
  %v2786 = vadd.f32 0.0, %v2785
  %2787 = vmatmul.f32.gmra.mxu0 %v2733
  %v2788 = vpop.f32.mrf.mxu0
  %v2789 = vadd.f32 0.0, %v2788
  %2790 = vmatmul.f32.gmra.mxu0 %v2734
  %v2791 = vpop.f32.mrf.mxu0
  %v2792 = vadd.f32 0.0, %v2791
  %2793 = vmatmul.f32.gmra.mxu0 %v2735
  %v2794 = vpop.f32.mrf.mxu0
  %v2795 = vadd.f32 0.0, %v2794
  %2796 = vmatmul.f32.gmra.mxu0 %v2736
  %v2797 = vpop.f32.mrf.mxu0
  %v2798 = vadd.f32 0.0, %v2797
  %2799 = vmatmul.f32.gmra.mxu0 %v2737
  %v2800 = vpop.f32.mrf.mxu0
  %v2801 = vadd.f32 0.0, %v2800
  %2802 = vmatmul.f32.gmra.mxu0 %v2738
  %v2803 = vpop.f32.mrf.mxu0
  %v2804 = vadd.f32 0.0, %v2803
  %2805 = vmatmul.f32.gmra.mxu0 %v2739
  %v2806 = vpop.f32.mrf.mxu0
  %v2807 = vadd.f32 0.0, %v2806
  %2808 = vmatmul.f32.gmra.mxu0 %v2740
  %v2809 = vpop.f32.mrf.mxu0
  %v2810 = vadd.f32 0.0, %v2809
  %2811 = vmatmul.f32.gmra.mxu0 %v2741
  %v2812 = vpop.f32.mrf.mxu0
  %v2813 = vadd.f32 0.0, %v2812
  %2814 = vmatmul.f32.gmra.mxu0 %v2742
  %v2815 = vpop.f32.mrf.mxu0
  %v2816 = vadd.f32 0.0, %v2815
  %2817 = vmatmul.f32.gmra.mxu0 %v2743
  %v2818 = vpop.f32.mrf.mxu0
  %v2819 = vadd.f32 0.0, %v2818
  %2820 = vmatmul.f32.gmra.mxu0 %v2744
  %v2821 = vpop.f32.mrf.mxu0
  %v2822 = vadd.f32 0.0, %v2821
  %2823 = vmatmul.f32.gmra.mxu0 %v2745
  %v2824 = vpop.f32.mrf.mxu0
  %v2825 = vadd.f32 0.0, %v2824
  %2826 = vmatmul.f32.gmra.mxu0 %v2746
  %v2827 = vpop.f32.mrf.mxu0
  %v2828 = vadd.f32 0.0, %v2827
  %2829 = vmatmul.f32.gmra.mxu0 %v2747
  %v2830 = vpop.f32.mrf.mxu0
  %v2831 = vadd.f32 0.0, %v2830
  %2832 = vmatmul.f32.gmra.mxu0 %v2748
  %v2833 = vpop.f32.mrf.mxu0
  %v2834 = vadd.f32 0.0, %v2833
  %2835 = vdwg.mxu0
  %v2836 = vadd.f32 %v2713, %v2783
  %v2837 = vadd.f32 %v2714, %v2786
  %v2838 = vadd.f32 %v2715, %v2789
  %v2839 = vadd.f32 %v2716, %v2792
  %v2840 = vadd.f32 %v2717, %v2795
  %v2841 = vadd.f32 %v2718, %v2798
  %v2842 = vadd.f32 %v2719, %v2801
  %v2843 = vadd.f32 %v2720, %v2804
  %v2844 = vadd.f32 %v2721, %v2807
  %v2845 = vadd.f32 %v2722, %v2810
  %v2846 = vadd.f32 %v2723, %v2813
  %v2847 = vadd.f32 %v2724, %v2816
  %v2848 = vadd.f32 %v2725, %v2819
  %v2849 = vadd.f32 %v2726, %v2822
  %v2850 = vadd.f32 %v2727, %v2825
  %v2851 = vadd.f32 %v2728, %v2828
  %v2852 = vadd.f32 %v2729, %v2831
  %v2853 = vadd.f32 %v2730, %v2834
  %v2854 = vld [vmem:[%s6] sm:$0x1]
  %v2856 = vperm.slane %v2854, 0
  %v2858 = vadd.f32 %v2836, %v2856
  %v2859 = vadd.f32 %v2837, %v2856
  %v2860 = vadd.f32 %v2838, %v2856
  %v2861 = vadd.f32 %v2839, %v2856
  %v2862 = vadd.f32 %v2840, %v2856
  %v2863 = vadd.f32 %v2841, %v2856
  %v2864 = vadd.f32 %v2842, %v2856
  %v2865 = vadd.f32 %v2843, %v2856
  %v2866 = vadd.f32 %v2844, %v2856
  %v2867 = vadd.f32 %v2845, %v2856
  %v2868 = vadd.f32 %v2846, %v2856
  %v2869 = vadd.f32 %v2847, %v2856
  %v2870 = vadd.f32 %v2848, %v2856
  %v2871 = vadd.f32 %v2849, %v2856
  %v2872 = vadd.f32 %v2850, %v2856
  %v2873 = vadd.f32 %v2851, %v2856
  %v2874 = vadd.f32 %v2852, %v2856
  %v2875 = vadd.f32 %v2853, %v2856
  %v2876 = vmax.f32 %v2858, 0.0
  %v2877 = vmax.f32 %v2859, 0.0
  %v2878 = vmax.f32 %v2860, 0.0
  %v2879 = vmax.f32 %v2861, 0.0
  %v2880 = vmax.f32 %v2862, 0.0
  %v2881 = vmax.f32 %v2863, 0.0
  %v2882 = vmax.f32 %v2864, 0.0
  %v2883 = vmax.f32 %v2865, 0.0
  %v2884 = vmax.f32 %v2866, 0.0
  %v2885 = vmax.f32 %v2867, 0.0
  %v2886 = vmax.f32 %v2868, 0.0
  %v2887 = vmax.f32 %v2869, 0.0
  %v2888 = vmax.f32 %v2870, 0.0
  %v2889 = vmax.f32 %v2871, 0.0
  %v2890 = vmax.f32 %v2872, 0.0
  %v2891 = vmax.f32 %v2873, 0.0
  %v2892 = vmax.f32 %v2874, 0.0
  %v2893 = vmax.f32 %v2875, 0.0
  %v2894 = vld [vmem:[%s7] sm:$0xff]
  %v2895 = vld [vmem:[%s7 + $0x8] sm:$0xff]
  %v2896 = vld [vmem:[%s7 + $0x10] sm:$0xff]
  %v2897 = vld [vmem:[%s7 + $0x18] sm:$0xff]
  %v2898 = vld [vmem:[%s7 + $0x20] sm:$0xff]
  %v2899 = vld [vmem:[%s7 + $0x28] sm:$0xff]
  %v2900 = vld [vmem:[%s7 + $0x30] sm:$0xff]
  %v2901 = vld [vmem:[%s7 + $0x38] sm:$0xff]
  %v2902 = vld [vmem:[%s7 + $0x40] sm:$0xff]
  %v2903 = vld [vmem:[%s7 + $0x48] sm:$0xff]
  %v2904 = vld [vmem:[%s7 + $0x50] sm:$0xff]
  %v2905 = vld [vmem:[%s7 + $0x58] sm:$0xff]
  %v2906 = vld [vmem:[%s7 + $0x60] sm:$0xff]
  %v2907 = vld [vmem:[%s7 + $0x68] sm:$0xff]
  %v2908 = vld [vmem:[%s7 + $0x70] sm:$0xff]
  %v2909 = vld [vmem:[%s7 + $0x78] sm:$0xff]
  %v2910 = vld [vmem:[%s8] sm:$0x1]
  %v2912 = vperm.slane %v2910, 0
  %2914 = vmatpush.msra.mxu0 %v2909
  %2915 = vmatpush.msra.mxu0 %v2908
  %2916 = vmatpush.msra.mxu0 %v2907
  %2917 = vmatpush.msra.mxu0 %v2906
  %2918 = vmatpush.msra.mxu0 %v2905
  %2919 = vmatpush.msra.mxu0 %v2904
  %2920 = vmatpush.msra.mxu0 %v2903
  %2921 = vmatpush.msra.mxu0 %v2902
  %2922 = vmatpush.msra.mxu0 %v2901
  %2923 = vmatpush.msra.mxu0 %v2900
  %2924 = vmatpush.msra.mxu0 %v2899
  %2925 = vmatpush.msra.mxu0 %v2898
  %2926 = vmatpush.msra.mxu0 %v2897
  %2927 = vmatpush.msra.mxu0 %v2896
  %2928 = vmatpush.msra.mxu0 %v2895
  %2929 = vmatpush.msra.mxu0 %v2894
  %2930 = vmatmul.f32.gmra.mxu0 %v2876
  %v2931 = vpop.f32.mrf.mxu0
  %v2932 = vadd.f32 %v2912, %v2931
  %2933 = vmatmul.f32.gmra.mxu0 %v2877
  %v2934 = vpop.f32.mrf.mxu0
  %2935 = vmatmul.f32.gmra.mxu0 %v2878
  %v2936 = vpop.f32.mrf.mxu0
  %2937 = vmatmul.f32.gmra.mxu0 %v2879
  %v2938 = vpop.f32.mrf.mxu0
  %2939 = vmatmul.f32.gmra.mxu0 %v2880
  %v2940 = vpop.f32.mrf.mxu0
  %v2941 = vadd.f32 %v2912, %v2940
  %2942 = vmatmul.f32.gmra.mxu0 %v2881
  %v2943 = vpop.f32.mrf.mxu0
  %2944 = vmatmul.f32.gmra.mxu0 %v2882
  %v2945 = vpop.f32.mrf.mxu0
  %2946 = vmatmul.f32.gmra.mxu0 %v2883
  %v2947 = vpop.f32.mrf.mxu0
  %2948 = vmatmul.f32.gmra.mxu0 %v2884
  %v2949 = vpop.f32.mrf.mxu0
  %2950 = vmatmul.f32.gmra.mxu0 %v2885
  %v2951 = vpop.f32.mrf.mxu0
  %v2952 = vadd.f32 %v2912, %v2951
  %2953 = vmatmul.f32.gmra.mxu0 %v2886
  %v2954 = vpop.f32.mrf.mxu0
  %2955 = vmatmul.f32.gmra.mxu0 %v2887
  %v2956 = vpop.f32.mrf.mxu0
  %2957 = vmatmul.f32.gmra.mxu0 %v2888
  %v2958 = vpop.f32.mrf.mxu0
  %2959 = vmatmul.f32.gmra.mxu0 %v2889
  %v2960 = vpop.f32.mrf.mxu0
  %v2961 = vadd.f32 %v2912, %v2960
  %2962 = vmatmul.f32.gmra.mxu0 %v2890
  %v2963 = vpop.f32.mrf.mxu0
  %2964 = vmatmul.f32.gmra.mxu0 %v2891
  %v2965 = vpop.f32.mrf.mxu0
  %2966 = vmatmul.f32.gmra.mxu0 %v2892
  %v2967 = vpop.f32.mrf.mxu0
  %2968 = vmatmul.f32.gmra.mxu0 %v2893
  %v2969 = vpop.f32.mrf.mxu0
  %2970 = vdwg.mxu0
  %v2971 = vmax.f32 %v2932, 0.0
  %v2972 = vmax.f32 %v2941, 0.0
  %v2973 = vmax.f32 %v2952, 0.0
  %v2974 = vmax.f32 %v2961, 0.0
  %2975 = vst [vmem:[%s9] sm:$0x1] %v2971
  %2976 = vst [vmem:[%s9 - $0x3] sm:$0x10] %v2972
  %2977 = vst [vmem:[%s9 + $0x2] sm:$0x1] %v2973
  %2978 = vst [vmem:[%s9 - $0x1] sm:$0x10] %v2974
  // Predicated region
  $region38: #{forward.1} parent=0 // pred_check
    _
  $region39: #{forward.1} parent=0 // pred_check_branch
    %2980 = sbr.rel (0) target = $region41
  $region40: #{forward.1} parent=0 // pred_region
    _
  $region41: #{forward.1} parent=0 // pred_fallthru
    _
  // Predicated region
  $region42: #{forward.1} parent=0 // pred_check
    _
  $region43: #{forward.1} parent=0 // pred_check_branch
    %2982 = sbr.rel (0) target = $region45
  $region44: #{forward.1} parent=0 // pred_region
    _
  $region45: #{forward.1} parent=0 // pred_fallthru
    _

</llo_original>
